<compile_context>
chip_gen: v7x
topology: tpu7x:2x2x1
jax: 0.10.0
libtpu: 0.0.40
codegen_flags: <defaults>
</compile_context>

<pallas_src>
import functools

import jax
import jax.numpy as jnp
from jax.experimental import pallas as pl
from jax.experimental.pallas import tpu as pltpu

LANE = 128
# f32 operands keep results bit-close to the f32 XLA reference.  On v6e/v7x,
# flipping this to jnp.bfloat16 gives ~4x MXU throughput (accumulation stays
# f32); loosen the test tolerance accordingly if you do.
COMPUTE_DTYPE = jnp.float32


def _round_up(x, m):
    return (x + m - 1) // m * m


# ----------------------------- Pallas kernel ------------------------------- #

def _im2col_3x3(xpad, H, W):
    """(H+2, W+2, C) zero-padded image -> (H*W, 9*C) im2col patch (ky-major)."""
    taps = [xpad[ky:ky + H, kx:kx + W, :] for ky in range(3) for kx in range(3)]
    return jnp.concatenate(taps, axis=-1).reshape(H * W, 9 * xpad.shape[-1])


def _basicblock_kernel(*refs, has_sc_conv):
    if has_sc_conv:
        (x_ref, w1_ref, s1_ref, b1_ref, w2_ref, s2_ref, b2_ref,
         wsc_ref, ssc_ref, bsc_ref, out_ref, ypad_ref, res_ref) = refs
    else:
        (x_ref, w1_ref, s1_ref, b1_ref, w2_ref, s2_ref, b2_ref,
         out_ref, ypad_ref, res_ref) = refs

    _, hp2, wp2, _ = x_ref.shape
    H, W = hp2 - 2, wp2 - 2
    cout_p = out_ref.shape[-1]
    HW = H * W
    cdt = COMPUTE_DTYPE

    # Shared im2col of the (halo + channel padded) input: one patch, two convs.
    xpad = x_ref[0]                                   # (H+2, W+2, Cin_p)
    patch1 = _im2col_3x3(xpad, H, W).astype(cdt)      # (HW, 9*Cin_p)

    # --- shortcut path (kept in VMEM scratch, never touches HBM) ------------ #
    if has_sc_conv:
        sc = jnp.dot(patch1, wsc_ref[...].astype(cdt),
                     preferred_element_type=jnp.float32)
        sc = sc * ssc_ref[...] + bsc_ref[...]
    else:
        sc = xpad[1:H + 1, 1:W + 1, :].reshape(HW, cout_p).astype(jnp.float32)
    res_ref[...] = sc

    # --- conv1 + BN + ReLU --------------------------------------------------- #
    y1 = jnp.dot(patch1, w1_ref[...].astype(cdt),
                 preferred_element_type=jnp.float32)
    y1 = jnp.maximum(y1 * s1_ref[...] + b1_ref[...], 0.0)

    # conv1 output stays in VMEM: write it into a zero-padded scratch so conv2
    # reuses the same im2col/matmul path (halo handled in-kernel, no HBM pad).
    ypad_ref[...] = jnp.zeros_like(ypad_ref)
    ypad_ref[1:H + 1, 1:W + 1, :] = y1.reshape(H, W, cout_p)

    # --- conv2 + BN + residual add + ReLU ------------------------------------ #
    patch2 = _im2col_3x3(ypad_ref[...], H, W).astype(cdt)   # (HW, 9*Cout_p)
    y2 = jnp.dot(patch2, w2_ref[...].astype(cdt),
                 preferred_element_type=jnp.float32)
    y2 = y2 * s2_ref[...] + b2_ref[...]

    out = jnp.maximum(y2 + res_ref[...], 0.0)
    out_ref[0] = out.reshape(H, W, cout_p).astype(out_ref.dtype)


# ------------------------------ JAX wrappers -------------------------------- #

def fold_bn(gamma, beta, mean, var, eps=1e-5, conv_bias=None):
    scale = gamma / jnp.sqrt(var + eps)
    bias = beta - mean * scale
    if conv_bias is not None:
        bias = bias + scale * conv_bias
    return scale, bias


def _prep_conv(w_hwio, scale, bias, cin_p, cout_p):
    """Zero-pad channels to lane multiples; reshape weights to im2col layout."""
    kh, kw, cin, cout = w_hwio.shape
    w = jnp.zeros((kh, kw, cin_p, cout_p), jnp.float32)
    w = w.at[:, :, :cin, :cout].set(w_hwio.astype(jnp.float32))
    w = w.reshape(kh * kw * cin_p, cout_p)
    s = jnp.zeros((1, cout_p), jnp.float32).at[0, :cout].set(scale)
    b = jnp.zeros((1, cout_p), jnp.float32).at[0, :cout].set(bias)
    return w, s, b


@jax.jit
def basicblock_forward(params, x_nchw):
    N, cin, H, W = x_nchw.shape
    planes = params["w1"].shape[-1]
    cin_p = _round_up(cin, LANE)
    cout_p = _round_up(planes, LANE)

    # NCHW -> NHWC; a single pad op adds the +1 spatial halo and pads channels
    # to the 128-lane width (fused with the transpose by XLA under jit).
    x = jnp.transpose(x_nchw, (0, 2, 3, 1)).astype(jnp.float32)
    xpad = jnp.pad(x, ((0, 0), (1, 1), (1, 1), (0, cin_p - cin)))

    s1, b1 = fold_bn(*params["bn1"])
    s2, b2 = fold_bn(*params["bn2"])
    w1, s1p, b1p = _prep_conv(params["w1"], s1, b1, cin_p, cout_p)
    w2, s2p, b2p = _prep_conv(params["w2"], s2, b2, cout_p, cout_p)

    vec_spec = pl.BlockSpec((1, cout_p), lambda n: (0, 0))
    in_specs = [
        pl.BlockSpec((1, H + 2, W + 2, cin_p), lambda n: (n, 0, 0, 0)),
        pl.BlockSpec((9 * cin_p, cout_p), lambda n: (0, 0)), vec_spec, vec_spec,
        pl.BlockSpec((9 * cout_p, cout_p), lambda n: (0, 0)), vec_spec, vec_spec,
    ]
    args = [xpad, w1, s1p, b1p, w2, s2p, b2p]

    has_sc = "w_sc" in params
    if has_sc:
        ssc, bsc = fold_bn(*params["bn_sc"], conv_bias=params["b_sc"])
        wsc, sscp, bscp = _prep_conv(params["w_sc"], ssc, bsc, cin_p, cout_p)
        in_specs += [pl.BlockSpec((9 * cin_p, cout_p), lambda n: (0, 0)),
                     vec_spec, vec_spec]
        args += [wsc, sscp, bscp]

    out = pl.pallas_call(
        functools.partial(_basicblock_kernel, has_sc_conv=has_sc),
        out_shape=jax.ShapeDtypeStruct((N, H, W, cout_p), jnp.float32),
        grid=(N,),
        in_specs=in_specs,
        out_specs=pl.BlockSpec((1, H, W, cout_p), lambda n: (n, 0, 0, 0)),
        scratch_shapes=[
            pltpu.VMEM((H + 2, W + 2, cout_p), jnp.float32),  # padded conv1 out
            pltpu.VMEM((H * W, cout_p), jnp.float32),          # shortcut result
        ],
        compiler_params=pltpu.CompilerParams(
            dimension_semantics=("parallel",),
            vmem_limit_bytes=32 * 1024 * 1024),
    )(*args)

    # Drop the channel padding, back to NCHW.
    return jnp.transpose(out[..., :planes], (0, 3, 1, 2))


def init_basicblock_params(key, in_planes, planes, stride=1):
    # TODO(synk): stride != 1 (strided conv) not implemented in the kernel.
    assert stride == 1, "only stride=1 is supported by this kernel"
    k1, k2, k3 = jax.random.split(key, 3)

    def conv_w(k, cin, cout):
        # PyTorch weight is (Cout, Cin, 3, 3); we store HWIO (3, 3, Cin, Cout).
        return jax.random.normal(k, (3, 3, cin, cout), jnp.float32) * 0.1

    def bn_params(c):
        # (gamma, beta, running_mean, running_var) -- PyTorch defaults.
        return (jnp.ones(c, jnp.float32), jnp.zeros(c, jnp.float32),
                jnp.zeros(c, jnp.float32), jnp.ones(c, jnp.float32))

    params = {
        "w1": conv_w(k1, in_planes, planes), "bn1": bn_params(planes),
        "w2": conv_w(k2, planes, planes), "bn2": bn_params(planes),
    }
    if stride != 1 or in_planes != planes:
        params["w_sc"] = conv_w(k3, in_planes, planes)
        params["b_sc"] = jnp.zeros(planes, jnp.float32)  # shortcut conv bias=True
        params["bn_sc"] = bn_params(planes)
    return params


# --------------------------- pure-JAX reference ----------------------------- #

def _ref_conv_bn(x, w, scale, bias, relu):
    y = jax.lax.conv_general_dilated(
        x, w, window_strides=(1, 1), padding="SAME",
        dimension_numbers=("NHWC", "HWIO", "NHWC"))
    y = y * scale + bias
    return jnp.maximum(y, 0.0) if relu else y


def basicblock_ref(params, x_nchw):
    x = jnp.transpose(x_nchw, (0, 2, 3, 1))
    s1, b1 = fold_bn(*params["bn1"])
    out = _ref_conv_bn(x, params["w1"], s1, b1, True)
    if "w_sc" in params:
        ss, bs = fold_bn(*params["bn_sc"], conv_bias=params["b_sc"])
        shortcut = _ref_conv_bn(x, params["w_sc"], ss, bs, False)
    else:
        shortcut = x
    s2, b2 = fold_bn(*params["bn2"])
    out = _ref_conv_bn(out, params["w2"], s2, b2, False) + shortcut
    out = jnp.maximum(out, 0.0)
    return jnp.transpose(out, (0, 3, 1, 2))


# ---------------------------------- main ------------------------------------ #

if __name__ == "__main__":
    key = jax.random.PRNGKey(0)
    k_x, k_p, k_p2 = jax.random.split(key, 3)

    # Case 1: shape-changing block -> 3x3 shortcut conv path.
    in_planes, planes, stride = 4, 8, 1
    x = jax.random.normal(k_x, (2, in_planes, 16, 16), jnp.float32)  # NCHW
    params = init_basicblock_params(k_p, in_planes, planes, stride)
    out = jax.block_until_ready(basicblock_forward(params, x))
    ref = basicblock_ref(params, x)
    assert out.shape == (2, planes, 16, 16)
    assert jnp.allclose(out, ref, atol=1e-4, rtol=1e-4), "mismatch (conv shortcut)"

    # Case 2: identity shortcut (in_planes == planes).
    params2 = init_basicblock_params(k_p2, planes, planes, 1)
    x2 = jax.random.normal(k_x, (2, planes, 16, 16), jnp.float32)
    out2 = jax.block_until_ready(basicblock_forward(params2, x2))
    ref2 = basicblock_ref(params2, x2)
    assert jnp.allclose(out2, ref2, atol=1e-4, rtol=1e-4), "mismatch (identity)"

    print("KERNEL_OK")
</pallas_src>

<mosaic_0001>
module attributes {stable_mosaic.version = 11 : i64} {
  func.func @_basicblock_kernel(%arg0: i32, %arg1: memref<1x18x18x128xf32, #tpu.memory_space<vmem>>, %arg2: memref<1152x128xf32, #tpu.memory_space<vmem>>, %arg3: memref<1x128xf32, #tpu.memory_space<vmem>>, %arg4: memref<1x128xf32, #tpu.memory_space<vmem>>, %arg5: memref<1152x128xf32, #tpu.memory_space<vmem>>, %arg6: memref<1x128xf32, #tpu.memory_space<vmem>>, %arg7: memref<1x128xf32, #tpu.memory_space<vmem>>, %arg8: memref<1152x128xf32, #tpu.memory_space<vmem>>, %arg9: memref<1x128xf32, #tpu.memory_space<vmem>>, %arg10: memref<1x128xf32, #tpu.memory_space<vmem>>, %arg11: memref<1x16x16x128xf32, #tpu.memory_space<vmem>>, %arg12: memref<18x18x128xf32, #tpu.memory_space<vmem>>, %arg13: memref<256x128xf32, #tpu.memory_space<vmem>>) attributes {dimension_semantics = [#tpu.dimension_semantics<parallel>], iteration_bounds = array<i64: 2>, scalar_prefetch = 0 : i64, scratch_operands = 2 : i64, tpu.core_type = #tpu.core_type<tc>, window_params = [{transform_indices = @transform_0, window_bounds = array<i64: 1, 18, 18, 128>}, {pipeline_mode = #tpu.pipeline_mode<synchronous>, transform_indices = @transform_1, window_bounds = array<i64: 1152, 128>}, {pipeline_mode = #tpu.pipeline_mode<synchronous>, transform_indices = @transform_2, window_bounds = array<i64: 1, 128>}, {pipeline_mode = #tpu.pipeline_mode<synchronous>, transform_indices = @transform_3, window_bounds = array<i64: 1, 128>}, {pipeline_mode = #tpu.pipeline_mode<synchronous>, transform_indices = @transform_4, window_bounds = array<i64: 1152, 128>}, {pipeline_mode = #tpu.pipeline_mode<synchronous>, transform_indices = @transform_5, window_bounds = array<i64: 1, 128>}, {pipeline_mode = #tpu.pipeline_mode<synchronous>, transform_indices = @transform_6, window_bounds = array<i64: 1, 128>}, {pipeline_mode = #tpu.pipeline_mode<synchronous>, transform_indices = @transform_7, window_bounds = array<i64: 1152, 128>}, {pipeline_mode = #tpu.pipeline_mode<synchronous>, transform_indices = @transform_8, window_bounds = array<i64: 1, 128>}, {pipeline_mode = #tpu.pipeline_mode<synchronous>, transform_indices = @transform_9, window_bounds = array<i64: 1, 128>}, {transform_indices = @transform_10, window_bounds = array<i64: 1, 16, 16, 128>}]} {
    %c0 = arith.constant 0 : index
    %c0_0 = arith.constant 0 : index
    %c0_1 = arith.constant 0 : index
    %c0_2 = arith.constant 0 : index
    %0 = vector.load %arg1[%c0, %c0_0, %c0_1, %c0_2] : memref<1x18x18x128xf32, #tpu.memory_space<vmem>>, vector<1x18x18x128xf32>
    %1 = vector.shape_cast %0 : vector<1x18x18x128xf32> to vector<18x18x128xf32>
    %2 = vector.extract_strided_slice %1 {offsets = [0, 0, 0], sizes = [16, 16, 128], strides = [1, 1, 1]} : vector<18x18x128xf32> to vector<16x16x128xf32>
    %3 = vector.extract_strided_slice %1 {offsets = [0, 1, 0], sizes = [16, 16, 128], strides = [1, 1, 1]} : vector<18x18x128xf32> to vector<16x16x128xf32>
    %4 = vector.extract_strided_slice %1 {offsets = [0, 2, 0], sizes = [16, 16, 128], strides = [1, 1, 1]} : vector<18x18x128xf32> to vector<16x16x128xf32>
    %5 = vector.extract_strided_slice %1 {offsets = [1, 0, 0], sizes = [16, 16, 128], strides = [1, 1, 1]} : vector<18x18x128xf32> to vector<16x16x128xf32>
    %6 = vector.extract_strided_slice %1 {offsets = [1, 1, 0], sizes = [16, 16, 128], strides = [1, 1, 1]} : vector<18x18x128xf32> to vector<16x16x128xf32>
    %7 = vector.extract_strided_slice %1 {offsets = [1, 2, 0], sizes = [16, 16, 128], strides = [1, 1, 1]} : vector<18x18x128xf32> to vector<16x16x128xf32>
    %8 = vector.extract_strided_slice %1 {offsets = [2, 0, 0], sizes = [16, 16, 128], strides = [1, 1, 1]} : vector<18x18x128xf32> to vector<16x16x128xf32>
    %9 = vector.extract_strided_slice %1 {offsets = [2, 1, 0], sizes = [16, 16, 128], strides = [1, 1, 1]} : vector<18x18x128xf32> to vector<16x16x128xf32>
    %10 = vector.extract_strided_slice %1 {offsets = [2, 2, 0], sizes = [16, 16, 128], strides = [1, 1, 1]} : vector<18x18x128xf32> to vector<16x16x128xf32>
    %11 = tpu.concatenate %2, %3, %4, %5, %6, %7, %8, %9, %10 in 2 : vector<16x16x128xf32>, vector<16x16x128xf32>, vector<16x16x128xf32>, vector<16x16x128xf32>, vector<16x16x128xf32>, vector<16x16x128xf32>, vector<16x16x128xf32>, vector<16x16x128xf32>, vector<16x16x128xf32> -> vector<16x16x1152xf32>
    %12 = vector.shape_cast %11 : vector<16x16x1152xf32> to vector<256x1152xf32>
    %c0_3 = arith.constant 0 : index
    %c0_4 = arith.constant 0 : index
    %13 = vector.load %arg8[%c0_3, %c0_4] : memref<1152x128xf32, #tpu.memory_space<vmem>>, vector<1152x128xf32>
    %cst = arith.constant dense<0.000000e+00> : vector<256x128xf32>
    %14 = tpu.matmul %12, %13, %cst {dimension_numbers = #tpu.dot_dimension_numbers<[1], [0], [0], [1], [0, 0, 1, 1], [], []>} : vector<256x1152xf32>, vector<1152x128xf32>, vector<256x128xf32> -> vector<256x128xf32>
    %c0_5 = arith.constant 0 : index
    %c0_6 = arith.constant 0 : index
    %15 = vector.load %arg9[%c0_5, %c0_6] : memref<1x128xf32, #tpu.memory_space<vmem>>, vector<1x128xf32>
    %16 = vector.broadcast %15 : vector<1x128xf32> to vector<256x128xf32>
    %17 = arith.mulf %14, %16 : vector<256x128xf32>
    %c0_7 = arith.constant 0 : index
    %c0_8 = arith.constant 0 : index
    %18 = vector.load %arg10[%c0_7, %c0_8] : memref<1x128xf32, #tpu.memory_space<vmem>>, vector<1x128xf32>
    %19 = vector.broadcast %18 : vector<1x128xf32> to vector<256x128xf32>
    %20 = arith.addf %17, %19 : vector<256x128xf32>
    %c0_9 = arith.constant 0 : index
    %c0_10 = arith.constant 0 : index
    %21 = vector.load %arg13[%c0_9, %c0_10] : memref<256x128xf32, #tpu.memory_space<vmem>>, vector<256x128xf32>
    tpu.vector_store %arg13[%c0_9, %c0_10], %20 {strides = array<i32>} : memref<256x128xf32, #tpu.memory_space<vmem>>, vector<256x128xf32>,
    %c0_11 = arith.constant 0 : index
    %c0_12 = arith.constant 0 : index
    %22 = vector.load %arg2[%c0_11, %c0_12] : memref<1152x128xf32, #tpu.memory_space<vmem>>, vector<1152x128xf32>
    %cst_13 = arith.constant dense<0.000000e+00> : vector<256x128xf32>
    %23 = tpu.matmul %12, %22, %cst_13 {dimension_numbers = #tpu.dot_dimension_numbers<[1], [0], [0], [1], [0, 0, 1, 1], [], []>} : vector<256x1152xf32>, vector<1152x128xf32>, vector<256x128xf32> -> vector<256x128xf32>
    %c0_14 = arith.constant 0 : index
    %c0_15 = arith.constant 0 : index
    %24 = vector.load %arg3[%c0_14, %c0_15] : memref<1x128xf32, #tpu.memory_space<vmem>>, vector<1x128xf32>
    %25 = vector.broadcast %24 : vector<1x128xf32> to vector<256x128xf32>
    %26 = arith.mulf %23, %25 : vector<256x128xf32>
    %c0_16 = arith.constant 0 : index
    %c0_17 = arith.constant 0 : index
    %27 = vector.load %arg4[%c0_16, %c0_17] : memref<1x128xf32, #tpu.memory_space<vmem>>, vector<1x128xf32>
    %28 = vector.broadcast %27 : vector<1x128xf32> to vector<256x128xf32>
    %29 = arith.addf %26, %28 : vector<256x128xf32>
    %cst_18 = arith.constant 0.000000e+00 : f32
    %30 = vector.broadcast %cst_18 : f32 to vector<256x128xf32>
    %31 = arith.maximumf %29, %30 : vector<256x128xf32>
    %cst_19 = arith.constant 0.000000e+00 : f32
    %32 = vector.broadcast %cst_19 : f32 to vector<18x18x128xf32>
    %c0_20 = arith.constant 0 : index
    %c0_21 = arith.constant 0 : index
    %c0_22 = arith.constant 0 : index
    %33 = vector.load %arg12[%c0_20, %c0_21, %c0_22] : memref<18x18x128xf32, #tpu.memory_space<vmem>>, vector<18x18x128xf32>
    tpu.vector_store %arg12[%c0_20, %c0_21, %c0_22], %32 {strides = array<i32>} : memref<18x18x128xf32, #tpu.memory_space<vmem>>, vector<18x18x128xf32>,
    %34 = vector.shape_cast %31 : vector<256x128xf32> to vector<16x16x128xf32>
    %c1 = arith.constant 1 : index
    %c1_23 = arith.constant 1 : index
    %c0_24 = arith.constant 0 : index
    %35 = vector.load %arg12[%c1, %c1_23, %c0_24] : memref<18x18x128xf32, #tpu.memory_space<vmem>>, vector<16x16x128xf32>
    tpu.vector_store %arg12[%c1, %c1_23, %c0_24], %34 {strides = array<i32>} : memref<18x18x128xf32, #tpu.memory_space<vmem>>, vector<16x16x128xf32>,
    %c0_25 = arith.constant 0 : index
    %c0_26 = arith.constant 0 : index
    %c0_27 = arith.constant 0 : index
    %36 = vector.load %arg12[%c0_25, %c0_26, %c0_27] : memref<18x18x128xf32, #tpu.memory_space<vmem>>, vector<18x18x128xf32>
    %37 = vector.extract_strided_slice %36 {offsets = [0, 0, 0], sizes = [16, 16, 128], strides = [1, 1, 1]} : vector<18x18x128xf32> to vector<16x16x128xf32>
    %38 = vector.extract_strided_slice %36 {offsets = [0, 1, 0], sizes = [16, 16, 128], strides = [1, 1, 1]} : vector<18x18x128xf32> to vector<16x16x128xf32>
    %39 = vector.extract_strided_slice %36 {offsets = [0, 2, 0], sizes = [16, 16, 128], strides = [1, 1, 1]} : vector<18x18x128xf32> to vector<16x16x128xf32>
    %40 = vector.extract_strided_slice %36 {offsets = [1, 0, 0], sizes = [16, 16, 128], strides = [1, 1, 1]} : vector<18x18x128xf32> to vector<16x16x128xf32>
    %41 = vector.extract_strided_slice %36 {offsets = [1, 1, 0], sizes = [16, 16, 128], strides = [1, 1, 1]} : vector<18x18x128xf32> to vector<16x16x128xf32>
    %42 = vector.extract_strided_slice %36 {offsets = [1, 2, 0], sizes = [16, 16, 128], strides = [1, 1, 1]} : vector<18x18x128xf32> to vector<16x16x128xf32>
    %43 = vector.extract_strided_slice %36 {offsets = [2, 0, 0], sizes = [16, 16, 128], strides = [1, 1, 1]} : vector<18x18x128xf32> to vector<16x16x128xf32>
    %44 = vector.extract_strided_slice %36 {offsets = [2, 1, 0], sizes = [16, 16, 128], strides = [1, 1, 1]} : vector<18x18x128xf32> to vector<16x16x128xf32>
    %45 = vector.extract_strided_slice %36 {offsets = [2, 2, 0], sizes = [16, 16, 128], strides = [1, 1, 1]} : vector<18x18x128xf32> to vector<16x16x128xf32>
    %46 = tpu.concatenate %37, %38, %39, %40, %41, %42, %43, %44, %45 in 2 : vector<16x16x128xf32>, vector<16x16x128xf32>, vector<16x16x128xf32>, vector<16x16x128xf32>, vector<16x16x128xf32>, vector<16x16x128xf32>, vector<16x16x128xf32>, vector<16x16x128xf32>, vector<16x16x128xf32> -> vector<16x16x1152xf32>
    %47 = vector.shape_cast %46 : vector<16x16x1152xf32> to vector<256x1152xf32>
    %c0_28 = arith.constant 0 : index
    %c0_29 = arith.constant 0 : index
    %48 = vector.load %arg5[%c0_28, %c0_29] : memref<1152x128xf32, #tpu.memory_space<vmem>>, vector<1152x128xf32>
    %cst_30 = arith.constant dense<0.000000e+00> : vector<256x128xf32>
    %49 = tpu.matmul %47, %48, %cst_30 {dimension_numbers = #tpu.dot_dimension_numbers<[1], [0], [0], [1], [0, 0, 1, 1], [], []>} : vector<256x1152xf32>, vector<1152x128xf32>, vector<256x128xf32> -> vector<256x128xf32>
    %c0_31 = arith.constant 0 : index
    %c0_32 = arith.constant 0 : index
    %50 = vector.load %arg6[%c0_31, %c0_32] : memref<1x128xf32, #tpu.memory_space<vmem>>, vector<1x128xf32>
    %51 = vector.broadcast %50 : vector<1x128xf32> to vector<256x128xf32>
    %52 = arith.mulf %49, %51 : vector<256x128xf32>
    %c0_33 = arith.constant 0 : index
    %c0_34 = arith.constant 0 : index
    %53 = vector.load %arg7[%c0_33, %c0_34] : memref<1x128xf32, #tpu.memory_space<vmem>>, vector<1x128xf32>
    %54 = vector.broadcast %53 : vector<1x128xf32> to vector<256x128xf32>
    %55 = arith.addf %52, %54 : vector<256x128xf32>
    %c0_35 = arith.constant 0 : index
    %c0_36 = arith.constant 0 : index
    %56 = vector.load %arg13[%c0_35, %c0_36] : memref<256x128xf32, #tpu.memory_space<vmem>>, vector<256x128xf32>
    %57 = arith.addf %55, %56 : vector<256x128xf32>
    %cst_37 = arith.constant 0.000000e+00 : f32
    %58 = vector.broadcast %cst_37 : f32 to vector<256x128xf32>
    %59 = arith.maximumf %57, %58 : vector<256x128xf32>
    %60 = vector.shape_cast %59 : vector<256x128xf32> to vector<16x16x128xf32>
    %c0_38 = arith.constant 0 : index
    %c0_39 = arith.constant 0 : index
    %c0_40 = arith.constant 0 : index
    %c0_41 = arith.constant 0 : index
    %61 = vector.load %arg11[%c0_38, %c0_39, %c0_40, %c0_41] : memref<1x16x16x128xf32, #tpu.memory_space<vmem>>, vector<1x16x16x128xf32>
    %62 = vector.shape_cast %61 : vector<1x16x16x128xf32> to vector<16x16x128xf32>
    %63 = vector.shape_cast %60 : vector<16x16x128xf32> to vector<1x16x16x128xf32>
    tpu.vector_store %arg11[%c0_38, %c0_39, %c0_40, %c0_41], %63 {strides = array<i32>} : memref<1x16x16x128xf32, #tpu.memory_space<vmem>>, vector<1x16x16x128xf32>,
    return
  }
  func.func @transform_0(%arg0: i32) -> (i32, i32, i32, i32) {
    %c0_i32 = arith.constant 0 : i32
    %c0_i32_0 = arith.constant 0 : i32
    %c0_i32_1 = arith.constant 0 : i32
    %c0_i32_2 = arith.constant 0 : i32
    return %arg0, %c0_i32, %c0_i32_0, %c0_i32_1 : i32, i32, i32, i32
  }
  func.func @transform_1(%arg0: i32) -> (i32, i32) {
    %c0_i32 = arith.constant 0 : i32
    %c0_i32_0 = arith.constant 0 : i32
    %c0_i32_1 = arith.constant 0 : i32
    return %c0_i32, %c0_i32_0 : i32, i32
  }
  func.func @transform_2(%arg0: i32) -> (i32, i32) {
    %c0_i32 = arith.constant 0 : i32
    %c0_i32_0 = arith.constant 0 : i32
    %c0_i32_1 = arith.constant 0 : i32
    return %c0_i32, %c0_i32_0 : i32, i32
  }
  func.func @transform_3(%arg0: i32) -> (i32, i32) {
    %c0_i32 = arith.constant 0 : i32
    %c0_i32_0 = arith.constant 0 : i32
    %c0_i32_1 = arith.constant 0 : i32
    return %c0_i32, %c0_i32_0 : i32, i32
  }
  func.func @transform_4(%arg0: i32) -> (i32, i32) {
    %c0_i32 = arith.constant 0 : i32
    %c0_i32_0 = arith.constant 0 : i32
    %c0_i32_1 = arith.constant 0 : i32
    return %c0_i32, %c0_i32_0 : i32, i32
  }
  func.func @transform_5(%arg0: i32) -> (i32, i32) {
    %c0_i32 = arith.constant 0 : i32
    %c0_i32_0 = arith.constant 0 : i32
    %c0_i32_1 = arith.constant 0 : i32
    return %c0_i32, %c0_i32_0 : i32, i32
  }
  func.func @transform_6(%arg0: i32) -> (i32, i32) {
    %c0_i32 = arith.constant 0 : i32
    %c0_i32_0 = arith.constant 0 : i32
    %c0_i32_1 = arith.constant 0 : i32
    return %c0_i32, %c0_i32_0 : i32, i32
  }
  func.func @transform_7(%arg0: i32) -> (i32, i32) {
    %c0_i32 = arith.constant 0 : i32
    %c0_i32_0 = arith.constant 0 : i32
    %c0_i32_1 = arith.constant 0 : i32
    return %c0_i32, %c0_i32_0 : i32, i32
  }
  func.func @transform_8(%arg0: i32) -> (i32, i32) {
    %c0_i32 = arith.constant 0 : i32
    %c0_i32_0 = arith.constant 0 : i32
    %c0_i32_1 = arith.constant 0 : i32
    return %c0_i32, %c0_i32_0 : i32, i32
  }
  func.func @transform_9(%arg0: i32) -> (i32, i32) {
    %c0_i32 = arith.constant 0 : i32
    %c0_i32_0 = arith.constant 0 : i32
    %c0_i32_1 = arith.constant 0 : i32
    return %c0_i32, %c0_i32_0 : i32, i32
  }
  func.func @transform_10(%arg0: i32) -> (i32, i32, i32, i32) {
    %c0_i32 = arith.constant 0 : i32
    %c0_i32_0 = arith.constant 0 : i32
    %c0_i32_1 = arith.constant 0 : i32
    %c0_i32_2 = arith.constant 0 : i32
    return %arg0, %c0_i32, %c0_i32_0, %c0_i32_1 : i32, i32, i32, i32
  }
}

</mosaic_0001>

<llo_original>
// kernel: basicblock_forward.1
$region0: #{basicblock_forward.1}
  #allocation0 [shape = 'u32[]', space=smem, size = 0x4, offset = 0x4, fixed_abs, tag = 'smem constant byte address 0x4 - core index']
  #allocation1 [shape = 'u32[144,128]{1,0:T(1,128)}', space=vmem, size = 0x12000, scoped, tag = 'internal scratch']
  #allocation2 [shape = 'f32[18,18,128]{2,1,0:T(8,128)}', space=vmem, size = 0x36000, scoped, tag = 'scratch operand']
  #allocation3 [shape = 'f32[256,128]{1,0:T(8,128)}', space=vmem, size = 0x20000, scoped, tag = 'scratch operand']
  %s0 = inlined_call_operand.vmem [shape: f32[2,18,18,128], index: 0, kind: input, shape index: {}]
  %s1 = inlined_call_operand.vmem [shape: f32[1152,128], index: 1, kind: input, shape index: {}]
  %s2 = inlined_call_operand.vmem [shape: f32[1,128], index: 2, kind: input, shape index: {}]
  %s3 = inlined_call_operand.vmem [shape: f32[1,128], index: 3, kind: input, shape index: {}]
  %s4 = inlined_call_operand.vmem [shape: f32[1152,128], index: 4, kind: input, shape index: {}]
  %s5 = inlined_call_operand.vmem [shape: f32[1,128], index: 5, kind: input, shape index: {}]
  %s6 = inlined_call_operand.vmem [shape: f32[1,128], index: 6, kind: input, shape index: {}]
  %s7 = inlined_call_operand.vmem [shape: f32[1152,128], index: 7, kind: input, shape index: {}]
  %s8 = inlined_call_operand.vmem [shape: f32[1,128], index: 8, kind: input, shape index: {}]
  %s9 = inlined_call_operand.vmem [shape: f32[1,128], index: 9, kind: input, shape index: {}]
  %s10 = inlined_call_operand.vmem [shape: f32[2,16,16,128], index: 10, kind: output, shape index: {}]
  %s11 = sld [smem:[#allocation0]]
  $region73: #{basicblock_forward.1} parent=0
    _
  %s13 = ssub.s32 1, %s11
  %s14 = scalar_select 0, %s13, %s11
  loop: start=0, step=1, limit=4
  $region2: #{basicblock_forward.1} parent=0 // loop_pre_header
    _
  $region3: #{basicblock_forward.1} parent=0 // loop_header
    %s16 = sphi 0, %s20
    %p17 = scmp.ge.s32.totalorder %s16, 4
    %s26 = sphi 0, %s28
    %s29 = sphi 0, %s26
    %s30 = sphi 0, %s29
    %s46 = sphi 0, %s30
    %s50 = sphi 0, %s50
    %s52 = sphi 0, %s50
    %s53 = sphi 0, %s52
    %s67 = sphi 0, %s53
    %s71 = sphi 0, %s71
    %s73 = sphi 0, %s71
    %s74 = sphi 0, %s73
    %s88 = sphi 0, %s74
    %s92 = sphi 0, %s92
    %s94 = sphi 0, %s92
    %s95 = sphi 0, %s94
    %s109 = sphi 0, %s95
    %s113 = sphi 0, %s113
    %s115 = sphi 0, %s113
    %s116 = sphi 0, %s115
    %s130 = sphi 0, %s116
    %s134 = sphi 0, %s134
    %s136 = sphi 0, %s134
    %s137 = sphi 0, %s136
    %s151 = sphi 0, %s137
    %s155 = sphi 0, %s155
    %s157 = sphi 0, %s155
    %s158 = sphi 0, %s157
    %s172 = sphi 0, %s158
    %s176 = sphi 0, %s176
    %s178 = sphi 0, %s176
    %s179 = sphi 0, %s178
    %s193 = sphi 0, %s179
    %s197 = sphi 0, %s197
    %s199 = sphi 0, %s197
    %s200 = sphi 0, %s199
    %s214 = sphi 0, %s200
    %s218 = sphi 0, %s218
    %s220 = sphi 0, %s218
    %s221 = sphi 0, %s220
    %s235 = sphi 0, %s221
    %s241 = sphi 0, %s243
    %s244 = sphi 0, %s241
    %s245 = sphi 0, %s244
    %s261 = sphi 0, %s245
  $region4: #{basicblock_forward.1} parent=0 // loop_header_branch
    %19 = sbr.rel (%p17) target = $region8
  $region5: #{basicblock_forward.1} parent=0 // loop_body
    %s21 = ssub.s32 %s16, 1
    %s22 = ssub.s32 %s16, 2
    %s23 = sadd.s32 %s16, 1
    %s24 = ssub.s32 %s16, %s23
    %p25 = scmp.eq.s32.totalorder %s24, 0
    %s27 = sadd.s32 %s26, 1
    %s28 = scalar_select %p25, %s26, %s27
    %p31 = pneg %p25
    %p32 = scmp.eq.s32.totalorder %s16, 1
    %p33 = por %p31, %p32
    %p34 = scmp.ne.s32.totalorder %s26, %s29
    %p35 = scmp.eq.s32.totalorder %s16, 0
    %p36 = por %p34, %p35
    %p37 = scmp.ne.s32.totalorder %s26, %s29
    %p38 = scmp.eq.s32.totalorder %s21, 1
    %p39 = por %p37, %p38
    %p40 = scmp.ne.s32.totalorder %s29, %s30
    %p41 = scmp.eq.s32.totalorder %s21, 0
    %p42 = por %p40, %p41
    %p43 = scmp.ne.s32.totalorder %s29, %s30
    %p44 = scmp.eq.s32.totalorder %s22, 1
    %p45 = por %p43, %p44
    %p47 = scmp.ne.s32.totalorder %s30, %s46
    %p48 = scmp.eq.s32.totalorder %s22, 0
    %p49 = por %p47, %p48
    %s51 = sadd.s32 %s50, 1
    %p54 = scmp.eq.s32.totalorder %s16, 1
    %p55 = scmp.ne.s32.totalorder %s50, %s52
    %p56 = scmp.eq.s32.totalorder %s16, 0
    %p57 = por %p55, %p56
    %p58 = scmp.ne.s32.totalorder %s50, %s52
    %p59 = scmp.eq.s32.totalorder %s21, 1
    %p60 = por %p58, %p59
    %p61 = scmp.ne.s32.totalorder %s52, %s53
    %p62 = scmp.eq.s32.totalorder %s21, 0
    %p63 = por %p61, %p62
    %p64 = scmp.ne.s32.totalorder %s52, %s53
    %p65 = scmp.eq.s32.totalorder %s22, 1
    %p66 = por %p64, %p65
    %p68 = scmp.ne.s32.totalorder %s53, %s67
    %p69 = scmp.eq.s32.totalorder %s22, 0
    %p70 = por %p68, %p69
    %s72 = sadd.s32 %s71, 1
    %p75 = scmp.eq.s32.totalorder %s16, 1
    %p76 = scmp.ne.s32.totalorder %s71, %s73
    %p77 = scmp.eq.s32.totalorder %s16, 0
    %p78 = por %p76, %p77
    %p79 = scmp.ne.s32.totalorder %s71, %s73
    %p80 = scmp.eq.s32.totalorder %s21, 1
    %p81 = por %p79, %p80
    %p82 = scmp.ne.s32.totalorder %s73, %s74
    %p83 = scmp.eq.s32.totalorder %s21, 0
    %p84 = por %p82, %p83
    %p85 = scmp.ne.s32.totalorder %s73, %s74
    %p86 = scmp.eq.s32.totalorder %s22, 1
    %p87 = por %p85, %p86
    %p89 = scmp.ne.s32.totalorder %s74, %s88
    %p90 = scmp.eq.s32.totalorder %s22, 0
    %p91 = por %p89, %p90
    %s93 = sadd.s32 %s92, 1
    %p96 = scmp.eq.s32.totalorder %s16, 1
    %p97 = scmp.ne.s32.totalorder %s92, %s94
    %p98 = scmp.eq.s32.totalorder %s16, 0
    %p99 = por %p97, %p98
    %p100 = scmp.ne.s32.totalorder %s92, %s94
    %p101 = scmp.eq.s32.totalorder %s21, 1
    %p102 = por %p100, %p101
    %p103 = scmp.ne.s32.totalorder %s94, %s95
    %p104 = scmp.eq.s32.totalorder %s21, 0
    %p105 = por %p103, %p104
    %p106 = scmp.ne.s32.totalorder %s94, %s95
    %p107 = scmp.eq.s32.totalorder %s22, 1
    %p108 = por %p106, %p107
    %p110 = scmp.ne.s32.totalorder %s95, %s109
    %p111 = scmp.eq.s32.totalorder %s22, 0
    %p112 = por %p110, %p111
    %s114 = sadd.s32 %s113, 1
    %p117 = scmp.eq.s32.totalorder %s16, 1
    %p118 = scmp.ne.s32.totalorder %s113, %s115
    %p119 = scmp.eq.s32.totalorder %s16, 0
    %p120 = por %p118, %p119
    %p121 = scmp.ne.s32.totalorder %s113, %s115
    %p122 = scmp.eq.s32.totalorder %s21, 1
    %p123 = por %p121, %p122
    %p124 = scmp.ne.s32.totalorder %s115, %s116
    %p125 = scmp.eq.s32.totalorder %s21, 0
    %p126 = por %p124, %p125
    %p127 = scmp.ne.s32.totalorder %s115, %s116
    %p128 = scmp.eq.s32.totalorder %s22, 1
    %p129 = por %p127, %p128
    %p131 = scmp.ne.s32.totalorder %s116, %s130
    %p132 = scmp.eq.s32.totalorder %s22, 0
    %p133 = por %p131, %p132
    %s135 = sadd.s32 %s134, 1
    %p138 = scmp.eq.s32.totalorder %s16, 1
    %p139 = scmp.ne.s32.totalorder %s134, %s136
    %p140 = scmp.eq.s32.totalorder %s16, 0
    %p141 = por %p139, %p140
    %p142 = scmp.ne.s32.totalorder %s134, %s136
    %p143 = scmp.eq.s32.totalorder %s21, 1
    %p144 = por %p142, %p143
    %p145 = scmp.ne.s32.totalorder %s136, %s137
    %p146 = scmp.eq.s32.totalorder %s21, 0
    %p147 = por %p145, %p146
    %p148 = scmp.ne.s32.totalorder %s136, %s137
    %p149 = scmp.eq.s32.totalorder %s22, 1
    %p150 = por %p148, %p149
    %p152 = scmp.ne.s32.totalorder %s137, %s151
    %p153 = scmp.eq.s32.totalorder %s22, 0
    %p154 = por %p152, %p153
    %s156 = sadd.s32 %s155, 1
    %p159 = scmp.eq.s32.totalorder %s16, 1
    %p160 = scmp.ne.s32.totalorder %s155, %s157
    %p161 = scmp.eq.s32.totalorder %s16, 0
    %p162 = por %p160, %p161
    %p163 = scmp.ne.s32.totalorder %s155, %s157
    %p164 = scmp.eq.s32.totalorder %s21, 1
    %p165 = por %p163, %p164
    %p166 = scmp.ne.s32.totalorder %s157, %s158
    %p167 = scmp.eq.s32.totalorder %s21, 0
    %p168 = por %p166, %p167
    %p169 = scmp.ne.s32.totalorder %s157, %s158
    %p170 = scmp.eq.s32.totalorder %s22, 1
    %p171 = por %p169, %p170
    %p173 = scmp.ne.s32.totalorder %s158, %s172
    %p174 = scmp.eq.s32.totalorder %s22, 0
    %p175 = por %p173, %p174
    %s177 = sadd.s32 %s176, 1
    %p180 = scmp.eq.s32.totalorder %s16, 1
    %p181 = scmp.ne.s32.totalorder %s176, %s178
    %p182 = scmp.eq.s32.totalorder %s16, 0
    %p183 = por %p181, %p182
    %p184 = scmp.ne.s32.totalorder %s176, %s178
    %p185 = scmp.eq.s32.totalorder %s21, 1
    %p186 = por %p184, %p185
    %p187 = scmp.ne.s32.totalorder %s178, %s179
    %p188 = scmp.eq.s32.totalorder %s21, 0
    %p189 = por %p187, %p188
    %p190 = scmp.ne.s32.totalorder %s178, %s179
    %p191 = scmp.eq.s32.totalorder %s22, 1
    %p192 = por %p190, %p191
    %p194 = scmp.ne.s32.totalorder %s179, %s193
    %p195 = scmp.eq.s32.totalorder %s22, 0
    %p196 = por %p194, %p195
    %s198 = sadd.s32 %s197, 1
    %p201 = scmp.eq.s32.totalorder %s16, 1
    %p202 = scmp.ne.s32.totalorder %s197, %s199
    %p203 = scmp.eq.s32.totalorder %s16, 0
    %p204 = por %p202, %p203
    %p205 = scmp.ne.s32.totalorder %s197, %s199
    %p206 = scmp.eq.s32.totalorder %s21, 1
    %p207 = por %p205, %p206
    %p208 = scmp.ne.s32.totalorder %s199, %s200
    %p209 = scmp.eq.s32.totalorder %s21, 0
    %p210 = por %p208, %p209
    %p211 = scmp.ne.s32.totalorder %s199, %s200
    %p212 = scmp.eq.s32.totalorder %s22, 1
    %p213 = por %p211, %p212
    %p215 = scmp.ne.s32.totalorder %s200, %s214
    %p216 = scmp.eq.s32.totalorder %s22, 0
    %p217 = por %p215, %p216
    %s219 = sadd.s32 %s218, 1
    %p222 = scmp.eq.s32.totalorder %s16, 1
    %p223 = scmp.ne.s32.totalorder %s218, %s220
    %p224 = scmp.eq.s32.totalorder %s16, 0
    %p225 = por %p223, %p224
    %p226 = scmp.ne.s32.totalorder %s218, %s220
    %p227 = scmp.eq.s32.totalorder %s21, 1
    %p228 = por %p226, %p227
    %p229 = scmp.ne.s32.totalorder %s220, %s221
    %p230 = scmp.eq.s32.totalorder %s21, 0
    %p231 = por %p229, %p230
    %p232 = scmp.ne.s32.totalorder %s220, %s221
    %p233 = scmp.eq.s32.totalorder %s22, 1
    %p234 = por %p232, %p233
    %p236 = scmp.ne.s32.totalorder %s221, %s235
    %p237 = scmp.eq.s32.totalorder %s22, 0
    %p238 = por %p236, %p237
    %s239 = ssub.s32 %s16, %s23
    %p240 = scmp.eq.s32.totalorder %s239, 0
    %s242 = sadd.s32 %s241, 1
    %s243 = scalar_select %p240, %s241, %s242
    %p246 = pneg %p240
    %p247 = scmp.eq.s32.totalorder %s16, 1
    %p248 = por %p246, %p247
    %p249 = scmp.ne.s32.totalorder %s241, %s244
    %p250 = scmp.eq.s32.totalorder %s16, 0
    %p251 = por %p249, %p250
    %p252 = scmp.ne.s32.totalorder %s241, %s244
    %p253 = scmp.eq.s32.totalorder %s21, 1
    %p254 = por %p252, %p253
    %p255 = scmp.ne.s32.totalorder %s244, %s245
    %p256 = scmp.eq.s32.totalorder %s21, 0
    %p257 = por %p255, %p256
    %p258 = scmp.ne.s32.totalorder %s244, %s245
    %p259 = scmp.eq.s32.totalorder %s22, 1
    %p260 = por %p258, %p259
    %p262 = scmp.ne.s32.totalorder %s245, %s261
    %p263 = scmp.eq.s32.totalorder %s22, 0
    %p264 = por %p262, %p263
    %p265 = scmp.le.s32.totalorder 1, %s16
    %p266 = scmp.lt.s32.totalorder %s16, 3
    %p267 = pnand %p265, %p266
    %p268 = pneg %p267
    // Predicated region
    $region9: #{basicblock_forward.1} parent=5 // pred_check
      _
    $region10: #{basicblock_forward.1} parent=5 // pred_check_branch
      %270 = sbr.rel (%p267) target = $region12
    $region11: #{basicblock_forward.1} parent=5 // pred_region
      %s271 = ssub.s32 %s16, 1
      // Predicated region
      $region13: #{basicblock_forward.1} parent=11 // pred_check
        %p272 = pneg %p63
      $region14: #{basicblock_forward.1} parent=11 // pred_check_branch
        %274 = sbr.rel (%p272) target = $region16
      $region15: #{basicblock_forward.1} parent=11 // pred_region
        _
      $region16: #{basicblock_forward.1} parent=11 // pred_fallthru
        _
      // Predicated region
      $region17: #{basicblock_forward.1} parent=11 // pred_check
        %p275 = pneg %p84
      $region18: #{basicblock_forward.1} parent=11 // pred_check_branch
        %277 = sbr.rel (%p275) target = $region20
      $region19: #{basicblock_forward.1} parent=11 // pred_region
        _
      $region20: #{basicblock_forward.1} parent=11 // pred_fallthru
        _
      // Predicated region
      $region21: #{basicblock_forward.1} parent=11 // pred_check
        %p278 = pneg %p105
      $region22: #{basicblock_forward.1} parent=11 // pred_check_branch
        %280 = sbr.rel (%p278) target = $region24
      $region23: #{basicblock_forward.1} parent=11 // pred_region
        _
      $region24: #{basicblock_forward.1} parent=11 // pred_fallthru
        _
      // Predicated region
      $region25: #{basicblock_forward.1} parent=11 // pred_check
        %p281 = pneg %p126
      $region26: #{basicblock_forward.1} parent=11 // pred_check_branch
        %283 = sbr.rel (%p281) target = $region28
      $region27: #{basicblock_forward.1} parent=11 // pred_region
        _
      $region28: #{basicblock_forward.1} parent=11 // pred_fallthru
        _
      // Predicated region
      $region29: #{basicblock_forward.1} parent=11 // pred_check
        %p284 = pneg %p147
      $region30: #{basicblock_forward.1} parent=11 // pred_check_branch
        %286 = sbr.rel (%p284) target = $region32
      $region31: #{basicblock_forward.1} parent=11 // pred_region
        _
      $region32: #{basicblock_forward.1} parent=11 // pred_fallthru
        _
      // Predicated region
      $region33: #{basicblock_forward.1} parent=11 // pred_check
        %p287 = pneg %p168
      $region34: #{basicblock_forward.1} parent=11 // pred_check_branch
        %289 = sbr.rel (%p287) target = $region36
      $region35: #{basicblock_forward.1} parent=11 // pred_region
        _
      $region36: #{basicblock_forward.1} parent=11 // pred_fallthru
        _
      // Predicated region
      $region37: #{basicblock_forward.1} parent=11 // pred_check
        %p290 = pneg %p189
      $region38: #{basicblock_forward.1} parent=11 // pred_check_branch
        %292 = sbr.rel (%p290) target = $region40
      $region39: #{basicblock_forward.1} parent=11 // pred_region
        _
      $region40: #{basicblock_forward.1} parent=11 // pred_fallthru
        _
      // Predicated region
      $region41: #{basicblock_forward.1} parent=11 // pred_check
        %p293 = pneg %p210
      $region42: #{basicblock_forward.1} parent=11 // pred_check_branch
        %295 = sbr.rel (%p293) target = $region44
      $region43: #{basicblock_forward.1} parent=11 // pred_region
        _
      $region44: #{basicblock_forward.1} parent=11 // pred_fallthru
        _
      // Predicated region
      $region45: #{basicblock_forward.1} parent=11 // pred_check
        %p296 = pneg %p231
      $region46: #{basicblock_forward.1} parent=11 // pred_check_branch
        %298 = sbr.rel (%p296) target = $region48
      $region47: #{basicblock_forward.1} parent=11 // pred_region
        _
      $region48: #{basicblock_forward.1} parent=11 // pred_fallthru
        _
    $region12: #{basicblock_forward.1} parent=5 // pred_fallthru
      _
    %p299 = scmp.lt.s32.totalorder %s16, 2
    // Predicated region
    $region49: #{basicblock_forward.1} parent=5 // pred_check
      %p300 = pneg %p299
    $region50: #{basicblock_forward.1} parent=5 // pred_check_branch
      %302 = sbr.rel (%p300) target = $region52
    $region51: #{basicblock_forward.1} parent=5 // pred_region
      // Predicated region
      $region53: #{basicblock_forward.1} parent=51 // pred_check
        %p303 = pneg %p36
      $region54: #{basicblock_forward.1} parent=51 // pred_check_branch
        %305 = sbr.rel (%p303) target = $region56
      $region55: #{basicblock_forward.1} parent=51 // pred_region
        %p306 = scmp.lt.s32.totalorder %s16, 1
        %s307 = scalar_select %p306, %s16, 1
        %s308 = smul.addr %s307, 54
        %s309 = smul.addr %s308, 8
        %s310 = scalar_lea.vmem %s0, %s309
      $region56: #{basicblock_forward.1} parent=51 // pred_fallthru
        _
    $region52: #{basicblock_forward.1} parent=5 // pred_fallthru
      _
    %p311 = scmp.le.s32.totalorder 1, %s16
    %p312 = scmp.lt.s32.totalorder %s16, 3
    %p313 = pnand %p311, %p312
    %p314 = pneg %p313
    // Predicated region
    $region57: #{basicblock_forward.1} parent=5 // pred_check
      _
    $region58: #{basicblock_forward.1} parent=5 // pred_check_branch
      %316 = sbr.rel (%p313) target = $region60
    $region59: #{basicblock_forward.1} parent=5 // pred_region
      %s317 = ssub.s32 %s16, 1
      %p318 = scmp.lt.s32.totalorder %s21, 1
      %s319 = scalar_select %p318, %s21, 1
      %s320 = smul.addr %s319, 54
      %s321 = smul.addr %s320, 8
      %s322 = scalar_lea.vmem %s0, %s321
      %p323 = pneg %p42
      %p324 = pneg %p39
      %p325 = pneg %p63
      %p326 = pneg %p60
      %p327 = pneg %p84
      %p328 = pneg %p81
      %p329 = pneg %p105
      %p330 = pneg %p102
      %p331 = pneg %p126
      %p332 = pneg %p123
      %p333 = pneg %p147
      %p334 = pneg %p144
      %p335 = pneg %p168
      %p336 = pneg %p165
      %p337 = pneg %p189
      %p338 = pneg %p186
      %p339 = pneg %p210
      %p340 = pneg %p207
      %p341 = pneg %p231
      %p342 = pneg %p228
      %p343 = pneg %p257
      %p344 = pneg %p254
      %p345 = scmp.lt.s32.totalorder %s21, 1
      %s346 = scalar_select %p345, %s21, 1
      %s347 = smul.addr %s346, 32
      %s348 = smul.addr %s347, 8
      %s349 = scalar_lea.vmem %s10, %s348
      %p350 = scmp.lt.s32.totalorder %s21, 1
      %s351 = scalar_select %p350, %s21, 1
      %s352 = smul.addr %s351, 54
      %s353 = smul.addr %s352, 8
      %s354 = scalar_lea.vmem %s0, %s353
      %p355 = scmp.lt.s32.totalorder %s21, 1
      %s356 = scalar_select %p355, %s21, 1
      %s357 = smul.addr %s356, 32
      %s358 = smul.addr %s357, 8
      %s359 = scalar_lea.vmem %s10, %s358
      %v360 = vld [vmem:[%s354] sm:$0xff]
      %v361 = vld [vmem:[%s354 + $0x8] sm:$0xff]
      %v362 = vld [vmem:[%s354 + $0x10] sm:$0x3]
      %v363 = vld [vmem:[%s354 + $0x18] sm:$0xff]
      %v364 = vld [vmem:[%s354 + $0x20] sm:$0xff]
      %v365 = vld [vmem:[%s354 + $0x28] sm:$0x3]
      %v366 = vld [vmem:[%s354 + $0x30] sm:$0xff]
      %v367 = vld [vmem:[%s354 + $0x38] sm:$0xff]
      %v368 = vld [vmem:[%s354 + $0x40] sm:$0x3]
      %v369 = vld [vmem:[%s354 + $0x48] sm:$0xff]
      %v370 = vld [vmem:[%s354 + $0x50] sm:$0xff]
      %v371 = vld [vmem:[%s354 + $0x58] sm:$0x3]
      %v372 = vld [vmem:[%s354 + $0x60] sm:$0xff]
      %v373 = vld [vmem:[%s354 + $0x68] sm:$0xff]
      %v374 = vld [vmem:[%s354 + $0x70] sm:$0x3]
      %v375 = vld [vmem:[%s354 + $0x78] sm:$0xff]
      %v376 = vld [vmem:[%s354 + $0x80] sm:$0xff]
      %v377 = vld [vmem:[%s354 + $0x88] sm:$0x3]
      %v378 = vld [vmem:[%s354 + $0x90] sm:$0xff]
      %v379 = vld [vmem:[%s354 + $0x98] sm:$0xff]
      %v380 = vld [vmem:[%s354 + $0xa0] sm:$0x3]
      %v381 = vld [vmem:[%s354 + $0xa8] sm:$0xff]
      %v382 = vld [vmem:[%s354 + $0xb0] sm:$0xff]
      %v383 = vld [vmem:[%s354 + $0xb8] sm:$0x3]
      %v384 = vld [vmem:[%s354 + $0xc0] sm:$0xff]
      %v385 = vld [vmem:[%s354 + $0xc8] sm:$0xff]
      %v386 = vld [vmem:[%s354 + $0xd0] sm:$0x3]
      %v387 = vld [vmem:[%s354 + $0xd8] sm:$0xff]
      %v388 = vld [vmem:[%s354 + $0xe0] sm:$0xff]
      %v389 = vld [vmem:[%s354 + $0xe8] sm:$0x3]
      %v390 = vld [vmem:[%s354 + $0xf0] sm:$0xff]
      %v391 = vld [vmem:[%s354 + $0xf8] sm:$0xff]
      %v392 = vld [vmem:[%s354 + $0x100] sm:$0x3]
      %v393 = vld [vmem:[%s354 + $0x108] sm:$0xff]
      %v394 = vld [vmem:[%s354 + $0x110] sm:$0xff]
      %v395 = vld [vmem:[%s354 + $0x118] sm:$0x3]
      %v396 = vld [vmem:[%s354 + $0x120] sm:$0xff]
      %v397 = vld [vmem:[%s354 + $0x128] sm:$0xff]
      %v398 = vld [vmem:[%s354 + $0x130] sm:$0x3]
      %v399 = vld [vmem:[%s354 + $0x138] sm:$0xff]
      %v400 = vld [vmem:[%s354 + $0x140] sm:$0xff]
      %v401 = vld [vmem:[%s354 + $0x148] sm:$0x3]
      %v402 = vld [vmem:[%s354 + $0x150] sm:$0xff]
      %v403 = vld [vmem:[%s354 + $0x158] sm:$0xff]
      %v404 = vld [vmem:[%s354 + $0x160] sm:$0x3]
      %v405 = vld [vmem:[%s354 + $0x168] sm:$0xff]
      %v406 = vld [vmem:[%s354 + $0x170] sm:$0xff]
      %v407 = vld [vmem:[%s354 + $0x178] sm:$0x3]
      %v408 = vld [vmem:[%s354 + $0x180] sm:$0xff]
      %v409 = vld [vmem:[%s354 + $0x188] sm:$0xff]
      %v410 = vld [vmem:[%s354 + $0x190] sm:$0x3]
      %v411 = vld [vmem:[%s354 + $0x198] sm:$0xff]
      %v412 = vld [vmem:[%s354 + $0x1a0] sm:$0xff]
      %v413 = vld [vmem:[%s354 + $0x1a8] sm:$0x3]
      %vm462 = vcmask 1046528
      %v463 = vrot.slane %v360, 1
      %v464 = vrot.slane %v361, 1
      %v465 = vsel %vm462, %v463, %v464
      %v466 = vrot.slane %v362, 1
      %v467 = vsel %vm462, %v464, %v466
      %v468 = vrot.slane %v363, 1
      %v469 = vrot.slane %v364, 1
      %v470 = vsel %vm462, %v468, %v469
      %v471 = vrot.slane %v365, 1
      %v472 = vsel %vm462, %v469, %v471
      %v473 = vrot.slane %v366, 1
      %v474 = vrot.slane %v367, 1
      %v475 = vsel %vm462, %v473, %v474
      %v476 = vrot.slane %v368, 1
      %v477 = vsel %vm462, %v474, %v476
      %v478 = vrot.slane %v369, 1
      %v479 = vrot.slane %v370, 1
      %v480 = vsel %vm462, %v478, %v479
      %v481 = vrot.slane %v371, 1
      %v482 = vsel %vm462, %v479, %v481
      %v483 = vrot.slane %v372, 1
      %v484 = vrot.slane %v373, 1
      %v485 = vsel %vm462, %v483, %v484
      %v486 = vrot.slane %v374, 1
      %v487 = vsel %vm462, %v484, %v486
      %v488 = vrot.slane %v375, 1
      %v489 = vrot.slane %v376, 1
      %v490 = vsel %vm462, %v488, %v489
      %v491 = vrot.slane %v377, 1
      %v492 = vsel %vm462, %v489, %v491
      %v493 = vrot.slane %v378, 1
      %v494 = vrot.slane %v379, 1
      %v495 = vsel %vm462, %v493, %v494
      %v496 = vrot.slane %v380, 1
      %v497 = vsel %vm462, %v494, %v496
      %v498 = vrot.slane %v381, 1
      %v499 = vrot.slane %v382, 1
      %v500 = vsel %vm462, %v498, %v499
      %v501 = vrot.slane %v383, 1
      %v502 = vsel %vm462, %v499, %v501
      %v503 = vrot.slane %v384, 1
      %v504 = vrot.slane %v385, 1
      %v505 = vsel %vm462, %v503, %v504
      %v506 = vrot.slane %v386, 1
      %v507 = vsel %vm462, %v504, %v506
      %v508 = vrot.slane %v387, 1
      %v509 = vrot.slane %v388, 1
      %v510 = vsel %vm462, %v508, %v509
      %v511 = vrot.slane %v389, 1
      %v512 = vsel %vm462, %v509, %v511
      %v513 = vrot.slane %v390, 1
      %v514 = vrot.slane %v391, 1
      %v515 = vsel %vm462, %v513, %v514
      %v516 = vrot.slane %v392, 1
      %v517 = vsel %vm462, %v514, %v516
      %v518 = vrot.slane %v393, 1
      %v519 = vrot.slane %v394, 1
      %v520 = vsel %vm462, %v518, %v519
      %v521 = vrot.slane %v395, 1
      %v522 = vsel %vm462, %v519, %v521
      %v523 = vrot.slane %v396, 1
      %v524 = vrot.slane %v397, 1
      %v525 = vsel %vm462, %v523, %v524
      %v526 = vrot.slane %v398, 1
      %v527 = vsel %vm462, %v524, %v526
      %v528 = vrot.slane %v399, 1
      %v529 = vrot.slane %v400, 1
      %v530 = vsel %vm462, %v528, %v529
      %v531 = vrot.slane %v401, 1
      %v532 = vsel %vm462, %v529, %v531
      %v533 = vrot.slane %v402, 1
      %v534 = vrot.slane %v403, 1
      %v535 = vsel %vm462, %v533, %v534
      %v536 = vrot.slane %v404, 1
      %v537 = vsel %vm462, %v534, %v536
      %v538 = vrot.slane %v405, 1
      %v539 = vrot.slane %v406, 1
      %v540 = vsel %vm462, %v538, %v539
      %v541 = vrot.slane %v407, 1
      %v542 = vsel %vm462, %v539, %v541
      %vm575 = vcmask 1045504
      %v576 = vrot.slane %v360, 2
      %v577 = vrot.slane %v361, 2
      %v578 = vsel %vm575, %v576, %v577
      %v579 = vrot.slane %v362, 2
      %v580 = vsel %vm575, %v577, %v579
      %v581 = vrot.slane %v363, 2
      %v582 = vrot.slane %v364, 2
      %v583 = vsel %vm575, %v581, %v582
      %v584 = vrot.slane %v365, 2
      %v585 = vsel %vm575, %v582, %v584
      %v586 = vrot.slane %v366, 2
      %v587 = vrot.slane %v367, 2
      %v588 = vsel %vm575, %v586, %v587
      %v589 = vrot.slane %v368, 2
      %v590 = vsel %vm575, %v587, %v589
      %v591 = vrot.slane %v369, 2
      %v592 = vrot.slane %v370, 2
      %v593 = vsel %vm575, %v591, %v592
      %v594 = vrot.slane %v371, 2
      %v595 = vsel %vm575, %v592, %v594
      %v596 = vrot.slane %v372, 2
      %v597 = vrot.slane %v373, 2
      %v598 = vsel %vm575, %v596, %v597
      %v599 = vrot.slane %v374, 2
      %v600 = vsel %vm575, %v597, %v599
      %v601 = vrot.slane %v375, 2
      %v602 = vrot.slane %v376, 2
      %v603 = vsel %vm575, %v601, %v602
      %v604 = vrot.slane %v377, 2
      %v605 = vsel %vm575, %v602, %v604
      %v606 = vrot.slane %v378, 2
      %v607 = vrot.slane %v379, 2
      %v608 = vsel %vm575, %v606, %v607
      %v609 = vrot.slane %v380, 2
      %v610 = vsel %vm575, %v607, %v609
      %v611 = vrot.slane %v381, 2
      %v612 = vrot.slane %v382, 2
      %v613 = vsel %vm575, %v611, %v612
      %v614 = vrot.slane %v383, 2
      %v615 = vsel %vm575, %v612, %v614
      %v616 = vrot.slane %v384, 2
      %v617 = vrot.slane %v385, 2
      %v618 = vsel %vm575, %v616, %v617
      %v619 = vrot.slane %v386, 2
      %v620 = vsel %vm575, %v617, %v619
      %v621 = vrot.slane %v387, 2
      %v622 = vrot.slane %v388, 2
      %v623 = vsel %vm575, %v621, %v622
      %v624 = vrot.slane %v389, 2
      %v625 = vsel %vm575, %v622, %v624
      %v626 = vrot.slane %v390, 2
      %v627 = vrot.slane %v391, 2
      %v628 = vsel %vm575, %v626, %v627
      %v629 = vrot.slane %v392, 2
      %v630 = vsel %vm575, %v627, %v629
      %v631 = vrot.slane %v393, 2
      %v632 = vrot.slane %v394, 2
      %v633 = vsel %vm575, %v631, %v632
      %v634 = vrot.slane %v395, 2
      %v635 = vsel %vm575, %v632, %v634
      %v636 = vrot.slane %v396, 2
      %v637 = vrot.slane %v397, 2
      %v638 = vsel %vm575, %v636, %v637
      %v639 = vrot.slane %v398, 2
      %v640 = vsel %vm575, %v637, %v639
      %v641 = vrot.slane %v399, 2
      %v642 = vrot.slane %v400, 2
      %v643 = vsel %vm575, %v641, %v642
      %v644 = vrot.slane %v401, 2
      %v645 = vsel %vm575, %v642, %v644
      %v646 = vrot.slane %v402, 2
      %v647 = vrot.slane %v403, 2
      %v648 = vsel %vm575, %v646, %v647
      %v649 = vrot.slane %v404, 2
      %v650 = vsel %vm575, %v647, %v649
      %v651 = vrot.slane %v405, 2
      %v652 = vrot.slane %v406, 2
      %v653 = vsel %vm575, %v651, %v652
      %v654 = vrot.slane %v407, 2
      %v655 = vsel %vm575, %v652, %v654
      %v691 = vrot.slane %v408, 1
      %v692 = vrot.slane %v409, 1
      %v693 = vsel %vm462, %v691, %v692
      %v694 = vrot.slane %v410, 1
      %v695 = vsel %vm462, %v692, %v694
      %v698 = vrot.slane %v408, 2
      %v699 = vrot.slane %v409, 2
      %v700 = vsel %vm575, %v698, %v699
      %v701 = vrot.slane %v410, 2
      %v702 = vsel %vm575, %v699, %v701
      %v708 = vrot.slane %v411, 1
      %v709 = vrot.slane %v412, 1
      %v710 = vsel %vm462, %v708, %v709
      %v711 = vrot.slane %v413, 1
      %v712 = vsel %vm462, %v709, %v711
      %v715 = vrot.slane %v411, 2
      %v716 = vrot.slane %v412, 2
      %v717 = vsel %vm575, %v715, %v716
      %v718 = vrot.slane %v413, 2
      %v719 = vsel %vm575, %v716, %v718
      %v722 = vld [vmem:[%s7] sm:$0xff]
      %v723 = vld [vmem:[%s7 + $0x8] sm:$0xff]
      %v724 = vld [vmem:[%s7 + $0x10] sm:$0xff]
      %v725 = vld [vmem:[%s7 + $0x18] sm:$0xff]
      %v726 = vld [vmem:[%s7 + $0x20] sm:$0xff]
      %v727 = vld [vmem:[%s7 + $0x28] sm:$0xff]
      %v728 = vld [vmem:[%s7 + $0x30] sm:$0xff]
      %v729 = vld [vmem:[%s7 + $0x38] sm:$0xff]
      %v730 = vld [vmem:[%s7 + $0x40] sm:$0xff]
      %v731 = vld [vmem:[%s7 + $0x48] sm:$0xff]
      %v732 = vld [vmem:[%s7 + $0x50] sm:$0xff]
      %v733 = vld [vmem:[%s7 + $0x58] sm:$0xff]
      %v734 = vld [vmem:[%s7 + $0x60] sm:$0xff]
      %v735 = vld [vmem:[%s7 + $0x68] sm:$0xff]
      %v736 = vld [vmem:[%s7 + $0x70] sm:$0xff]
      %v737 = vld [vmem:[%s7 + $0x78] sm:$0xff]
      %v738 = vld [vmem:[%s7 + $0x80] sm:$0xff]
      %v739 = vld [vmem:[%s7 + $0x88] sm:$0xff]
      %v740 = vld [vmem:[%s7 + $0x90] sm:$0xff]
      %v741 = vld [vmem:[%s7 + $0x98] sm:$0xff]
      %v742 = vld [vmem:[%s7 + $0xa0] sm:$0xff]
      %v743 = vld [vmem:[%s7 + $0xa8] sm:$0xff]
      %v744 = vld [vmem:[%s7 + $0xb0] sm:$0xff]
      %v745 = vld [vmem:[%s7 + $0xb8] sm:$0xff]
      %v746 = vld [vmem:[%s7 + $0xc0] sm:$0xff]
      %v747 = vld [vmem:[%s7 + $0xc8] sm:$0xff]
      %v748 = vld [vmem:[%s7 + $0xd0] sm:$0xff]
      %v749 = vld [vmem:[%s7 + $0xd8] sm:$0xff]
      %v750 = vld [vmem:[%s7 + $0xe0] sm:$0xff]
      %v751 = vld [vmem:[%s7 + $0xe8] sm:$0xff]
      %v752 = vld [vmem:[%s7 + $0xf0] sm:$0xff]
      %v753 = vld [vmem:[%s7 + $0xf8] sm:$0xff]
      %v754 = vld [vmem:[%s7 + $0x100] sm:$0xff]
      %v755 = vld [vmem:[%s7 + $0x108] sm:$0xff]
      %v756 = vld [vmem:[%s7 + $0x110] sm:$0xff]
      %v757 = vld [vmem:[%s7 + $0x118] sm:$0xff]
      %v758 = vld [vmem:[%s7 + $0x120] sm:$0xff]
      %v759 = vld [vmem:[%s7 + $0x128] sm:$0xff]
      %v760 = vld [vmem:[%s7 + $0x130] sm:$0xff]
      %v761 = vld [vmem:[%s7 + $0x138] sm:$0xff]
      %v762 = vld [vmem:[%s7 + $0x140] sm:$0xff]
      %v763 = vld [vmem:[%s7 + $0x148] sm:$0xff]
      %v764 = vld [vmem:[%s7 + $0x150] sm:$0xff]
      %v765 = vld [vmem:[%s7 + $0x158] sm:$0xff]
      %v766 = vld [vmem:[%s7 + $0x160] sm:$0xff]
      %v767 = vld [vmem:[%s7 + $0x168] sm:$0xff]
      %v768 = vld [vmem:[%s7 + $0x170] sm:$0xff]
      %v769 = vld [vmem:[%s7 + $0x178] sm:$0xff]
      %v770 = vld [vmem:[%s7 + $0x180] sm:$0xff]
      %v771 = vld [vmem:[%s7 + $0x188] sm:$0xff]
      %v772 = vld [vmem:[%s7 + $0x190] sm:$0xff]
      %v773 = vld [vmem:[%s7 + $0x198] sm:$0xff]
      %v774 = vld [vmem:[%s7 + $0x1a0] sm:$0xff]
      %v775 = vld [vmem:[%s7 + $0x1a8] sm:$0xff]
      %v776 = vld [vmem:[%s7 + $0x1b0] sm:$0xff]
      %v777 = vld [vmem:[%s7 + $0x1b8] sm:$0xff]
      %v778 = vld [vmem:[%s7 + $0x1c0] sm:$0xff]
      %v779 = vld [vmem:[%s7 + $0x1c8] sm:$0xff]
      %v780 = vld [vmem:[%s7 + $0x1d0] sm:$0xff]
      %v781 = vld [vmem:[%s7 + $0x1d8] sm:$0xff]
      %v782 = vld [vmem:[%s7 + $0x1e0] sm:$0xff]
      %v783 = vld [vmem:[%s7 + $0x1e8] sm:$0xff]
      %v784 = vld [vmem:[%s7 + $0x1f0] sm:$0xff]
      %v785 = vld [vmem:[%s7 + $0x1f8] sm:$0xff]
      %v786 = vld [vmem:[%s7 + $0x200] sm:$0xff]
      %v787 = vld [vmem:[%s7 + $0x208] sm:$0xff]
      %v788 = vld [vmem:[%s7 + $0x210] sm:$0xff]
      %v789 = vld [vmem:[%s7 + $0x218] sm:$0xff]
      %v790 = vld [vmem:[%s7 + $0x220] sm:$0xff]
      %v791 = vld [vmem:[%s7 + $0x228] sm:$0xff]
      %v792 = vld [vmem:[%s7 + $0x230] sm:$0xff]
      %v793 = vld [vmem:[%s7 + $0x238] sm:$0xff]
      %v794 = vld [vmem:[%s7 + $0x240] sm:$0xff]
      %v795 = vld [vmem:[%s7 + $0x248] sm:$0xff]
      %v796 = vld [vmem:[%s7 + $0x250] sm:$0xff]
      %v797 = vld [vmem:[%s7 + $0x258] sm:$0xff]
      %v798 = vld [vmem:[%s7 + $0x260] sm:$0xff]
      %v799 = vld [vmem:[%s7 + $0x268] sm:$0xff]
      %v800 = vld [vmem:[%s7 + $0x270] sm:$0xff]
      %v801 = vld [vmem:[%s7 + $0x278] sm:$0xff]
      %v802 = vld [vmem:[%s7 + $0x280] sm:$0xff]
      %v803 = vld [vmem:[%s7 + $0x288] sm:$0xff]
      %v804 = vld [vmem:[%s7 + $0x290] sm:$0xff]
      %v805 = vld [vmem:[%s7 + $0x298] sm:$0xff]
      %v806 = vld [vmem:[%s7 + $0x2a0] sm:$0xff]
      %v807 = vld [vmem:[%s7 + $0x2a8] sm:$0xff]
      %v808 = vld [vmem:[%s7 + $0x2b0] sm:$0xff]
      %v809 = vld [vmem:[%s7 + $0x2b8] sm:$0xff]
      %v810 = vld [vmem:[%s7 + $0x2c0] sm:$0xff]
      %v811 = vld [vmem:[%s7 + $0x2c8] sm:$0xff]
      %v812 = vld [vmem:[%s7 + $0x2d0] sm:$0xff]
      %v813 = vld [vmem:[%s7 + $0x2d8] sm:$0xff]
      %v814 = vld [vmem:[%s7 + $0x2e0] sm:$0xff]
      %v815 = vld [vmem:[%s7 + $0x2e8] sm:$0xff]
      %v816 = vld [vmem:[%s7 + $0x2f0] sm:$0xff]
      %v817 = vld [vmem:[%s7 + $0x2f8] sm:$0xff]
      %v818 = vld [vmem:[%s7 + $0x300] sm:$0xff]
      %v819 = vld [vmem:[%s7 + $0x308] sm:$0xff]
      %v820 = vld [vmem:[%s7 + $0x310] sm:$0xff]
      %v821 = vld [vmem:[%s7 + $0x318] sm:$0xff]
      %v822 = vld [vmem:[%s7 + $0x320] sm:$0xff]
      %v823 = vld [vmem:[%s7 + $0x328] sm:$0xff]
      %v824 = vld [vmem:[%s7 + $0x330] sm:$0xff]
      %v825 = vld [vmem:[%s7 + $0x338] sm:$0xff]
      %v826 = vld [vmem:[%s7 + $0x340] sm:$0xff]
      %v827 = vld [vmem:[%s7 + $0x348] sm:$0xff]
      %v828 = vld [vmem:[%s7 + $0x350] sm:$0xff]
      %v829 = vld [vmem:[%s7 + $0x358] sm:$0xff]
      %v830 = vld [vmem:[%s7 + $0x360] sm:$0xff]
      %v831 = vld [vmem:[%s7 + $0x368] sm:$0xff]
      %v832 = vld [vmem:[%s7 + $0x370] sm:$0xff]
      %v833 = vld [vmem:[%s7 + $0x378] sm:$0xff]
      %v834 = vld [vmem:[%s7 + $0x380] sm:$0xff]
      %v835 = vld [vmem:[%s7 + $0x388] sm:$0xff]
      %v836 = vld [vmem:[%s7 + $0x390] sm:$0xff]
      %v837 = vld [vmem:[%s7 + $0x398] sm:$0xff]
      %v838 = vld [vmem:[%s7 + $0x3a0] sm:$0xff]
      %v839 = vld [vmem:[%s7 + $0x3a8] sm:$0xff]
      %v840 = vld [vmem:[%s7 + $0x3b0] sm:$0xff]
      %v841 = vld [vmem:[%s7 + $0x3b8] sm:$0xff]
      %v842 = vld [vmem:[%s7 + $0x3c0] sm:$0xff]
      %v843 = vld [vmem:[%s7 + $0x3c8] sm:$0xff]
      %v844 = vld [vmem:[%s7 + $0x3d0] sm:$0xff]
      %v845 = vld [vmem:[%s7 + $0x3d8] sm:$0xff]
      %v846 = vld [vmem:[%s7 + $0x3e0] sm:$0xff]
      %v847 = vld [vmem:[%s7 + $0x3e8] sm:$0xff]
      %v848 = vld [vmem:[%s7 + $0x3f0] sm:$0xff]
      %v849 = vld [vmem:[%s7 + $0x3f8] sm:$0xff]
      %v850 = vld [vmem:[%s7 + $0x400] sm:$0xff]
      %v851 = vld [vmem:[%s7 + $0x408] sm:$0xff]
      %v852 = vld [vmem:[%s7 + $0x410] sm:$0xff]
      %v853 = vld [vmem:[%s7 + $0x418] sm:$0xff]
      %v854 = vld [vmem:[%s7 + $0x420] sm:$0xff]
      %v855 = vld [vmem:[%s7 + $0x428] sm:$0xff]
      %v856 = vld [vmem:[%s7 + $0x430] sm:$0xff]
      %v857 = vld [vmem:[%s7 + $0x438] sm:$0xff]
      %v858 = vld [vmem:[%s7 + $0x440] sm:$0xff]
      %v859 = vld [vmem:[%s7 + $0x448] sm:$0xff]
      %v860 = vld [vmem:[%s7 + $0x450] sm:$0xff]
      %v861 = vld [vmem:[%s7 + $0x458] sm:$0xff]
      %v862 = vld [vmem:[%s7 + $0x460] sm:$0xff]
      %v863 = vld [vmem:[%s7 + $0x468] sm:$0xff]
      %v864 = vld [vmem:[%s7 + $0x470] sm:$0xff]
      %v865 = vld [vmem:[%s7 + $0x478] sm:$0xff]
      %866 = vmatprep.subr.mxu0 0.0
      %867 = vmatpush1.msra.mxu0 %v722
      %868 = vmatprep.subr.mxu0 0.0
      %869 = vmatpush1.msra.mxu0 %v723
      %870 = vmatprep.subr.mxu0 0.0
      %871 = vmatpush1.msra.mxu0 %v724
      %872 = vmatprep.subr.mxu0 0.0
      %873 = vmatpush1.msra.mxu0 %v725
      %874 = vmatprep.subr.mxu0 0.0
      %875 = vmatpush1.msra.mxu0 %v726
      %876 = vmatprep.subr.mxu0 0.0
      %877 = vmatpush1.msra.mxu0 %v727
      %878 = vmatprep.subr.mxu0 0.0
      %879 = vmatpush1.msra.mxu0 %v728
      %880 = vmatprep.subr.mxu0 0.0
      %881 = vmatpush1.msra.mxu0 %v729
      %882 = vmatprep.subr.mxu0 0.0
      %883 = vmatpush1.msra.mxu0 %v730
      %884 = vmatprep.subr.mxu0 0.0
      %885 = vmatpush1.msra.mxu0 %v731
      %886 = vmatprep.subr.mxu0 0.0
      %887 = vmatpush1.msra.mxu0 %v732
      %888 = vmatprep.subr.mxu0 0.0
      %889 = vmatpush1.msra.mxu0 %v733
      %890 = vmatprep.subr.mxu0 0.0
      %891 = vmatpush1.msra.mxu0 %v734
      %892 = vmatprep.subr.mxu0 0.0
      %893 = vmatpush1.msra.mxu0 %v735
      %894 = vmatprep.subr.mxu0 0.0
      %895 = vmatpush1.msra.mxu0 %v736
      %896 = vmatprep.subr.mxu0 0.0
      %897 = vmatpush1.msra.mxu0 %v737
      %898 = vmatprep.subr.mxu0 0.0
      %899 = vmatpush1.msra.mxu0 %v738
      %900 = vmatprep.subr.mxu0 0.0
      %901 = vmatpush1.msra.mxu0 %v739
      %902 = vmatprep.subr.mxu0 0.0
      %903 = vmatpush1.msra.mxu0 %v740
      %904 = vmatprep.subr.mxu0 0.0
      %905 = vmatpush1.msra.mxu0 %v741
      %906 = vmatprep.subr.mxu0 0.0
      %907 = vmatpush1.msra.mxu0 %v742
      %908 = vmatprep.subr.mxu0 0.0
      %909 = vmatpush1.msra.mxu0 %v743
      %910 = vmatprep.subr.mxu0 0.0
      %911 = vmatpush1.msra.mxu0 %v744
      %912 = vmatprep.subr.mxu0 0.0
      %913 = vmatpush1.msra.mxu0 %v745
      %914 = vmatprep.subr.mxu0 0.0
      %915 = vmatpush1.msra.mxu0 %v746
      %916 = vmatprep.subr.mxu0 0.0
      %917 = vmatpush1.msra.mxu0 %v747
      %918 = vmatprep.subr.mxu0 0.0
      %919 = vmatpush1.msra.mxu0 %v748
      %920 = vmatprep.subr.mxu0 0.0
      %921 = vmatpush1.msra.mxu0 %v749
      %922 = vmatprep.subr.mxu0 0.0
      %923 = vmatpush1.msra.mxu0 %v750
      %924 = vmatprep.subr.mxu0 0.0
      %925 = vmatpush1.msra.mxu0 %v751
      %926 = vmatprep.subr.mxu0 0.0
      %927 = vmatpush1.msra.mxu0 %v752
      %928 = vmatprep.subr.mxu0 0.0
      %929 = vmatpush1.msra.mxu0 %v753
      %930 = vmatprep.mubr.f32.mxu0 %v465
      %931 = vmatmul.mubr.f32.gmra.mrb[0].mxu0 %v360
      %v932 = vpop.f32.mrb[0].mxu0
      %v933 = vadd.f32 0.0, %v932
      %v934 = vpop.f32.mrb[0].mxu0
      %935 = vmatprep.mubr.f32.mxu0 %v467
      %936 = vmatmul.mubr.f32.gmra.mrb[0].mxu0 %v361
      %v937 = vpop.f32.mrb[0].mxu0
      %v938 = vadd.f32 0.0, %v937
      %v939 = vpop.f32.mrb[0].mxu0
      %940 = vmatprep.mubr.f32.mxu0 %v470
      %941 = vmatmul.mubr.f32.gmra.mrb[0].mxu0 %v363
      %v942 = vpop.f32.mrb[0].mxu0
      %v943 = vadd.f32 0.0, %v942
      %v944 = vpop.f32.mrb[0].mxu0
      %945 = vmatprep.mubr.f32.mxu0 %v472
      %946 = vmatmul.mubr.f32.gmra.mrb[0].mxu0 %v364
      %v947 = vpop.f32.mrb[0].mxu0
      %v948 = vadd.f32 0.0, %v947
      %v949 = vpop.f32.mrb[0].mxu0
      %950 = vmatprep.mubr.f32.mxu0 %v475
      %951 = vmatmul.mubr.f32.gmra.mrb[0].mxu0 %v366
      %v952 = vpop.f32.mrb[0].mxu0
      %v953 = vadd.f32 0.0, %v952
      %v954 = vpop.f32.mrb[0].mxu0
      %955 = vmatprep.mubr.f32.mxu0 %v477
      %956 = vmatmul.mubr.f32.gmra.mrb[0].mxu0 %v367
      %v957 = vpop.f32.mrb[0].mxu0
      %v958 = vadd.f32 0.0, %v957
      %v959 = vpop.f32.mrb[0].mxu0
      %960 = vmatprep.mubr.f32.mxu0 %v480
      %961 = vmatmul.mubr.f32.gmra.mrb[0].mxu0 %v369
      %v962 = vpop.f32.mrb[0].mxu0
      %v963 = vadd.f32 0.0, %v962
      %v964 = vpop.f32.mrb[0].mxu0
      %965 = vmatprep.mubr.f32.mxu0 %v482
      %966 = vmatmul.mubr.f32.gmra.mrb[0].mxu0 %v370
      %v967 = vpop.f32.mrb[0].mxu0
      %v968 = vadd.f32 0.0, %v967
      %v969 = vpop.f32.mrb[0].mxu0
      %970 = vmatprep.mubr.f32.mxu0 %v485
      %971 = vmatmul.mubr.f32.gmra.mrb[0].mxu0 %v372
      %v972 = vpop.f32.mrb[0].mxu0
      %v973 = vadd.f32 0.0, %v972
      %v974 = vpop.f32.mrb[0].mxu0
      %975 = vmatprep.mubr.f32.mxu0 %v487
      %976 = vmatmul.mubr.f32.gmra.mrb[0].mxu0 %v373
      %v977 = vpop.f32.mrb[0].mxu0
      %v978 = vadd.f32 0.0, %v977
      %v979 = vpop.f32.mrb[0].mxu0
      %980 = vmatprep.mubr.f32.mxu0 %v490
      %981 = vmatmul.mubr.f32.gmra.mrb[0].mxu0 %v375
      %v982 = vpop.f32.mrb[0].mxu0
      %v983 = vadd.f32 0.0, %v982
      %v984 = vpop.f32.mrb[0].mxu0
      %985 = vmatprep.mubr.f32.mxu0 %v492
      %986 = vmatmul.mubr.f32.gmra.mrb[0].mxu0 %v376
      %v987 = vpop.f32.mrb[0].mxu0
      %v988 = vadd.f32 0.0, %v987
      %v989 = vpop.f32.mrb[0].mxu0
      %990 = vmatprep.mubr.f32.mxu0 %v495
      %991 = vmatmul.mubr.f32.gmra.mrb[0].mxu0 %v378
      %v992 = vpop.f32.mrb[0].mxu0
      %v993 = vadd.f32 0.0, %v992
      %v994 = vpop.f32.mrb[0].mxu0
      %995 = vmatprep.mubr.f32.mxu0 %v497
      %996 = vmatmul.mubr.f32.gmra.mrb[0].mxu0 %v379
      %v997 = vpop.f32.mrb[0].mxu0
      %v998 = vadd.f32 0.0, %v997
      %v999 = vpop.f32.mrb[0].mxu0
      %1000 = vmatprep.mubr.f32.mxu0 %v500
      %1001 = vmatmul.mubr.f32.gmra.mrb[0].mxu0 %v381
      %v1002 = vpop.f32.mrb[0].mxu0
      %v1003 = vadd.f32 0.0, %v1002
      %v1004 = vpop.f32.mrb[0].mxu0
      %1005 = vmatprep.mubr.f32.mxu0 %v502
      %1006 = vmatmul.mubr.f32.gmra.mrb[0].mxu0 %v382
      %v1007 = vpop.f32.mrb[0].mxu0
      %v1008 = vadd.f32 0.0, %v1007
      %v1009 = vpop.f32.mrb[0].mxu0
      %1010 = vmatprep.mubr.f32.mxu0 %v505
      %1011 = vmatmul.mubr.f32.gmra.mrb[0].mxu0 %v384
      %v1012 = vpop.f32.mrb[0].mxu0
      %v1013 = vadd.f32 0.0, %v1012
      %v1014 = vpop.f32.mrb[0].mxu0
      %1015 = vmatprep.mubr.f32.mxu0 %v507
      %1016 = vmatmul.mubr.f32.gmra.mrb[0].mxu0 %v385
      %v1017 = vpop.f32.mrb[0].mxu0
      %v1018 = vadd.f32 0.0, %v1017
      %v1019 = vpop.f32.mrb[0].mxu0
      %1020 = vmatprep.mubr.f32.mxu0 %v510
      %1021 = vmatmul.mubr.f32.gmra.mrb[0].mxu0 %v387
      %v1022 = vpop.f32.mrb[0].mxu0
      %v1023 = vadd.f32 0.0, %v1022
      %v1024 = vpop.f32.mrb[0].mxu0
      %1025 = vmatprep.mubr.f32.mxu0 %v512
      %1026 = vmatmul.mubr.f32.gmra.mrb[0].mxu0 %v388
      %v1027 = vpop.f32.mrb[0].mxu0
      %v1028 = vadd.f32 0.0, %v1027
      %v1029 = vpop.f32.mrb[0].mxu0
      %1030 = vmatprep.mubr.f32.mxu0 %v515
      %1031 = vmatmul.mubr.f32.gmra.mrb[0].mxu0 %v390
      %v1032 = vpop.f32.mrb[0].mxu0
      %v1033 = vadd.f32 0.0, %v1032
      %v1034 = vpop.f32.mrb[0].mxu0
      %1035 = vmatprep.mubr.f32.mxu0 %v517
      %1036 = vmatmul.mubr.f32.gmra.mrb[0].mxu0 %v391
      %v1037 = vpop.f32.mrb[0].mxu0
      %v1038 = vadd.f32 0.0, %v1037
      %v1039 = vpop.f32.mrb[0].mxu0
      %1040 = vmatprep.mubr.f32.mxu0 %v520
      %1041 = vmatmul.mubr.f32.gmra.mrb[0].mxu0 %v393
      %v1042 = vpop.f32.mrb[0].mxu0
      %v1043 = vadd.f32 0.0, %v1042
      %v1044 = vpop.f32.mrb[0].mxu0
      %1045 = vmatprep.mubr.f32.mxu0 %v522
      %1046 = vmatmul.mubr.f32.gmra.mrb[0].mxu0 %v394
      %v1047 = vpop.f32.mrb[0].mxu0
      %v1048 = vadd.f32 0.0, %v1047
      %v1049 = vpop.f32.mrb[0].mxu0
      %1050 = vmatprep.mubr.f32.mxu0 %v525
      %1051 = vmatmul.mubr.f32.gmra.mrb[0].mxu0 %v396
      %v1052 = vpop.f32.mrb[0].mxu0
      %v1053 = vadd.f32 0.0, %v1052
      %v1054 = vpop.f32.mrb[0].mxu0
      %1055 = vmatprep.mubr.f32.mxu0 %v527
      %1056 = vmatmul.mubr.f32.gmra.mrb[0].mxu0 %v397
      %v1057 = vpop.f32.mrb[0].mxu0
      %v1058 = vadd.f32 0.0, %v1057
      %v1059 = vpop.f32.mrb[0].mxu0
      %1060 = vmatprep.mubr.f32.mxu0 %v530
      %1061 = vmatmul.mubr.f32.gmra.mrb[0].mxu0 %v399
      %v1062 = vpop.f32.mrb[0].mxu0
      %v1063 = vadd.f32 0.0, %v1062
      %v1064 = vpop.f32.mrb[0].mxu0
      %1065 = vmatprep.mubr.f32.mxu0 %v532
      %1066 = vmatmul.mubr.f32.gmra.mrb[0].mxu0 %v400
      %v1067 = vpop.f32.mrb[0].mxu0
      %v1068 = vadd.f32 0.0, %v1067
      %v1069 = vpop.f32.mrb[0].mxu0
      %1070 = vmatprep.mubr.f32.mxu0 %v535
      %1071 = vmatmul.mubr.f32.gmra.mrb[0].mxu0 %v402
      %v1072 = vpop.f32.mrb[0].mxu0
      %v1073 = vadd.f32 0.0, %v1072
      %v1074 = vpop.f32.mrb[0].mxu0
      %1075 = vmatprep.mubr.f32.mxu0 %v537
      %1076 = vmatmul.mubr.f32.gmra.mrb[0].mxu0 %v403
      %v1077 = vpop.f32.mrb[0].mxu0
      %v1078 = vadd.f32 0.0, %v1077
      %v1079 = vpop.f32.mrb[0].mxu0
      %1080 = vmatprep.mubr.f32.mxu0 %v540
      %1081 = vmatmul.mubr.f32.gmra.mrb[0].mxu0 %v405
      %v1082 = vpop.f32.mrb[0].mxu0
      %v1083 = vadd.f32 0.0, %v1082
      %v1084 = vpop.f32.mrb[0].mxu0
      %1085 = vmatprep.mubr.f32.mxu0 %v542
      %1086 = vmatmul.mubr.f32.gmra.mrb[0].mxu0 %v406
      %v1087 = vpop.f32.mrb[0].mxu0
      %v1088 = vadd.f32 0.0, %v1087
      %v1089 = vpop.f32.mrb[0].mxu0
      %1090 = vdwg.mxu0
      %1091 = vmatprep.subr.mxu0 0.0
      %1092 = vmatpush1.msra.mxu0 %v754
      %1093 = vmatprep.subr.mxu0 0.0
      %1094 = vmatpush1.msra.mxu0 %v755
      %1095 = vmatprep.subr.mxu0 0.0
      %1096 = vmatpush1.msra.mxu0 %v756
      %1097 = vmatprep.subr.mxu0 0.0
      %1098 = vmatpush1.msra.mxu0 %v757
      %1099 = vmatprep.subr.mxu0 0.0
      %1100 = vmatpush1.msra.mxu0 %v758
      %1101 = vmatprep.subr.mxu0 0.0
      %1102 = vmatpush1.msra.mxu0 %v759
      %1103 = vmatprep.subr.mxu0 0.0
      %1104 = vmatpush1.msra.mxu0 %v760
      %1105 = vmatprep.subr.mxu0 0.0
      %1106 = vmatpush1.msra.mxu0 %v761
      %1107 = vmatprep.subr.mxu0 0.0
      %1108 = vmatpush1.msra.mxu0 %v762
      %1109 = vmatprep.subr.mxu0 0.0
      %1110 = vmatpush1.msra.mxu0 %v763
      %1111 = vmatprep.subr.mxu0 0.0
      %1112 = vmatpush1.msra.mxu0 %v764
      %1113 = vmatprep.subr.mxu0 0.0
      %1114 = vmatpush1.msra.mxu0 %v765
      %1115 = vmatprep.subr.mxu0 0.0
      %1116 = vmatpush1.msra.mxu0 %v766
      %1117 = vmatprep.subr.mxu0 0.0
      %1118 = vmatpush1.msra.mxu0 %v767
      %1119 = vmatprep.subr.mxu0 0.0
      %1120 = vmatpush1.msra.mxu0 %v768
      %1121 = vmatprep.subr.mxu0 0.0
      %1122 = vmatpush1.msra.mxu0 %v769
      %1123 = vmatprep.subr.mxu0 0.0
      %1124 = vmatpush1.msra.mxu0 %v770
      %1125 = vmatprep.subr.mxu0 0.0
      %1126 = vmatpush1.msra.mxu0 %v771
      %1127 = vmatprep.subr.mxu0 0.0
      %1128 = vmatpush1.msra.mxu0 %v772
      %1129 = vmatprep.subr.mxu0 0.0
      %1130 = vmatpush1.msra.mxu0 %v773
      %1131 = vmatprep.subr.mxu0 0.0
      %1132 = vmatpush1.msra.mxu0 %v774
      %1133 = vmatprep.subr.mxu0 0.0
      %1134 = vmatpush1.msra.mxu0 %v775
      %1135 = vmatprep.subr.mxu0 0.0
      %1136 = vmatpush1.msra.mxu0 %v776
      %1137 = vmatprep.subr.mxu0 0.0
      %1138 = vmatpush1.msra.mxu0 %v777
      %1139 = vmatprep.subr.mxu0 0.0
      %1140 = vmatpush1.msra.mxu0 %v778
      %1141 = vmatprep.subr.mxu0 0.0
      %1142 = vmatpush1.msra.mxu0 %v779
      %1143 = vmatprep.subr.mxu0 0.0
      %1144 = vmatpush1.msra.mxu0 %v780
      %1145 = vmatprep.subr.mxu0 0.0
      %1146 = vmatpush1.msra.mxu0 %v781
      %1147 = vmatprep.subr.mxu0 0.0
      %1148 = vmatpush1.msra.mxu0 %v782
      %1149 = vmatprep.subr.mxu0 0.0
      %1150 = vmatpush1.msra.mxu0 %v783
      %1151 = vmatprep.subr.mxu0 0.0
      %1152 = vmatpush1.msra.mxu0 %v784
      %1153 = vmatprep.subr.mxu0 0.0
      %1154 = vmatpush1.msra.mxu0 %v785
      %1155 = vmatprep.mubr.f32.mxu0 %v363
      %1156 = vmatmul.mubr.f32.gmra.mrb[0].mxu0 %v578
      %v1157 = vpop.f32.mrb[0].mxu0
      %v1158 = vadd.f32 %v933, %v1157
      %v1159 = vpop.f32.mrb[0].mxu0
      %1160 = vmatprep.mubr.f32.mxu0 %v364
      %1161 = vmatmul.mubr.f32.gmra.mrb[0].mxu0 %v580
      %v1162 = vpop.f32.mrb[0].mxu0
      %v1163 = vadd.f32 %v938, %v1162
      %v1164 = vpop.f32.mrb[0].mxu0
      %1165 = vmatprep.mubr.f32.mxu0 %v366
      %1166 = vmatmul.mubr.f32.gmra.mrb[0].mxu0 %v583
      %v1167 = vpop.f32.mrb[0].mxu0
      %v1168 = vadd.f32 %v943, %v1167
      %v1169 = vpop.f32.mrb[0].mxu0
      %1170 = vmatprep.mubr.f32.mxu0 %v367
      %1171 = vmatmul.mubr.f32.gmra.mrb[0].mxu0 %v585
      %v1172 = vpop.f32.mrb[0].mxu0
      %v1173 = vadd.f32 %v948, %v1172
      %v1174 = vpop.f32.mrb[0].mxu0
      %1175 = vmatprep.mubr.f32.mxu0 %v369
      %1176 = vmatmul.mubr.f32.gmra.mrb[0].mxu0 %v588
      %v1177 = vpop.f32.mrb[0].mxu0
      %v1178 = vadd.f32 %v953, %v1177
      %v1179 = vpop.f32.mrb[0].mxu0
      %1180 = vmatprep.mubr.f32.mxu0 %v370
      %1181 = vmatmul.mubr.f32.gmra.mrb[0].mxu0 %v590
      %v1182 = vpop.f32.mrb[0].mxu0
      %v1183 = vadd.f32 %v958, %v1182
      %v1184 = vpop.f32.mrb[0].mxu0
      %1185 = vmatprep.mubr.f32.mxu0 %v372
      %1186 = vmatmul.mubr.f32.gmra.mrb[0].mxu0 %v593
      %v1187 = vpop.f32.mrb[0].mxu0
      %v1188 = vadd.f32 %v963, %v1187
      %v1189 = vpop.f32.mrb[0].mxu0
      %1190 = vmatprep.mubr.f32.mxu0 %v373
      %1191 = vmatmul.mubr.f32.gmra.mrb[0].mxu0 %v595
      %v1192 = vpop.f32.mrb[0].mxu0
      %v1193 = vadd.f32 %v968, %v1192
      %v1194 = vpop.f32.mrb[0].mxu0
      %1195 = vmatprep.mubr.f32.mxu0 %v375
      %1196 = vmatmul.mubr.f32.gmra.mrb[0].mxu0 %v598
      %v1197 = vpop.f32.mrb[0].mxu0
      %v1198 = vadd.f32 %v973, %v1197
      %v1199 = vpop.f32.mrb[0].mxu0
      %1200 = vmatprep.mubr.f32.mxu0 %v376
      %1201 = vmatmul.mubr.f32.gmra.mrb[0].mxu0 %v600
      %v1202 = vpop.f32.mrb[0].mxu0
      %v1203 = vadd.f32 %v978, %v1202
      %v1204 = vpop.f32.mrb[0].mxu0
      %1205 = vmatprep.mubr.f32.mxu0 %v378
      %1206 = vmatmul.mubr.f32.gmra.mrb[0].mxu0 %v603
      %v1207 = vpop.f32.mrb[0].mxu0
      %v1208 = vadd.f32 %v983, %v1207
      %v1209 = vpop.f32.mrb[0].mxu0
      %1210 = vmatprep.mubr.f32.mxu0 %v379
      %1211 = vmatmul.mubr.f32.gmra.mrb[0].mxu0 %v605
      %v1212 = vpop.f32.mrb[0].mxu0
      %v1213 = vadd.f32 %v988, %v1212
      %v1214 = vpop.f32.mrb[0].mxu0
      %1215 = vmatprep.mubr.f32.mxu0 %v381
      %1216 = vmatmul.mubr.f32.gmra.mrb[0].mxu0 %v608
      %v1217 = vpop.f32.mrb[0].mxu0
      %v1218 = vadd.f32 %v993, %v1217
      %v1219 = vpop.f32.mrb[0].mxu0
      %1220 = vmatprep.mubr.f32.mxu0 %v382
      %1221 = vmatmul.mubr.f32.gmra.mrb[0].mxu0 %v610
      %v1222 = vpop.f32.mrb[0].mxu0
      %v1223 = vadd.f32 %v998, %v1222
      %v1224 = vpop.f32.mrb[0].mxu0
      %1225 = vmatprep.mubr.f32.mxu0 %v384
      %1226 = vmatmul.mubr.f32.gmra.mrb[0].mxu0 %v613
      %v1227 = vpop.f32.mrb[0].mxu0
      %v1228 = vadd.f32 %v1003, %v1227
      %v1229 = vpop.f32.mrb[0].mxu0
      %1230 = vmatprep.mubr.f32.mxu0 %v385
      %1231 = vmatmul.mubr.f32.gmra.mrb[0].mxu0 %v615
      %v1232 = vpop.f32.mrb[0].mxu0
      %v1233 = vadd.f32 %v1008, %v1232
      %v1234 = vpop.f32.mrb[0].mxu0
      %1235 = vmatprep.mubr.f32.mxu0 %v387
      %1236 = vmatmul.mubr.f32.gmra.mrb[0].mxu0 %v618
      %v1237 = vpop.f32.mrb[0].mxu0
      %v1238 = vadd.f32 %v1013, %v1237
      %v1239 = vpop.f32.mrb[0].mxu0
      %1240 = vmatprep.mubr.f32.mxu0 %v388
      %1241 = vmatmul.mubr.f32.gmra.mrb[0].mxu0 %v620
      %v1242 = vpop.f32.mrb[0].mxu0
      %v1243 = vadd.f32 %v1018, %v1242
      %v1244 = vpop.f32.mrb[0].mxu0
      %1245 = vmatprep.mubr.f32.mxu0 %v390
      %1246 = vmatmul.mubr.f32.gmra.mrb[0].mxu0 %v623
      %v1247 = vpop.f32.mrb[0].mxu0
      %v1248 = vadd.f32 %v1023, %v1247
      %v1249 = vpop.f32.mrb[0].mxu0
      %1250 = vmatprep.mubr.f32.mxu0 %v391
      %1251 = vmatmul.mubr.f32.gmra.mrb[0].mxu0 %v625
      %v1252 = vpop.f32.mrb[0].mxu0
      %v1253 = vadd.f32 %v1028, %v1252
      %v1254 = vpop.f32.mrb[0].mxu0
      %1255 = vmatprep.mubr.f32.mxu0 %v393
      %1256 = vmatmul.mubr.f32.gmra.mrb[0].mxu0 %v628
      %v1257 = vpop.f32.mrb[0].mxu0
      %v1258 = vadd.f32 %v1033, %v1257
      %v1259 = vpop.f32.mrb[0].mxu0
      %1260 = vmatprep.mubr.f32.mxu0 %v394
      %1261 = vmatmul.mubr.f32.gmra.mrb[0].mxu0 %v630
      %v1262 = vpop.f32.mrb[0].mxu0
      %v1263 = vadd.f32 %v1038, %v1262
      %v1264 = vpop.f32.mrb[0].mxu0
      %1265 = vmatprep.mubr.f32.mxu0 %v396
      %1266 = vmatmul.mubr.f32.gmra.mrb[0].mxu0 %v633
      %v1267 = vpop.f32.mrb[0].mxu0
      %v1268 = vadd.f32 %v1043, %v1267
      %v1269 = vpop.f32.mrb[0].mxu0
      %1270 = vmatprep.mubr.f32.mxu0 %v397
      %1271 = vmatmul.mubr.f32.gmra.mrb[0].mxu0 %v635
      %v1272 = vpop.f32.mrb[0].mxu0
      %v1273 = vadd.f32 %v1048, %v1272
      %v1274 = vpop.f32.mrb[0].mxu0
      %1275 = vmatprep.mubr.f32.mxu0 %v399
      %1276 = vmatmul.mubr.f32.gmra.mrb[0].mxu0 %v638
      %v1277 = vpop.f32.mrb[0].mxu0
      %v1278 = vadd.f32 %v1053, %v1277
      %v1279 = vpop.f32.mrb[0].mxu0
      %1280 = vmatprep.mubr.f32.mxu0 %v400
      %1281 = vmatmul.mubr.f32.gmra.mrb[0].mxu0 %v640
      %v1282 = vpop.f32.mrb[0].mxu0
      %v1283 = vadd.f32 %v1058, %v1282
      %v1284 = vpop.f32.mrb[0].mxu0
      %1285 = vmatprep.mubr.f32.mxu0 %v402
      %1286 = vmatmul.mubr.f32.gmra.mrb[0].mxu0 %v643
      %v1287 = vpop.f32.mrb[0].mxu0
      %v1288 = vadd.f32 %v1063, %v1287
      %v1289 = vpop.f32.mrb[0].mxu0
      %1290 = vmatprep.mubr.f32.mxu0 %v403
      %1291 = vmatmul.mubr.f32.gmra.mrb[0].mxu0 %v645
      %v1292 = vpop.f32.mrb[0].mxu0
      %v1293 = vadd.f32 %v1068, %v1292
      %v1294 = vpop.f32.mrb[0].mxu0
      %1295 = vmatprep.mubr.f32.mxu0 %v405
      %1296 = vmatmul.mubr.f32.gmra.mrb[0].mxu0 %v648
      %v1297 = vpop.f32.mrb[0].mxu0
      %v1298 = vadd.f32 %v1073, %v1297
      %v1299 = vpop.f32.mrb[0].mxu0
      %1300 = vmatprep.mubr.f32.mxu0 %v406
      %1301 = vmatmul.mubr.f32.gmra.mrb[0].mxu0 %v650
      %v1302 = vpop.f32.mrb[0].mxu0
      %v1303 = vadd.f32 %v1078, %v1302
      %v1304 = vpop.f32.mrb[0].mxu0
      %1305 = vmatprep.mubr.f32.mxu0 %v408
      %1306 = vmatmul.mubr.f32.gmra.mrb[0].mxu0 %v653
      %v1307 = vpop.f32.mrb[0].mxu0
      %v1308 = vadd.f32 %v1083, %v1307
      %v1309 = vpop.f32.mrb[0].mxu0
      %1310 = vmatprep.mubr.f32.mxu0 %v409
      %1311 = vmatmul.mubr.f32.gmra.mrb[0].mxu0 %v655
      %v1312 = vpop.f32.mrb[0].mxu0
      %v1313 = vadd.f32 %v1088, %v1312
      %v1314 = vpop.f32.mrb[0].mxu0
      %1315 = vdwg.mxu0
      %1316 = vmatprep.subr.mxu0 0.0
      %1317 = vmatpush1.msra.mxu0 %v786
      %1318 = vmatprep.subr.mxu0 0.0
      %1319 = vmatpush1.msra.mxu0 %v787
      %1320 = vmatprep.subr.mxu0 0.0
      %1321 = vmatpush1.msra.mxu0 %v788
      %1322 = vmatprep.subr.mxu0 0.0
      %1323 = vmatpush1.msra.mxu0 %v789
      %1324 = vmatprep.subr.mxu0 0.0
      %1325 = vmatpush1.msra.mxu0 %v790
      %1326 = vmatprep.subr.mxu0 0.0
      %1327 = vmatpush1.msra.mxu0 %v791
      %1328 = vmatprep.subr.mxu0 0.0
      %1329 = vmatpush1.msra.mxu0 %v792
      %1330 = vmatprep.subr.mxu0 0.0
      %1331 = vmatpush1.msra.mxu0 %v793
      %1332 = vmatprep.subr.mxu0 0.0
      %1333 = vmatpush1.msra.mxu0 %v794
      %1334 = vmatprep.subr.mxu0 0.0
      %1335 = vmatpush1.msra.mxu0 %v795
      %1336 = vmatprep.subr.mxu0 0.0
      %1337 = vmatpush1.msra.mxu0 %v796
      %1338 = vmatprep.subr.mxu0 0.0
      %1339 = vmatpush1.msra.mxu0 %v797
      %1340 = vmatprep.subr.mxu0 0.0
      %1341 = vmatpush1.msra.mxu0 %v798
      %1342 = vmatprep.subr.mxu0 0.0
      %1343 = vmatpush1.msra.mxu0 %v799
      %1344 = vmatprep.subr.mxu0 0.0
      %1345 = vmatpush1.msra.mxu0 %v800
      %1346 = vmatprep.subr.mxu0 0.0
      %1347 = vmatpush1.msra.mxu0 %v801
      %1348 = vmatprep.subr.mxu0 0.0
      %1349 = vmatpush1.msra.mxu0 %v802
      %1350 = vmatprep.subr.mxu0 0.0
      %1351 = vmatpush1.msra.mxu0 %v803
      %1352 = vmatprep.subr.mxu0 0.0
      %1353 = vmatpush1.msra.mxu0 %v804
      %1354 = vmatprep.subr.mxu0 0.0
      %1355 = vmatpush1.msra.mxu0 %v805
      %1356 = vmatprep.subr.mxu0 0.0
      %1357 = vmatpush1.msra.mxu0 %v806
      %1358 = vmatprep.subr.mxu0 0.0
      %1359 = vmatpush1.msra.mxu0 %v807
      %1360 = vmatprep.subr.mxu0 0.0
      %1361 = vmatpush1.msra.mxu0 %v808
      %1362 = vmatprep.subr.mxu0 0.0
      %1363 = vmatpush1.msra.mxu0 %v809
      %1364 = vmatprep.subr.mxu0 0.0
      %1365 = vmatpush1.msra.mxu0 %v810
      %1366 = vmatprep.subr.mxu0 0.0
      %1367 = vmatpush1.msra.mxu0 %v811
      %1368 = vmatprep.subr.mxu0 0.0
      %1369 = vmatpush1.msra.mxu0 %v812
      %1370 = vmatprep.subr.mxu0 0.0
      %1371 = vmatpush1.msra.mxu0 %v813
      %1372 = vmatprep.subr.mxu0 0.0
      %1373 = vmatpush1.msra.mxu0 %v814
      %1374 = vmatprep.subr.mxu0 0.0
      %1375 = vmatpush1.msra.mxu0 %v815
      %1376 = vmatprep.subr.mxu0 0.0
      %1377 = vmatpush1.msra.mxu0 %v816
      %1378 = vmatprep.subr.mxu0 0.0
      %1379 = vmatpush1.msra.mxu0 %v817
      %1380 = vmatprep.mubr.f32.mxu0 %v583
      %1381 = vmatmul.mubr.f32.gmra.mrb[0].mxu0 %v470
      %v1382 = vpop.f32.mrb[0].mxu0
      %v1383 = vadd.f32 %v1158, %v1382
      %v1384 = vpop.f32.mrb[0].mxu0
      %1385 = vmatprep.mubr.f32.mxu0 %v585
      %1386 = vmatmul.mubr.f32.gmra.mrb[0].mxu0 %v472
      %v1387 = vpop.f32.mrb[0].mxu0
      %v1388 = vadd.f32 %v1163, %v1387
      %v1389 = vpop.f32.mrb[0].mxu0
      %1390 = vmatprep.mubr.f32.mxu0 %v588
      %1391 = vmatmul.mubr.f32.gmra.mrb[0].mxu0 %v475
      %v1392 = vpop.f32.mrb[0].mxu0
      %v1393 = vadd.f32 %v1168, %v1392
      %v1394 = vpop.f32.mrb[0].mxu0
      %1395 = vmatprep.mubr.f32.mxu0 %v590
      %1396 = vmatmul.mubr.f32.gmra.mrb[0].mxu0 %v477
      %v1397 = vpop.f32.mrb[0].mxu0
      %v1398 = vadd.f32 %v1173, %v1397
      %v1399 = vpop.f32.mrb[0].mxu0
      %1400 = vmatprep.mubr.f32.mxu0 %v593
      %1401 = vmatmul.mubr.f32.gmra.mrb[0].mxu0 %v480
      %v1402 = vpop.f32.mrb[0].mxu0
      %v1403 = vadd.f32 %v1178, %v1402
      %v1404 = vpop.f32.mrb[0].mxu0
      %1405 = vmatprep.mubr.f32.mxu0 %v595
      %1406 = vmatmul.mubr.f32.gmra.mrb[0].mxu0 %v482
      %v1407 = vpop.f32.mrb[0].mxu0
      %v1408 = vadd.f32 %v1183, %v1407
      %v1409 = vpop.f32.mrb[0].mxu0
      %1410 = vmatprep.mubr.f32.mxu0 %v598
      %1411 = vmatmul.mubr.f32.gmra.mrb[0].mxu0 %v485
      %v1412 = vpop.f32.mrb[0].mxu0
      %v1413 = vadd.f32 %v1188, %v1412
      %v1414 = vpop.f32.mrb[0].mxu0
      %1415 = vmatprep.mubr.f32.mxu0 %v600
      %1416 = vmatmul.mubr.f32.gmra.mrb[0].mxu0 %v487
      %v1417 = vpop.f32.mrb[0].mxu0
      %v1418 = vadd.f32 %v1193, %v1417
      %v1419 = vpop.f32.mrb[0].mxu0
      %1420 = vmatprep.mubr.f32.mxu0 %v603
      %1421 = vmatmul.mubr.f32.gmra.mrb[0].mxu0 %v490
      %v1422 = vpop.f32.mrb[0].mxu0
      %v1423 = vadd.f32 %v1198, %v1422
      %v1424 = vpop.f32.mrb[0].mxu0
      %1425 = vmatprep.mubr.f32.mxu0 %v605
      %1426 = vmatmul.mubr.f32.gmra.mrb[0].mxu0 %v492
      %v1427 = vpop.f32.mrb[0].mxu0
      %v1428 = vadd.f32 %v1203, %v1427
      %v1429 = vpop.f32.mrb[0].mxu0
      %1430 = vmatprep.mubr.f32.mxu0 %v608
      %1431 = vmatmul.mubr.f32.gmra.mrb[0].mxu0 %v495
      %v1432 = vpop.f32.mrb[0].mxu0
      %v1433 = vadd.f32 %v1208, %v1432
      %v1434 = vpop.f32.mrb[0].mxu0
      %1435 = vmatprep.mubr.f32.mxu0 %v610
      %1436 = vmatmul.mubr.f32.gmra.mrb[0].mxu0 %v497
      %v1437 = vpop.f32.mrb[0].mxu0
      %v1438 = vadd.f32 %v1213, %v1437
      %v1439 = vpop.f32.mrb[0].mxu0
      %1440 = vmatprep.mubr.f32.mxu0 %v613
      %1441 = vmatmul.mubr.f32.gmra.mrb[0].mxu0 %v500
      %v1442 = vpop.f32.mrb[0].mxu0
      %v1443 = vadd.f32 %v1218, %v1442
      %v1444 = vpop.f32.mrb[0].mxu0
      %1445 = vmatprep.mubr.f32.mxu0 %v615
      %1446 = vmatmul.mubr.f32.gmra.mrb[0].mxu0 %v502
      %v1447 = vpop.f32.mrb[0].mxu0
      %v1448 = vadd.f32 %v1223, %v1447
      %v1449 = vpop.f32.mrb[0].mxu0
      %1450 = vmatprep.mubr.f32.mxu0 %v618
      %1451 = vmatmul.mubr.f32.gmra.mrb[0].mxu0 %v505
      %v1452 = vpop.f32.mrb[0].mxu0
      %v1453 = vadd.f32 %v1228, %v1452
      %v1454 = vpop.f32.mrb[0].mxu0
      %1455 = vmatprep.mubr.f32.mxu0 %v620
      %1456 = vmatmul.mubr.f32.gmra.mrb[0].mxu0 %v507
      %v1457 = vpop.f32.mrb[0].mxu0
      %v1458 = vadd.f32 %v1233, %v1457
      %v1459 = vpop.f32.mrb[0].mxu0
      %1460 = vmatprep.mubr.f32.mxu0 %v623
      %1461 = vmatmul.mubr.f32.gmra.mrb[0].mxu0 %v510
      %v1462 = vpop.f32.mrb[0].mxu0
      %v1463 = vadd.f32 %v1238, %v1462
      %v1464 = vpop.f32.mrb[0].mxu0
      %1465 = vmatprep.mubr.f32.mxu0 %v625
      %1466 = vmatmul.mubr.f32.gmra.mrb[0].mxu0 %v512
      %v1467 = vpop.f32.mrb[0].mxu0
      %v1468 = vadd.f32 %v1243, %v1467
      %v1469 = vpop.f32.mrb[0].mxu0
      %1470 = vmatprep.mubr.f32.mxu0 %v628
      %1471 = vmatmul.mubr.f32.gmra.mrb[0].mxu0 %v515
      %v1472 = vpop.f32.mrb[0].mxu0
      %v1473 = vadd.f32 %v1248, %v1472
      %v1474 = vpop.f32.mrb[0].mxu0
      %1475 = vmatprep.mubr.f32.mxu0 %v630
      %1476 = vmatmul.mubr.f32.gmra.mrb[0].mxu0 %v517
      %v1477 = vpop.f32.mrb[0].mxu0
      %v1478 = vadd.f32 %v1253, %v1477
      %v1479 = vpop.f32.mrb[0].mxu0
      %1480 = vmatprep.mubr.f32.mxu0 %v633
      %1481 = vmatmul.mubr.f32.gmra.mrb[0].mxu0 %v520
      %v1482 = vpop.f32.mrb[0].mxu0
      %v1483 = vadd.f32 %v1258, %v1482
      %v1484 = vpop.f32.mrb[0].mxu0
      %1485 = vmatprep.mubr.f32.mxu0 %v635
      %1486 = vmatmul.mubr.f32.gmra.mrb[0].mxu0 %v522
      %v1487 = vpop.f32.mrb[0].mxu0
      %v1488 = vadd.f32 %v1263, %v1487
      %v1489 = vpop.f32.mrb[0].mxu0
      %1490 = vmatprep.mubr.f32.mxu0 %v638
      %1491 = vmatmul.mubr.f32.gmra.mrb[0].mxu0 %v525
      %v1492 = vpop.f32.mrb[0].mxu0
      %v1493 = vadd.f32 %v1268, %v1492
      %v1494 = vpop.f32.mrb[0].mxu0
      %1495 = vmatprep.mubr.f32.mxu0 %v640
      %1496 = vmatmul.mubr.f32.gmra.mrb[0].mxu0 %v527
      %v1497 = vpop.f32.mrb[0].mxu0
      %v1498 = vadd.f32 %v1273, %v1497
      %v1499 = vpop.f32.mrb[0].mxu0
      %1500 = vmatprep.mubr.f32.mxu0 %v643
      %1501 = vmatmul.mubr.f32.gmra.mrb[0].mxu0 %v530
      %v1502 = vpop.f32.mrb[0].mxu0
      %v1503 = vadd.f32 %v1278, %v1502
      %v1504 = vpop.f32.mrb[0].mxu0
      %1505 = vmatprep.mubr.f32.mxu0 %v645
      %1506 = vmatmul.mubr.f32.gmra.mrb[0].mxu0 %v532
      %v1507 = vpop.f32.mrb[0].mxu0
      %v1508 = vadd.f32 %v1283, %v1507
      %v1509 = vpop.f32.mrb[0].mxu0
      %1510 = vmatprep.mubr.f32.mxu0 %v648
      %1511 = vmatmul.mubr.f32.gmra.mrb[0].mxu0 %v535
      %v1512 = vpop.f32.mrb[0].mxu0
      %v1513 = vadd.f32 %v1288, %v1512
      %v1514 = vpop.f32.mrb[0].mxu0
      %1515 = vmatprep.mubr.f32.mxu0 %v650
      %1516 = vmatmul.mubr.f32.gmra.mrb[0].mxu0 %v537
      %v1517 = vpop.f32.mrb[0].mxu0
      %v1518 = vadd.f32 %v1293, %v1517
      %v1519 = vpop.f32.mrb[0].mxu0
      %1520 = vmatprep.mubr.f32.mxu0 %v653
      %1521 = vmatmul.mubr.f32.gmra.mrb[0].mxu0 %v540
      %v1522 = vpop.f32.mrb[0].mxu0
      %v1523 = vadd.f32 %v1298, %v1522
      %v1524 = vpop.f32.mrb[0].mxu0
      %1525 = vmatprep.mubr.f32.mxu0 %v655
      %1526 = vmatmul.mubr.f32.gmra.mrb[0].mxu0 %v542
      %v1527 = vpop.f32.mrb[0].mxu0
      %v1528 = vadd.f32 %v1303, %v1527
      %v1529 = vpop.f32.mrb[0].mxu0
      %1530 = vmatprep.mubr.f32.mxu0 %v700
      %1531 = vmatmul.mubr.f32.gmra.mrb[0].mxu0 %v693
      %v1532 = vpop.f32.mrb[0].mxu0
      %v1533 = vadd.f32 %v1308, %v1532
      %v1534 = vpop.f32.mrb[0].mxu0
      %1535 = vmatprep.mubr.f32.mxu0 %v702
      %1536 = vmatmul.mubr.f32.gmra.mrb[0].mxu0 %v695
      %v1537 = vpop.f32.mrb[0].mxu0
      %v1538 = vadd.f32 %v1313, %v1537
      %v1539 = vpop.f32.mrb[0].mxu0
      %1540 = vdwg.mxu0
      %1541 = vmatprep.subr.mxu0 0.0
      %1542 = vmatpush1.msra.mxu0 %v818
      %1543 = vmatprep.subr.mxu0 0.0
      %1544 = vmatpush1.msra.mxu0 %v819
      %1545 = vmatprep.subr.mxu0 0.0
      %1546 = vmatpush1.msra.mxu0 %v820
      %1547 = vmatprep.subr.mxu0 0.0
      %1548 = vmatpush1.msra.mxu0 %v821
      %1549 = vmatprep.subr.mxu0 0.0
      %1550 = vmatpush1.msra.mxu0 %v822
      %1551 = vmatprep.subr.mxu0 0.0
      %1552 = vmatpush1.msra.mxu0 %v823
      %1553 = vmatprep.subr.mxu0 0.0
      %1554 = vmatpush1.msra.mxu0 %v824
      %1555 = vmatprep.subr.mxu0 0.0
      %1556 = vmatpush1.msra.mxu0 %v825
      %1557 = vmatprep.subr.mxu0 0.0
      %1558 = vmatpush1.msra.mxu0 %v826
      %1559 = vmatprep.subr.mxu0 0.0
      %1560 = vmatpush1.msra.mxu0 %v827
      %1561 = vmatprep.subr.mxu0 0.0
      %1562 = vmatpush1.msra.mxu0 %v828
      %1563 = vmatprep.subr.mxu0 0.0
      %1564 = vmatpush1.msra.mxu0 %v829
      %1565 = vmatprep.subr.mxu0 0.0
      %1566 = vmatpush1.msra.mxu0 %v830
      %1567 = vmatprep.subr.mxu0 0.0
      %1568 = vmatpush1.msra.mxu0 %v831
      %1569 = vmatprep.subr.mxu0 0.0
      %1570 = vmatpush1.msra.mxu0 %v832
      %1571 = vmatprep.subr.mxu0 0.0
      %1572 = vmatpush1.msra.mxu0 %v833
      %1573 = vmatprep.subr.mxu0 0.0
      %1574 = vmatpush1.msra.mxu0 %v834
      %1575 = vmatprep.subr.mxu0 0.0
      %1576 = vmatpush1.msra.mxu0 %v835
      %1577 = vmatprep.subr.mxu0 0.0
      %1578 = vmatpush1.msra.mxu0 %v836
      %1579 = vmatprep.subr.mxu0 0.0
      %1580 = vmatpush1.msra.mxu0 %v837
      %1581 = vmatprep.subr.mxu0 0.0
      %1582 = vmatpush1.msra.mxu0 %v838
      %1583 = vmatprep.subr.mxu0 0.0
      %1584 = vmatpush1.msra.mxu0 %v839
      %1585 = vmatprep.subr.mxu0 0.0
      %1586 = vmatpush1.msra.mxu0 %v840
      %1587 = vmatprep.subr.mxu0 0.0
      %1588 = vmatpush1.msra.mxu0 %v841
      %1589 = vmatprep.subr.mxu0 0.0
      %1590 = vmatpush1.msra.mxu0 %v842
      %1591 = vmatprep.subr.mxu0 0.0
      %1592 = vmatpush1.msra.mxu0 %v843
      %1593 = vmatprep.subr.mxu0 0.0
      %1594 = vmatpush1.msra.mxu0 %v844
      %1595 = vmatprep.subr.mxu0 0.0
      %1596 = vmatpush1.msra.mxu0 %v845
      %1597 = vmatprep.subr.mxu0 0.0
      %1598 = vmatpush1.msra.mxu0 %v846
      %1599 = vmatprep.subr.mxu0 0.0
      %1600 = vmatpush1.msra.mxu0 %v847
      %1601 = vmatprep.subr.mxu0 0.0
      %1602 = vmatpush1.msra.mxu0 %v848
      %1603 = vmatprep.subr.mxu0 0.0
      %1604 = vmatpush1.msra.mxu0 %v849
      %1605 = vmatprep.mubr.f32.mxu0 %v475
      %1606 = vmatmul.mubr.f32.gmra.mrb[0].mxu0 %v366
      %v1607 = vpop.f32.mrb[0].mxu0
      %v1608 = vadd.f32 %v1383, %v1607
      %v1609 = vpop.f32.mrb[0].mxu0
      %1610 = vmatprep.mubr.f32.mxu0 %v477
      %1611 = vmatmul.mubr.f32.gmra.mrb[0].mxu0 %v367
      %v1612 = vpop.f32.mrb[0].mxu0
      %v1613 = vadd.f32 %v1388, %v1612
      %v1614 = vpop.f32.mrb[0].mxu0
      %1615 = vmatprep.mubr.f32.mxu0 %v480
      %1616 = vmatmul.mubr.f32.gmra.mrb[0].mxu0 %v369
      %v1617 = vpop.f32.mrb[0].mxu0
      %v1618 = vadd.f32 %v1393, %v1617
      %v1619 = vpop.f32.mrb[0].mxu0
      %1620 = vmatprep.mubr.f32.mxu0 %v482
      %1621 = vmatmul.mubr.f32.gmra.mrb[0].mxu0 %v370
      %v1622 = vpop.f32.mrb[0].mxu0
      %v1623 = vadd.f32 %v1398, %v1622
      %v1624 = vpop.f32.mrb[0].mxu0
      %1625 = vmatprep.mubr.f32.mxu0 %v485
      %1626 = vmatmul.mubr.f32.gmra.mrb[0].mxu0 %v372
      %v1627 = vpop.f32.mrb[0].mxu0
      %v1628 = vadd.f32 %v1403, %v1627
      %v1629 = vpop.f32.mrb[0].mxu0
      %1630 = vmatprep.mubr.f32.mxu0 %v487
      %1631 = vmatmul.mubr.f32.gmra.mrb[0].mxu0 %v373
      %v1632 = vpop.f32.mrb[0].mxu0
      %v1633 = vadd.f32 %v1408, %v1632
      %v1634 = vpop.f32.mrb[0].mxu0
      %1635 = vmatprep.mubr.f32.mxu0 %v490
      %1636 = vmatmul.mubr.f32.gmra.mrb[0].mxu0 %v375
      %v1637 = vpop.f32.mrb[0].mxu0
      %v1638 = vadd.f32 %v1413, %v1637
      %v1639 = vpop.f32.mrb[0].mxu0
      %1640 = vmatprep.mubr.f32.mxu0 %v492
      %1641 = vmatmul.mubr.f32.gmra.mrb[0].mxu0 %v376
      %v1642 = vpop.f32.mrb[0].mxu0
      %v1643 = vadd.f32 %v1418, %v1642
      %v1644 = vpop.f32.mrb[0].mxu0
      %1645 = vmatprep.mubr.f32.mxu0 %v495
      %1646 = vmatmul.mubr.f32.gmra.mrb[0].mxu0 %v378
      %v1647 = vpop.f32.mrb[0].mxu0
      %v1648 = vadd.f32 %v1423, %v1647
      %v1649 = vpop.f32.mrb[0].mxu0
      %1650 = vmatprep.mubr.f32.mxu0 %v497
      %1651 = vmatmul.mubr.f32.gmra.mrb[0].mxu0 %v379
      %v1652 = vpop.f32.mrb[0].mxu0
      %v1653 = vadd.f32 %v1428, %v1652
      %v1654 = vpop.f32.mrb[0].mxu0
      %1655 = vmatprep.mubr.f32.mxu0 %v500
      %1656 = vmatmul.mubr.f32.gmra.mrb[0].mxu0 %v381
      %v1657 = vpop.f32.mrb[0].mxu0
      %v1658 = vadd.f32 %v1433, %v1657
      %v1659 = vpop.f32.mrb[0].mxu0
      %1660 = vmatprep.mubr.f32.mxu0 %v502
      %1661 = vmatmul.mubr.f32.gmra.mrb[0].mxu0 %v382
      %v1662 = vpop.f32.mrb[0].mxu0
      %v1663 = vadd.f32 %v1438, %v1662
      %v1664 = vpop.f32.mrb[0].mxu0
      %1665 = vmatprep.mubr.f32.mxu0 %v505
      %1666 = vmatmul.mubr.f32.gmra.mrb[0].mxu0 %v384
      %v1667 = vpop.f32.mrb[0].mxu0
      %v1668 = vadd.f32 %v1443, %v1667
      %v1669 = vpop.f32.mrb[0].mxu0
      %1670 = vmatprep.mubr.f32.mxu0 %v507
      %1671 = vmatmul.mubr.f32.gmra.mrb[0].mxu0 %v385
      %v1672 = vpop.f32.mrb[0].mxu0
      %v1673 = vadd.f32 %v1448, %v1672
      %v1674 = vpop.f32.mrb[0].mxu0
      %1675 = vmatprep.mubr.f32.mxu0 %v510
      %1676 = vmatmul.mubr.f32.gmra.mrb[0].mxu0 %v387
      %v1677 = vpop.f32.mrb[0].mxu0
      %v1678 = vadd.f32 %v1453, %v1677
      %v1679 = vpop.f32.mrb[0].mxu0
      %1680 = vmatprep.mubr.f32.mxu0 %v512
      %1681 = vmatmul.mubr.f32.gmra.mrb[0].mxu0 %v388
      %v1682 = vpop.f32.mrb[0].mxu0
      %v1683 = vadd.f32 %v1458, %v1682
      %v1684 = vpop.f32.mrb[0].mxu0
      %1685 = vmatprep.mubr.f32.mxu0 %v515
      %1686 = vmatmul.mubr.f32.gmra.mrb[0].mxu0 %v390
      %v1687 = vpop.f32.mrb[0].mxu0
      %v1688 = vadd.f32 %v1463, %v1687
      %v1689 = vpop.f32.mrb[0].mxu0
      %1690 = vmatprep.mubr.f32.mxu0 %v517
      %1691 = vmatmul.mubr.f32.gmra.mrb[0].mxu0 %v391
      %v1692 = vpop.f32.mrb[0].mxu0
      %v1693 = vadd.f32 %v1468, %v1692
      %v1694 = vpop.f32.mrb[0].mxu0
      %1695 = vmatprep.mubr.f32.mxu0 %v520
      %1696 = vmatmul.mubr.f32.gmra.mrb[0].mxu0 %v393
      %v1697 = vpop.f32.mrb[0].mxu0
      %v1698 = vadd.f32 %v1473, %v1697
      %v1699 = vpop.f32.mrb[0].mxu0
      %1700 = vmatprep.mubr.f32.mxu0 %v522
      %1701 = vmatmul.mubr.f32.gmra.mrb[0].mxu0 %v394
      %v1702 = vpop.f32.mrb[0].mxu0
      %v1703 = vadd.f32 %v1478, %v1702
      %v1704 = vpop.f32.mrb[0].mxu0
      %1705 = vmatprep.mubr.f32.mxu0 %v525
      %1706 = vmatmul.mubr.f32.gmra.mrb[0].mxu0 %v396
      %v1707 = vpop.f32.mrb[0].mxu0
      %v1708 = vadd.f32 %v1483, %v1707
      %v1709 = vpop.f32.mrb[0].mxu0
      %1710 = vmatprep.mubr.f32.mxu0 %v527
      %1711 = vmatmul.mubr.f32.gmra.mrb[0].mxu0 %v397
      %v1712 = vpop.f32.mrb[0].mxu0
      %v1713 = vadd.f32 %v1488, %v1712
      %v1714 = vpop.f32.mrb[0].mxu0
      %1715 = vmatprep.mubr.f32.mxu0 %v530
      %1716 = vmatmul.mubr.f32.gmra.mrb[0].mxu0 %v399
      %v1717 = vpop.f32.mrb[0].mxu0
      %v1718 = vadd.f32 %v1493, %v1717
      %v1719 = vpop.f32.mrb[0].mxu0
      %1720 = vmatprep.mubr.f32.mxu0 %v532
      %1721 = vmatmul.mubr.f32.gmra.mrb[0].mxu0 %v400
      %v1722 = vpop.f32.mrb[0].mxu0
      %v1723 = vadd.f32 %v1498, %v1722
      %v1724 = vpop.f32.mrb[0].mxu0
      %1725 = vmatprep.mubr.f32.mxu0 %v535
      %1726 = vmatmul.mubr.f32.gmra.mrb[0].mxu0 %v402
      %v1727 = vpop.f32.mrb[0].mxu0
      %v1728 = vadd.f32 %v1503, %v1727
      %v1729 = vpop.f32.mrb[0].mxu0
      %1730 = vmatprep.mubr.f32.mxu0 %v537
      %1731 = vmatmul.mubr.f32.gmra.mrb[0].mxu0 %v403
      %v1732 = vpop.f32.mrb[0].mxu0
      %v1733 = vadd.f32 %v1508, %v1732
      %v1734 = vpop.f32.mrb[0].mxu0
      %1735 = vmatprep.mubr.f32.mxu0 %v540
      %1736 = vmatmul.mubr.f32.gmra.mrb[0].mxu0 %v405
      %v1737 = vpop.f32.mrb[0].mxu0
      %v1738 = vadd.f32 %v1513, %v1737
      %v1739 = vpop.f32.mrb[0].mxu0
      %1740 = vmatprep.mubr.f32.mxu0 %v542
      %1741 = vmatmul.mubr.f32.gmra.mrb[0].mxu0 %v406
      %v1742 = vpop.f32.mrb[0].mxu0
      %v1743 = vadd.f32 %v1518, %v1742
      %v1744 = vpop.f32.mrb[0].mxu0
      %1745 = vmatprep.mubr.f32.mxu0 %v693
      %1746 = vmatmul.mubr.f32.gmra.mrb[0].mxu0 %v408
      %v1747 = vpop.f32.mrb[0].mxu0
      %v1748 = vadd.f32 %v1523, %v1747
      %v1749 = vpop.f32.mrb[0].mxu0
      %1750 = vmatprep.mubr.f32.mxu0 %v695
      %1751 = vmatmul.mubr.f32.gmra.mrb[0].mxu0 %v409
      %v1752 = vpop.f32.mrb[0].mxu0
      %v1753 = vadd.f32 %v1528, %v1752
      %v1754 = vpop.f32.mrb[0].mxu0
      %1755 = vmatprep.mubr.f32.mxu0 %v710
      %1756 = vmatmul.mubr.f32.gmra.mrb[0].mxu0 %v411
      %v1757 = vpop.f32.mrb[0].mxu0
      %v1758 = vadd.f32 %v1533, %v1757
      %v1759 = vpop.f32.mrb[0].mxu0
      %1760 = vmatprep.mubr.f32.mxu0 %v712
      %1761 = vmatmul.mubr.f32.gmra.mrb[0].mxu0 %v412
      %v1762 = vpop.f32.mrb[0].mxu0
      %v1763 = vadd.f32 %v1538, %v1762
      %v1764 = vpop.f32.mrb[0].mxu0
      %1765 = vdwg.mxu0
      %1766 = vmatprep.subr.mxu0 0.0
      %1767 = vmatpush1.msra.mxu0 %v850
      %1768 = vmatprep.subr.mxu0 0.0
      %1769 = vmatpush1.msra.mxu0 %v851
      %1770 = vmatprep.subr.mxu0 0.0
      %1771 = vmatpush1.msra.mxu0 %v852
      %1772 = vmatprep.subr.mxu0 0.0
      %1773 = vmatpush1.msra.mxu0 %v853
      %1774 = vmatprep.subr.mxu0 0.0
      %1775 = vmatpush1.msra.mxu0 %v854
      %1776 = vmatprep.subr.mxu0 0.0
      %1777 = vmatpush1.msra.mxu0 %v855
      %1778 = vmatprep.subr.mxu0 0.0
      %1779 = vmatpush1.msra.mxu0 %v856
      %1780 = vmatprep.subr.mxu0 0.0
      %1781 = vmatpush1.msra.mxu0 %v857
      %1782 = vmatprep.subr.mxu0 0.0
      %1783 = vmatpush1.msra.mxu0 %v858
      %1784 = vmatprep.subr.mxu0 0.0
      %1785 = vmatpush1.msra.mxu0 %v859
      %1786 = vmatprep.subr.mxu0 0.0
      %1787 = vmatpush1.msra.mxu0 %v860
      %1788 = vmatprep.subr.mxu0 0.0
      %1789 = vmatpush1.msra.mxu0 %v861
      %1790 = vmatprep.subr.mxu0 0.0
      %1791 = vmatpush1.msra.mxu0 %v862
      %1792 = vmatprep.subr.mxu0 0.0
      %1793 = vmatpush1.msra.mxu0 %v863
      %1794 = vmatprep.subr.mxu0 0.0
      %1795 = vmatpush1.msra.mxu0 %v864
      %1796 = vmatprep.subr.mxu0 0.0
      %1797 = vmatpush1.msra.mxu0 %v865
      %1798 = vmatprep.subr.mxu0 0.0
      %1799 = vmatpush1.msra.mxu0 0.0
      %1800 = vmatprep.subr.mxu0 0.0
      %1801 = vmatpush1.msra.mxu0 0.0
      %1802 = vmatprep.subr.mxu0 0.0
      %1803 = vmatpush1.msra.mxu0 0.0
      %1804 = vmatprep.subr.mxu0 0.0
      %1805 = vmatpush1.msra.mxu0 0.0
      %1806 = vmatprep.subr.mxu0 0.0
      %1807 = vmatpush1.msra.mxu0 0.0
      %1808 = vmatprep.subr.mxu0 0.0
      %1809 = vmatpush1.msra.mxu0 0.0
      %1810 = vmatprep.subr.mxu0 0.0
      %1811 = vmatpush1.msra.mxu0 0.0
      %1812 = vmatprep.subr.mxu0 0.0
      %1813 = vmatpush1.msra.mxu0 0.0
      %1814 = vmatprep.subr.mxu0 0.0
      %1815 = vmatpush1.msra.mxu0 0.0
      %1816 = vmatprep.subr.mxu0 0.0
      %1817 = vmatpush1.msra.mxu0 0.0
      %1818 = vmatprep.subr.mxu0 0.0
      %1819 = vmatpush1.msra.mxu0 0.0
      %1820 = vmatprep.subr.mxu0 0.0
      %1821 = vmatpush1.msra.mxu0 0.0
      %1822 = vmatprep.subr.mxu0 0.0
      %1823 = vmatpush1.msra.mxu0 0.0
      %1824 = vmatprep.subr.mxu0 0.0
      %1825 = vmatpush1.msra.mxu0 0.0
      %1826 = vmatprep.subr.mxu0 0.0
      %1827 = vmatpush1.msra.mxu0 0.0
      %1828 = vmatprep.subr.mxu0 0.0
      %1829 = vmatpush1.msra.mxu0 0.0
      %1830 = vmatprep.mubr.f32.mxu0 0.0
      %1831 = vmatmul.mubr.f32.gmra.mrb[0].mxu0 %v588
      %v1832 = vpop.f32.mrb[0].mxu0
      %v1833 = vadd.f32 %v1608, %v1832
      %v1834 = vpop.f32.mrb[0].mxu0
      %1835 = vmatprep.mubr.f32.mxu0 0.0
      %1836 = vmatmul.mubr.f32.gmra.mrb[0].mxu0 %v590
      %v1837 = vpop.f32.mrb[0].mxu0
      %v1838 = vadd.f32 %v1613, %v1837
      %v1839 = vpop.f32.mrb[0].mxu0
      %1840 = vmatprep.mubr.f32.mxu0 0.0
      %1841 = vmatmul.mubr.f32.gmra.mrb[0].mxu0 %v593
      %v1842 = vpop.f32.mrb[0].mxu0
      %v1843 = vadd.f32 %v1618, %v1842
      %v1844 = vpop.f32.mrb[0].mxu0
      %1845 = vmatprep.mubr.f32.mxu0 0.0
      %1846 = vmatmul.mubr.f32.gmra.mrb[0].mxu0 %v595
      %v1847 = vpop.f32.mrb[0].mxu0
      %v1848 = vadd.f32 %v1623, %v1847
      %v1849 = vpop.f32.mrb[0].mxu0
      %1850 = vmatprep.mubr.f32.mxu0 0.0
      %1851 = vmatmul.mubr.f32.gmra.mrb[0].mxu0 %v598
      %v1852 = vpop.f32.mrb[0].mxu0
      %v1853 = vadd.f32 %v1628, %v1852
      %v1854 = vpop.f32.mrb[0].mxu0
      %1855 = vmatprep.mubr.f32.mxu0 0.0
      %1856 = vmatmul.mubr.f32.gmra.mrb[0].mxu0 %v600
      %v1857 = vpop.f32.mrb[0].mxu0
      %v1858 = vadd.f32 %v1633, %v1857
      %v1859 = vpop.f32.mrb[0].mxu0
      %1860 = vmatprep.mubr.f32.mxu0 0.0
      %1861 = vmatmul.mubr.f32.gmra.mrb[0].mxu0 %v603
      %v1862 = vpop.f32.mrb[0].mxu0
      %v1863 = vadd.f32 %v1638, %v1862
      %v1864 = vpop.f32.mrb[0].mxu0
      %1865 = vmatprep.mubr.f32.mxu0 0.0
      %1866 = vmatmul.mubr.f32.gmra.mrb[0].mxu0 %v605
      %v1867 = vpop.f32.mrb[0].mxu0
      %v1868 = vadd.f32 %v1643, %v1867
      %v1869 = vpop.f32.mrb[0].mxu0
      %1870 = vmatprep.mubr.f32.mxu0 0.0
      %1871 = vmatmul.mubr.f32.gmra.mrb[0].mxu0 %v608
      %v1872 = vpop.f32.mrb[0].mxu0
      %v1873 = vadd.f32 %v1648, %v1872
      %v1874 = vpop.f32.mrb[0].mxu0
      %1875 = vmatprep.mubr.f32.mxu0 0.0
      %1876 = vmatmul.mubr.f32.gmra.mrb[0].mxu0 %v610
      %v1877 = vpop.f32.mrb[0].mxu0
      %v1878 = vadd.f32 %v1653, %v1877
      %v1879 = vpop.f32.mrb[0].mxu0
      %1880 = vmatprep.mubr.f32.mxu0 0.0
      %1881 = vmatmul.mubr.f32.gmra.mrb[0].mxu0 %v613
      %v1882 = vpop.f32.mrb[0].mxu0
      %v1883 = vadd.f32 %v1658, %v1882
      %v1884 = vpop.f32.mrb[0].mxu0
      %1885 = vmatprep.mubr.f32.mxu0 0.0
      %1886 = vmatmul.mubr.f32.gmra.mrb[0].mxu0 %v615
      %v1887 = vpop.f32.mrb[0].mxu0
      %v1888 = vadd.f32 %v1663, %v1887
      %v1889 = vpop.f32.mrb[0].mxu0
      %1890 = vmatprep.mubr.f32.mxu0 0.0
      %1891 = vmatmul.mubr.f32.gmra.mrb[0].mxu0 %v618
      %v1892 = vpop.f32.mrb[0].mxu0
      %v1893 = vadd.f32 %v1668, %v1892
      %v1894 = vpop.f32.mrb[0].mxu0
      %1895 = vmatprep.mubr.f32.mxu0 0.0
      %1896 = vmatmul.mubr.f32.gmra.mrb[0].mxu0 %v620
      %v1897 = vpop.f32.mrb[0].mxu0
      %v1898 = vadd.f32 %v1673, %v1897
      %v1899 = vpop.f32.mrb[0].mxu0
      %1900 = vmatprep.mubr.f32.mxu0 0.0
      %1901 = vmatmul.mubr.f32.gmra.mrb[0].mxu0 %v623
      %v1902 = vpop.f32.mrb[0].mxu0
      %v1903 = vadd.f32 %v1678, %v1902
      %v1904 = vpop.f32.mrb[0].mxu0
      %1905 = vmatprep.mubr.f32.mxu0 0.0
      %1906 = vmatmul.mubr.f32.gmra.mrb[0].mxu0 %v625
      %v1907 = vpop.f32.mrb[0].mxu0
      %v1908 = vadd.f32 %v1683, %v1907
      %v1909 = vpop.f32.mrb[0].mxu0
      %1910 = vmatprep.mubr.f32.mxu0 0.0
      %1911 = vmatmul.mubr.f32.gmra.mrb[0].mxu0 %v628
      %v1912 = vpop.f32.mrb[0].mxu0
      %v1913 = vadd.f32 %v1688, %v1912
      %v1914 = vpop.f32.mrb[0].mxu0
      %1915 = vmatprep.mubr.f32.mxu0 0.0
      %1916 = vmatmul.mubr.f32.gmra.mrb[0].mxu0 %v630
      %v1917 = vpop.f32.mrb[0].mxu0
      %v1918 = vadd.f32 %v1693, %v1917
      %v1919 = vpop.f32.mrb[0].mxu0
      %1920 = vmatprep.mubr.f32.mxu0 0.0
      %1921 = vmatmul.mubr.f32.gmra.mrb[0].mxu0 %v633
      %v1922 = vpop.f32.mrb[0].mxu0
      %v1923 = vadd.f32 %v1698, %v1922
      %v1924 = vpop.f32.mrb[0].mxu0
      %1925 = vmatprep.mubr.f32.mxu0 0.0
      %1926 = vmatmul.mubr.f32.gmra.mrb[0].mxu0 %v635
      %v1927 = vpop.f32.mrb[0].mxu0
      %v1928 = vadd.f32 %v1703, %v1927
      %v1929 = vpop.f32.mrb[0].mxu0
      %1930 = vmatprep.mubr.f32.mxu0 0.0
      %1931 = vmatmul.mubr.f32.gmra.mrb[0].mxu0 %v638
      %v1932 = vpop.f32.mrb[0].mxu0
      %v1933 = vadd.f32 %v1708, %v1932
      %v1934 = vpop.f32.mrb[0].mxu0
      %1935 = vmatprep.mubr.f32.mxu0 0.0
      %1936 = vmatmul.mubr.f32.gmra.mrb[0].mxu0 %v640
      %v1937 = vpop.f32.mrb[0].mxu0
      %v1938 = vadd.f32 %v1713, %v1937
      %v1939 = vpop.f32.mrb[0].mxu0
      %1940 = vmatprep.mubr.f32.mxu0 0.0
      %1941 = vmatmul.mubr.f32.gmra.mrb[0].mxu0 %v643
      %v1942 = vpop.f32.mrb[0].mxu0
      %v1943 = vadd.f32 %v1718, %v1942
      %v1944 = vpop.f32.mrb[0].mxu0
      %1945 = vmatprep.mubr.f32.mxu0 0.0
      %1946 = vmatmul.mubr.f32.gmra.mrb[0].mxu0 %v645
      %v1947 = vpop.f32.mrb[0].mxu0
      %v1948 = vadd.f32 %v1723, %v1947
      %v1949 = vpop.f32.mrb[0].mxu0
      %1950 = vmatprep.mubr.f32.mxu0 0.0
      %1951 = vmatmul.mubr.f32.gmra.mrb[0].mxu0 %v648
      %v1952 = vpop.f32.mrb[0].mxu0
      %v1953 = vadd.f32 %v1728, %v1952
      %v1954 = vpop.f32.mrb[0].mxu0
      %1955 = vmatprep.mubr.f32.mxu0 0.0
      %1956 = vmatmul.mubr.f32.gmra.mrb[0].mxu0 %v650
      %v1957 = vpop.f32.mrb[0].mxu0
      %v1958 = vadd.f32 %v1733, %v1957
      %v1959 = vpop.f32.mrb[0].mxu0
      %1960 = vmatprep.mubr.f32.mxu0 0.0
      %1961 = vmatmul.mubr.f32.gmra.mrb[0].mxu0 %v653
      %v1962 = vpop.f32.mrb[0].mxu0
      %v1963 = vadd.f32 %v1738, %v1962
      %v1964 = vpop.f32.mrb[0].mxu0
      %1965 = vmatprep.mubr.f32.mxu0 0.0
      %1966 = vmatmul.mubr.f32.gmra.mrb[0].mxu0 %v655
      %v1967 = vpop.f32.mrb[0].mxu0
      %v1968 = vadd.f32 %v1743, %v1967
      %v1969 = vpop.f32.mrb[0].mxu0
      %1970 = vmatprep.mubr.f32.mxu0 0.0
      %1971 = vmatmul.mubr.f32.gmra.mrb[0].mxu0 %v700
      %v1972 = vpop.f32.mrb[0].mxu0
      %v1973 = vadd.f32 %v1748, %v1972
      %v1974 = vpop.f32.mrb[0].mxu0
      %1975 = vmatprep.mubr.f32.mxu0 0.0
      %1976 = vmatmul.mubr.f32.gmra.mrb[0].mxu0 %v702
      %v1977 = vpop.f32.mrb[0].mxu0
      %v1978 = vadd.f32 %v1753, %v1977
      %v1979 = vpop.f32.mrb[0].mxu0
      %1980 = vmatprep.mubr.f32.mxu0 0.0
      %1981 = vmatmul.mubr.f32.gmra.mrb[0].mxu0 %v717
      %v1982 = vpop.f32.mrb[0].mxu0
      %v1983 = vadd.f32 %v1758, %v1982
      %v1984 = vpop.f32.mrb[0].mxu0
      %1985 = vmatprep.mubr.f32.mxu0 0.0
      %1986 = vmatmul.mubr.f32.gmra.mrb[0].mxu0 %v719
      %v1987 = vpop.f32.mrb[0].mxu0
      %v1988 = vadd.f32 %v1763, %v1987
      %v1989 = vpop.f32.mrb[0].mxu0
      %1990 = vdwg.mxu0
      %v1991 = vld [vmem:[%s8] sm:$0x1]
      %v1993 = vlaneseq
      %v1994 = vshrl.u32 %v1993, 7
      %v1995 = vsub.s32 0, %v1994
      %v1996 = vrot.slane %v1991, %v1995
      %v1998 = vmul.f32 %v1833, %v1996
      %v1999 = vmul.f32 %v1838, %v1996
      %v2000 = vmul.f32 %v1843, %v1996
      %v2001 = vmul.f32 %v1848, %v1996
      %v2002 = vmul.f32 %v1853, %v1996
      %v2003 = vmul.f32 %v1858, %v1996
      %v2004 = vmul.f32 %v1863, %v1996
      %v2005 = vmul.f32 %v1868, %v1996
      %v2006 = vmul.f32 %v1873, %v1996
      %v2007 = vmul.f32 %v1878, %v1996
      %v2008 = vmul.f32 %v1883, %v1996
      %v2009 = vmul.f32 %v1888, %v1996
      %v2010 = vmul.f32 %v1893, %v1996
      %v2011 = vmul.f32 %v1898, %v1996
      %v2012 = vmul.f32 %v1903, %v1996
      %v2013 = vmul.f32 %v1908, %v1996
      %v2014 = vmul.f32 %v1913, %v1996
      %v2015 = vmul.f32 %v1918, %v1996
      %v2016 = vmul.f32 %v1923, %v1996
      %v2017 = vmul.f32 %v1928, %v1996
      %v2018 = vmul.f32 %v1933, %v1996
      %v2019 = vmul.f32 %v1938, %v1996
      %v2020 = vmul.f32 %v1943, %v1996
      %v2021 = vmul.f32 %v1948, %v1996
      %v2022 = vmul.f32 %v1953, %v1996
      %v2023 = vmul.f32 %v1958, %v1996
      %v2024 = vmul.f32 %v1963, %v1996
      %v2025 = vmul.f32 %v1968, %v1996
      %v2026 = vmul.f32 %v1973, %v1996
      %v2027 = vmul.f32 %v1978, %v1996
      %v2028 = vmul.f32 %v1983, %v1996
      %v2029 = vmul.f32 %v1988, %v1996
      %v2030 = vld [vmem:[%s9] sm:$0x1]
      %v2032 = vlaneseq
      %v2033 = vshrl.u32 %v2032, 7
      %v2034 = vsub.s32 0, %v2033
      %v2035 = vrot.slane %v2030, %v2034
      %v2037 = vadd.f32 %v1998, %v2035
      %v2038 = vadd.f32 %v1999, %v2035
      %v2039 = vadd.f32 %v2000, %v2035
      %v2040 = vadd.f32 %v2001, %v2035
      %v2041 = vadd.f32 %v2002, %v2035
      %v2042 = vadd.f32 %v2003, %v2035
      %v2043 = vadd.f32 %v2004, %v2035
      %v2044 = vadd.f32 %v2005, %v2035
      %v2045 = vadd.f32 %v2006, %v2035
      %v2046 = vadd.f32 %v2007, %v2035
      %v2047 = vadd.f32 %v2008, %v2035
      %v2048 = vadd.f32 %v2009, %v2035
      %v2049 = vadd.f32 %v2010, %v2035
      %v2050 = vadd.f32 %v2011, %v2035
      %v2051 = vadd.f32 %v2012, %v2035
      %v2052 = vadd.f32 %v2013, %v2035
      %v2053 = vadd.f32 %v2014, %v2035
      %v2054 = vadd.f32 %v2015, %v2035
      %v2055 = vadd.f32 %v2016, %v2035
      %v2056 = vadd.f32 %v2017, %v2035
      %v2057 = vadd.f32 %v2018, %v2035
      %v2058 = vadd.f32 %v2019, %v2035
      %v2059 = vadd.f32 %v2020, %v2035
      %v2060 = vadd.f32 %v2021, %v2035
      %v2061 = vadd.f32 %v2022, %v2035
      %v2062 = vadd.f32 %v2023, %v2035
      %v2063 = vadd.f32 %v2024, %v2035
      %v2064 = vadd.f32 %v2025, %v2035
      %v2065 = vadd.f32 %v2026, %v2035
      %v2066 = vadd.f32 %v2027, %v2035
      %v2067 = vadd.f32 %v2028, %v2035
      %v2068 = vadd.f32 %v2029, %v2035
      %2069 = vst [vmem:[#allocation3] sm:$0xff] %v2037
      %2070 = vst [vmem:[#allocation3 + $0x8] sm:$0xff] %v2038
      %2071 = vst [vmem:[#allocation3 + $0x10] sm:$0xff] %v2039
      %2072 = vst [vmem:[#allocation3 + $0x18] sm:$0xff] %v2040
      %2073 = vst [vmem:[#allocation3 + $0x20] sm:$0xff] %v2041
      %2074 = vst [vmem:[#allocation3 + $0x28] sm:$0xff] %v2042
      %2075 = vst [vmem:[#allocation3 + $0x30] sm:$0xff] %v2043
      %2076 = vst [vmem:[#allocation3 + $0x38] sm:$0xff] %v2044
      %2077 = vst [vmem:[#allocation3 + $0x40] sm:$0xff] %v2045
      %2078 = vst [vmem:[#allocation3 + $0x48] sm:$0xff] %v2046
      %2079 = vst [vmem:[#allocation3 + $0x50] sm:$0xff] %v2047
      %2080 = vst [vmem:[#allocation3 + $0x58] sm:$0xff] %v2048
      %2081 = vst [vmem:[#allocation3 + $0x60] sm:$0xff] %v2049
      %2082 = vst [vmem:[#allocation3 + $0x68] sm:$0xff] %v2050
      %2083 = vst [vmem:[#allocation3 + $0x70] sm:$0xff] %v2051
      %2084 = vst [vmem:[#allocation3 + $0x78] sm:$0xff] %v2052
      %2085 = vst [vmem:[#allocation3 + $0x80] sm:$0xff] %v2053
      %2086 = vst [vmem:[#allocation3 + $0x88] sm:$0xff] %v2054
      %2087 = vst [vmem:[#allocation3 + $0x90] sm:$0xff] %v2055
      %2088 = vst [vmem:[#allocation3 + $0x98] sm:$0xff] %v2056
      %2089 = vst [vmem:[#allocation3 + $0xa0] sm:$0xff] %v2057
      %2090 = vst [vmem:[#allocation3 + $0xa8] sm:$0xff] %v2058
      %2091 = vst [vmem:[#allocation3 + $0xb0] sm:$0xff] %v2059
      %2092 = vst [vmem:[#allocation3 + $0xb8] sm:$0xff] %v2060
      %2093 = vst [vmem:[#allocation3 + $0xc0] sm:$0xff] %v2061
      %2094 = vst [vmem:[#allocation3 + $0xc8] sm:$0xff] %v2062
      %2095 = vst [vmem:[#allocation3 + $0xd0] sm:$0xff] %v2063
      %2096 = vst [vmem:[#allocation3 + $0xd8] sm:$0xff] %v2064
      %2097 = vst [vmem:[#allocation3 + $0xe0] sm:$0xff] %v2065
      %2098 = vst [vmem:[#allocation3 + $0xe8] sm:$0xff] %v2066
      %2099 = vst [vmem:[#allocation3 + $0xf0] sm:$0xff] %v2067
      %2100 = vst [vmem:[#allocation3 + $0xf8] sm:$0xff] %v2068
      %v2101 = vld [vmem:[%s1] sm:$0xff]
      %v2102 = vld [vmem:[%s1 + $0x8] sm:$0xff]
      %v2103 = vld [vmem:[%s1 + $0x10] sm:$0xff]
      %v2104 = vld [vmem:[%s1 + $0x18] sm:$0xff]
      %v2105 = vld [vmem:[%s1 + $0x20] sm:$0xff]
      %v2106 = vld [vmem:[%s1 + $0x28] sm:$0xff]
      %v2107 = vld [vmem:[%s1 + $0x30] sm:$0xff]
      %v2108 = vld [vmem:[%s1 + $0x38] sm:$0xff]
      %v2109 = vld [vmem:[%s1 + $0x40] sm:$0xff]
      %v2110 = vld [vmem:[%s1 + $0x48] sm:$0xff]
      %v2111 = vld [vmem:[%s1 + $0x50] sm:$0xff]
      %v2112 = vld [vmem:[%s1 + $0x58] sm:$0xff]
      %v2113 = vld [vmem:[%s1 + $0x60] sm:$0xff]
      %v2114 = vld [vmem:[%s1 + $0x68] sm:$0xff]
      %v2115 = vld [vmem:[%s1 + $0x70] sm:$0xff]
      %v2116 = vld [vmem:[%s1 + $0x78] sm:$0xff]
      %v2117 = vld [vmem:[%s1 + $0x80] sm:$0xff]
      %v2118 = vld [vmem:[%s1 + $0x88] sm:$0xff]
      %v2119 = vld [vmem:[%s1 + $0x90] sm:$0xff]
      %v2120 = vld [vmem:[%s1 + $0x98] sm:$0xff]
      %v2121 = vld [vmem:[%s1 + $0xa0] sm:$0xff]
      %v2122 = vld [vmem:[%s1 + $0xa8] sm:$0xff]
      %v2123 = vld [vmem:[%s1 + $0xb0] sm:$0xff]
      %v2124 = vld [vmem:[%s1 + $0xb8] sm:$0xff]
      %v2125 = vld [vmem:[%s1 + $0xc0] sm:$0xff]
      %v2126 = vld [vmem:[%s1 + $0xc8] sm:$0xff]
      %v2127 = vld [vmem:[%s1 + $0xd0] sm:$0xff]
      %v2128 = vld [vmem:[%s1 + $0xd8] sm:$0xff]
      %v2129 = vld [vmem:[%s1 + $0xe0] sm:$0xff]
      %v2130 = vld [vmem:[%s1 + $0xe8] sm:$0xff]
      %v2131 = vld [vmem:[%s1 + $0xf0] sm:$0xff]
      %v2132 = vld [vmem:[%s1 + $0xf8] sm:$0xff]
      %v2133 = vld [vmem:[%s1 + $0x100] sm:$0xff]
      %v2134 = vld [vmem:[%s1 + $0x108] sm:$0xff]
      %v2135 = vld [vmem:[%s1 + $0x110] sm:$0xff]
      %v2136 = vld [vmem:[%s1 + $0x118] sm:$0xff]
      %v2137 = vld [vmem:[%s1 + $0x120] sm:$0xff]
      %v2138 = vld [vmem:[%s1 + $0x128] sm:$0xff]
      %v2139 = vld [vmem:[%s1 + $0x130] sm:$0xff]
      %v2140 = vld [vmem:[%s1 + $0x138] sm:$0xff]
      %v2141 = vld [vmem:[%s1 + $0x140] sm:$0xff]
      %v2142 = vld [vmem:[%s1 + $0x148] sm:$0xff]
      %v2143 = vld [vmem:[%s1 + $0x150] sm:$0xff]
      %v2144 = vld [vmem:[%s1 + $0x158] sm:$0xff]
      %v2145 = vld [vmem:[%s1 + $0x160] sm:$0xff]
      %v2146 = vld [vmem:[%s1 + $0x168] sm:$0xff]
      %v2147 = vld [vmem:[%s1 + $0x170] sm:$0xff]
      %v2148 = vld [vmem:[%s1 + $0x178] sm:$0xff]
      %v2149 = vld [vmem:[%s1 + $0x180] sm:$0xff]
      %v2150 = vld [vmem:[%s1 + $0x188] sm:$0xff]
      %v2151 = vld [vmem:[%s1 + $0x190] sm:$0xff]
      %v2152 = vld [vmem:[%s1 + $0x198] sm:$0xff]
      %v2153 = vld [vmem:[%s1 + $0x1a0] sm:$0xff]
      %v2154 = vld [vmem:[%s1 + $0x1a8] sm:$0xff]
      %v2155 = vld [vmem:[%s1 + $0x1b0] sm:$0xff]
      %v2156 = vld [vmem:[%s1 + $0x1b8] sm:$0xff]
      %v2157 = vld [vmem:[%s1 + $0x1c0] sm:$0xff]
      %v2158 = vld [vmem:[%s1 + $0x1c8] sm:$0xff]
      %v2159 = vld [vmem:[%s1 + $0x1d0] sm:$0xff]
      %v2160 = vld [vmem:[%s1 + $0x1d8] sm:$0xff]
      %v2161 = vld [vmem:[%s1 + $0x1e0] sm:$0xff]
      %v2162 = vld [vmem:[%s1 + $0x1e8] sm:$0xff]
      %v2163 = vld [vmem:[%s1 + $0x1f0] sm:$0xff]
      %v2164 = vld [vmem:[%s1 + $0x1f8] sm:$0xff]
      %v2165 = vld [vmem:[%s1 + $0x200] sm:$0xff]
      %v2166 = vld [vmem:[%s1 + $0x208] sm:$0xff]
      %v2167 = vld [vmem:[%s1 + $0x210] sm:$0xff]
      %v2168 = vld [vmem:[%s1 + $0x218] sm:$0xff]
      %v2169 = vld [vmem:[%s1 + $0x220] sm:$0xff]
      %v2170 = vld [vmem:[%s1 + $0x228] sm:$0xff]
      %v2171 = vld [vmem:[%s1 + $0x230] sm:$0xff]
      %v2172 = vld [vmem:[%s1 + $0x238] sm:$0xff]
      %v2173 = vld [vmem:[%s1 + $0x240] sm:$0xff]
      %v2174 = vld [vmem:[%s1 + $0x248] sm:$0xff]
      %v2175 = vld [vmem:[%s1 + $0x250] sm:$0xff]
      %v2176 = vld [vmem:[%s1 + $0x258] sm:$0xff]
      %v2177 = vld [vmem:[%s1 + $0x260] sm:$0xff]
      %v2178 = vld [vmem:[%s1 + $0x268] sm:$0xff]
      %v2179 = vld [vmem:[%s1 + $0x270] sm:$0xff]
      %v2180 = vld [vmem:[%s1 + $0x278] sm:$0xff]
      %v2181 = vld [vmem:[%s1 + $0x280] sm:$0xff]
      %v2182 = vld [vmem:[%s1 + $0x288] sm:$0xff]
      %v2183 = vld [vmem:[%s1 + $0x290] sm:$0xff]
      %v2184 = vld [vmem:[%s1 + $0x298] sm:$0xff]
      %v2185 = vld [vmem:[%s1 + $0x2a0] sm:$0xff]
      %v2186 = vld [vmem:[%s1 + $0x2a8] sm:$0xff]
      %v2187 = vld [vmem:[%s1 + $0x2b0] sm:$0xff]
      %v2188 = vld [vmem:[%s1 + $0x2b8] sm:$0xff]
      %v2189 = vld [vmem:[%s1 + $0x2c0] sm:$0xff]
      %v2190 = vld [vmem:[%s1 + $0x2c8] sm:$0xff]
      %v2191 = vld [vmem:[%s1 + $0x2d0] sm:$0xff]
      %v2192 = vld [vmem:[%s1 + $0x2d8] sm:$0xff]
      %v2193 = vld [vmem:[%s1 + $0x2e0] sm:$0xff]
      %v2194 = vld [vmem:[%s1 + $0x2e8] sm:$0xff]
      %v2195 = vld [vmem:[%s1 + $0x2f0] sm:$0xff]
      %v2196 = vld [vmem:[%s1 + $0x2f8] sm:$0xff]
      %v2197 = vld [vmem:[%s1 + $0x300] sm:$0xff]
      %v2198 = vld [vmem:[%s1 + $0x308] sm:$0xff]
      %v2199 = vld [vmem:[%s1 + $0x310] sm:$0xff]
      %v2200 = vld [vmem:[%s1 + $0x318] sm:$0xff]
      %v2201 = vld [vmem:[%s1 + $0x320] sm:$0xff]
      %v2202 = vld [vmem:[%s1 + $0x328] sm:$0xff]
      %v2203 = vld [vmem:[%s1 + $0x330] sm:$0xff]
      %v2204 = vld [vmem:[%s1 + $0x338] sm:$0xff]
      %v2205 = vld [vmem:[%s1 + $0x340] sm:$0xff]
      %v2206 = vld [vmem:[%s1 + $0x348] sm:$0xff]
      %v2207 = vld [vmem:[%s1 + $0x350] sm:$0xff]
      %v2208 = vld [vmem:[%s1 + $0x358] sm:$0xff]
      %v2209 = vld [vmem:[%s1 + $0x360] sm:$0xff]
      %v2210 = vld [vmem:[%s1 + $0x368] sm:$0xff]
      %v2211 = vld [vmem:[%s1 + $0x370] sm:$0xff]
      %v2212 = vld [vmem:[%s1 + $0x378] sm:$0xff]
      %v2213 = vld [vmem:[%s1 + $0x380] sm:$0xff]
      %v2214 = vld [vmem:[%s1 + $0x388] sm:$0xff]
      %v2215 = vld [vmem:[%s1 + $0x390] sm:$0xff]
      %v2216 = vld [vmem:[%s1 + $0x398] sm:$0xff]
      %v2217 = vld [vmem:[%s1 + $0x3a0] sm:$0xff]
      %v2218 = vld [vmem:[%s1 + $0x3a8] sm:$0xff]
      %v2219 = vld [vmem:[%s1 + $0x3b0] sm:$0xff]
      %v2220 = vld [vmem:[%s1 + $0x3b8] sm:$0xff]
      %v2221 = vld [vmem:[%s1 + $0x3c0] sm:$0xff]
      %v2222 = vld [vmem:[%s1 + $0x3c8] sm:$0xff]
      %v2223 = vld [vmem:[%s1 + $0x3d0] sm:$0xff]
      %v2224 = vld [vmem:[%s1 + $0x3d8] sm:$0xff]
      %v2225 = vld [vmem:[%s1 + $0x3e0] sm:$0xff]
      %v2226 = vld [vmem:[%s1 + $0x3e8] sm:$0xff]
      %v2227 = vld [vmem:[%s1 + $0x3f0] sm:$0xff]
      %v2228 = vld [vmem:[%s1 + $0x3f8] sm:$0xff]
      %v2229 = vld [vmem:[%s1 + $0x400] sm:$0xff]
      %v2230 = vld [vmem:[%s1 + $0x408] sm:$0xff]
      %v2231 = vld [vmem:[%s1 + $0x410] sm:$0xff]
      %v2232 = vld [vmem:[%s1 + $0x418] sm:$0xff]
      %v2233 = vld [vmem:[%s1 + $0x420] sm:$0xff]
      %v2234 = vld [vmem:[%s1 + $0x428] sm:$0xff]
      %v2235 = vld [vmem:[%s1 + $0x430] sm:$0xff]
      %v2236 = vld [vmem:[%s1 + $0x438] sm:$0xff]
      %v2237 = vld [vmem:[%s1 + $0x440] sm:$0xff]
      %v2238 = vld [vmem:[%s1 + $0x448] sm:$0xff]
      %v2239 = vld [vmem:[%s1 + $0x450] sm:$0xff]
      %v2240 = vld [vmem:[%s1 + $0x458] sm:$0xff]
      %v2241 = vld [vmem:[%s1 + $0x460] sm:$0xff]
      %v2242 = vld [vmem:[%s1 + $0x468] sm:$0xff]
      %v2243 = vld [vmem:[%s1 + $0x470] sm:$0xff]
      %v2244 = vld [vmem:[%s1 + $0x478] sm:$0xff]
      %2245 = vmatprep.subr.mxu0 0.0
      %2246 = vmatpush1.msra.mxu0 %v2101
      %2247 = vmatprep.subr.mxu0 0.0
      %2248 = vmatpush1.msra.mxu0 %v2102
      %2249 = vmatprep.subr.mxu0 0.0
      %2250 = vmatpush1.msra.mxu0 %v2103
      %2251 = vmatprep.subr.mxu0 0.0
      %2252 = vmatpush1.msra.mxu0 %v2104
      %2253 = vmatprep.subr.mxu0 0.0
      %2254 = vmatpush1.msra.mxu0 %v2105
      %2255 = vmatprep.subr.mxu0 0.0
      %2256 = vmatpush1.msra.mxu0 %v2106
      %2257 = vmatprep.subr.mxu0 0.0
      %2258 = vmatpush1.msra.mxu0 %v2107
      %2259 = vmatprep.subr.mxu0 0.0
      %2260 = vmatpush1.msra.mxu0 %v2108
      %2261 = vmatprep.subr.mxu0 0.0
      %2262 = vmatpush1.msra.mxu0 %v2109
      %2263 = vmatprep.subr.mxu0 0.0
      %2264 = vmatpush1.msra.mxu0 %v2110
      %2265 = vmatprep.subr.mxu0 0.0
      %2266 = vmatpush1.msra.mxu0 %v2111
      %2267 = vmatprep.subr.mxu0 0.0
      %2268 = vmatpush1.msra.mxu0 %v2112
      %2269 = vmatprep.subr.mxu0 0.0
      %2270 = vmatpush1.msra.mxu0 %v2113
      %2271 = vmatprep.subr.mxu0 0.0
      %2272 = vmatpush1.msra.mxu0 %v2114
      %2273 = vmatprep.subr.mxu0 0.0
      %2274 = vmatpush1.msra.mxu0 %v2115
      %2275 = vmatprep.subr.mxu0 0.0
      %2276 = vmatpush1.msra.mxu0 %v2116
      %2277 = vmatprep.subr.mxu0 0.0
      %2278 = vmatpush1.msra.mxu0 %v2117
      %2279 = vmatprep.subr.mxu0 0.0
      %2280 = vmatpush1.msra.mxu0 %v2118
      %2281 = vmatprep.subr.mxu0 0.0
      %2282 = vmatpush1.msra.mxu0 %v2119
      %2283 = vmatprep.subr.mxu0 0.0
      %2284 = vmatpush1.msra.mxu0 %v2120
      %2285 = vmatprep.subr.mxu0 0.0
      %2286 = vmatpush1.msra.mxu0 %v2121
      %2287 = vmatprep.subr.mxu0 0.0
      %2288 = vmatpush1.msra.mxu0 %v2122
      %2289 = vmatprep.subr.mxu0 0.0
      %2290 = vmatpush1.msra.mxu0 %v2123
      %2291 = vmatprep.subr.mxu0 0.0
      %2292 = vmatpush1.msra.mxu0 %v2124
      %2293 = vmatprep.subr.mxu0 0.0
      %2294 = vmatpush1.msra.mxu0 %v2125
      %2295 = vmatprep.subr.mxu0 0.0
      %2296 = vmatpush1.msra.mxu0 %v2126
      %2297 = vmatprep.subr.mxu0 0.0
      %2298 = vmatpush1.msra.mxu0 %v2127
      %2299 = vmatprep.subr.mxu0 0.0
      %2300 = vmatpush1.msra.mxu0 %v2128
      %2301 = vmatprep.subr.mxu0 0.0
      %2302 = vmatpush1.msra.mxu0 %v2129
      %2303 = vmatprep.subr.mxu0 0.0
      %2304 = vmatpush1.msra.mxu0 %v2130
      %2305 = vmatprep.subr.mxu0 0.0
      %2306 = vmatpush1.msra.mxu0 %v2131
      %2307 = vmatprep.subr.mxu0 0.0
      %2308 = vmatpush1.msra.mxu0 %v2132
      %2309 = vmatprep.mubr.f32.mxu0 %v465
      %2310 = vmatmul.mubr.f32.gmra.mrb[0].mxu0 %v360
      %v2311 = vpop.f32.mrb[0].mxu0
      %v2312 = vadd.f32 0.0, %v2311
      %v2313 = vpop.f32.mrb[0].mxu0
      %2314 = vmatprep.mubr.f32.mxu0 %v467
      %2315 = vmatmul.mubr.f32.gmra.mrb[0].mxu0 %v361
      %v2316 = vpop.f32.mrb[0].mxu0
      %v2317 = vadd.f32 0.0, %v2316
      %v2318 = vpop.f32.mrb[0].mxu0
      %2319 = vmatprep.mubr.f32.mxu0 %v470
      %2320 = vmatmul.mubr.f32.gmra.mrb[0].mxu0 %v363
      %v2321 = vpop.f32.mrb[0].mxu0
      %v2322 = vadd.f32 0.0, %v2321
      %v2323 = vpop.f32.mrb[0].mxu0
      %2324 = vmatprep.mubr.f32.mxu0 %v472
      %2325 = vmatmul.mubr.f32.gmra.mrb[0].mxu0 %v364
      %v2326 = vpop.f32.mrb[0].mxu0
      %v2327 = vadd.f32 0.0, %v2326
      %v2328 = vpop.f32.mrb[0].mxu0
      %2329 = vmatprep.mubr.f32.mxu0 %v475
      %2330 = vmatmul.mubr.f32.gmra.mrb[0].mxu0 %v366
      %v2331 = vpop.f32.mrb[0].mxu0
      %v2332 = vadd.f32 0.0, %v2331
      %v2333 = vpop.f32.mrb[0].mxu0
      %2334 = vmatprep.mubr.f32.mxu0 %v477
      %2335 = vmatmul.mubr.f32.gmra.mrb[0].mxu0 %v367
      %v2336 = vpop.f32.mrb[0].mxu0
      %v2337 = vadd.f32 0.0, %v2336
      %v2338 = vpop.f32.mrb[0].mxu0
      %2339 = vmatprep.mubr.f32.mxu0 %v480
      %2340 = vmatmul.mubr.f32.gmra.mrb[0].mxu0 %v369
      %v2341 = vpop.f32.mrb[0].mxu0
      %v2342 = vadd.f32 0.0, %v2341
      %v2343 = vpop.f32.mrb[0].mxu0
      %2344 = vmatprep.mubr.f32.mxu0 %v482
      %2345 = vmatmul.mubr.f32.gmra.mrb[0].mxu0 %v370
      %v2346 = vpop.f32.mrb[0].mxu0
      %v2347 = vadd.f32 0.0, %v2346
      %v2348 = vpop.f32.mrb[0].mxu0
      %2349 = vmatprep.mubr.f32.mxu0 %v485
      %2350 = vmatmul.mubr.f32.gmra.mrb[0].mxu0 %v372
      %v2351 = vpop.f32.mrb[0].mxu0
      %v2352 = vadd.f32 0.0, %v2351
      %v2353 = vpop.f32.mrb[0].mxu0
      %2354 = vmatprep.mubr.f32.mxu0 %v487
      %2355 = vmatmul.mubr.f32.gmra.mrb[0].mxu0 %v373
      %v2356 = vpop.f32.mrb[0].mxu0
      %v2357 = vadd.f32 0.0, %v2356
      %v2358 = vpop.f32.mrb[0].mxu0
      %2359 = vmatprep.mubr.f32.mxu0 %v490
      %2360 = vmatmul.mubr.f32.gmra.mrb[0].mxu0 %v375
      %v2361 = vpop.f32.mrb[0].mxu0
      %v2362 = vadd.f32 0.0, %v2361
      %v2363 = vpop.f32.mrb[0].mxu0
      %2364 = vmatprep.mubr.f32.mxu0 %v492
      %2365 = vmatmul.mubr.f32.gmra.mrb[0].mxu0 %v376
      %v2366 = vpop.f32.mrb[0].mxu0
      %v2367 = vadd.f32 0.0, %v2366
      %v2368 = vpop.f32.mrb[0].mxu0
      %2369 = vmatprep.mubr.f32.mxu0 %v495
      %2370 = vmatmul.mubr.f32.gmra.mrb[0].mxu0 %v378
      %v2371 = vpop.f32.mrb[0].mxu0
      %v2372 = vadd.f32 0.0, %v2371
      %v2373 = vpop.f32.mrb[0].mxu0
      %2374 = vmatprep.mubr.f32.mxu0 %v497
      %2375 = vmatmul.mubr.f32.gmra.mrb[0].mxu0 %v379
      %v2376 = vpop.f32.mrb[0].mxu0
      %v2377 = vadd.f32 0.0, %v2376
      %v2378 = vpop.f32.mrb[0].mxu0
      %2379 = vmatprep.mubr.f32.mxu0 %v500
      %2380 = vmatmul.mubr.f32.gmra.mrb[0].mxu0 %v381
      %v2381 = vpop.f32.mrb[0].mxu0
      %v2382 = vadd.f32 0.0, %v2381
      %v2383 = vpop.f32.mrb[0].mxu0
      %2384 = vmatprep.mubr.f32.mxu0 %v502
      %2385 = vmatmul.mubr.f32.gmra.mrb[0].mxu0 %v382
      %v2386 = vpop.f32.mrb[0].mxu0
      %v2387 = vadd.f32 0.0, %v2386
      %v2388 = vpop.f32.mrb[0].mxu0
      %2389 = vmatprep.mubr.f32.mxu0 %v505
      %2390 = vmatmul.mubr.f32.gmra.mrb[0].mxu0 %v384
      %v2391 = vpop.f32.mrb[0].mxu0
      %v2392 = vadd.f32 0.0, %v2391
      %v2393 = vpop.f32.mrb[0].mxu0
      %2394 = vmatprep.mubr.f32.mxu0 %v507
      %2395 = vmatmul.mubr.f32.gmra.mrb[0].mxu0 %v385
      %v2396 = vpop.f32.mrb[0].mxu0
      %v2397 = vadd.f32 0.0, %v2396
      %v2398 = vpop.f32.mrb[0].mxu0
      %2399 = vmatprep.mubr.f32.mxu0 %v510
      %2400 = vmatmul.mubr.f32.gmra.mrb[0].mxu0 %v387
      %v2401 = vpop.f32.mrb[0].mxu0
      %v2402 = vadd.f32 0.0, %v2401
      %v2403 = vpop.f32.mrb[0].mxu0
      %2404 = vmatprep.mubr.f32.mxu0 %v512
      %2405 = vmatmul.mubr.f32.gmra.mrb[0].mxu0 %v388
      %v2406 = vpop.f32.mrb[0].mxu0
      %v2407 = vadd.f32 0.0, %v2406
      %v2408 = vpop.f32.mrb[0].mxu0
      %2409 = vmatprep.mubr.f32.mxu0 %v515
      %2410 = vmatmul.mubr.f32.gmra.mrb[0].mxu0 %v390
      %v2411 = vpop.f32.mrb[0].mxu0
      %v2412 = vadd.f32 0.0, %v2411
      %v2413 = vpop.f32.mrb[0].mxu0
      %2414 = vmatprep.mubr.f32.mxu0 %v517
      %2415 = vmatmul.mubr.f32.gmra.mrb[0].mxu0 %v391
      %v2416 = vpop.f32.mrb[0].mxu0
      %v2417 = vadd.f32 0.0, %v2416
      %v2418 = vpop.f32.mrb[0].mxu0
      %2419 = vmatprep.mubr.f32.mxu0 %v520
      %2420 = vmatmul.mubr.f32.gmra.mrb[0].mxu0 %v393
      %v2421 = vpop.f32.mrb[0].mxu0
      %v2422 = vadd.f32 0.0, %v2421
      %v2423 = vpop.f32.mrb[0].mxu0
      %2424 = vmatprep.mubr.f32.mxu0 %v522
      %2425 = vmatmul.mubr.f32.gmra.mrb[0].mxu0 %v394
      %v2426 = vpop.f32.mrb[0].mxu0
      %v2427 = vadd.f32 0.0, %v2426
      %v2428 = vpop.f32.mrb[0].mxu0
      %2429 = vmatprep.mubr.f32.mxu0 %v525
      %2430 = vmatmul.mubr.f32.gmra.mrb[0].mxu0 %v396
      %v2431 = vpop.f32.mrb[0].mxu0
      %v2432 = vadd.f32 0.0, %v2431
      %v2433 = vpop.f32.mrb[0].mxu0
      %2434 = vmatprep.mubr.f32.mxu0 %v527
      %2435 = vmatmul.mubr.f32.gmra.mrb[0].mxu0 %v397
      %v2436 = vpop.f32.mrb[0].mxu0
      %v2437 = vadd.f32 0.0, %v2436
      %v2438 = vpop.f32.mrb[0].mxu0
      %2439 = vmatprep.mubr.f32.mxu0 %v530
      %2440 = vmatmul.mubr.f32.gmra.mrb[0].mxu0 %v399
      %v2441 = vpop.f32.mrb[0].mxu0
      %v2442 = vadd.f32 0.0, %v2441
      %v2443 = vpop.f32.mrb[0].mxu0
      %2444 = vmatprep.mubr.f32.mxu0 %v532
      %2445 = vmatmul.mubr.f32.gmra.mrb[0].mxu0 %v400
      %v2446 = vpop.f32.mrb[0].mxu0
      %v2447 = vadd.f32 0.0, %v2446
      %v2448 = vpop.f32.mrb[0].mxu0
      %2449 = vmatprep.mubr.f32.mxu0 %v535
      %2450 = vmatmul.mubr.f32.gmra.mrb[0].mxu0 %v402
      %v2451 = vpop.f32.mrb[0].mxu0
      %v2452 = vadd.f32 0.0, %v2451
      %v2453 = vpop.f32.mrb[0].mxu0
      %2454 = vmatprep.mubr.f32.mxu0 %v537
      %2455 = vmatmul.mubr.f32.gmra.mrb[0].mxu0 %v403
      %v2456 = vpop.f32.mrb[0].mxu0
      %v2457 = vadd.f32 0.0, %v2456
      %v2458 = vpop.f32.mrb[0].mxu0
      %2459 = vmatprep.mubr.f32.mxu0 %v540
      %2460 = vmatmul.mubr.f32.gmra.mrb[0].mxu0 %v405
      %v2461 = vpop.f32.mrb[0].mxu0
      %v2462 = vadd.f32 0.0, %v2461
      %v2463 = vpop.f32.mrb[0].mxu0
      %2464 = vmatprep.mubr.f32.mxu0 %v542
      %2465 = vmatmul.mubr.f32.gmra.mrb[0].mxu0 %v406
      %v2466 = vpop.f32.mrb[0].mxu0
      %v2467 = vadd.f32 0.0, %v2466
      %v2468 = vpop.f32.mrb[0].mxu0
      %2469 = vdwg.mxu0
      %2470 = vmatprep.subr.mxu0 0.0
      %2471 = vmatpush1.msra.mxu0 %v2133
      %2472 = vmatprep.subr.mxu0 0.0
      %2473 = vmatpush1.msra.mxu0 %v2134
      %2474 = vmatprep.subr.mxu0 0.0
      %2475 = vmatpush1.msra.mxu0 %v2135
      %2476 = vmatprep.subr.mxu0 0.0
      %2477 = vmatpush1.msra.mxu0 %v2136
      %2478 = vmatprep.subr.mxu0 0.0
      %2479 = vmatpush1.msra.mxu0 %v2137
      %2480 = vmatprep.subr.mxu0 0.0
      %2481 = vmatpush1.msra.mxu0 %v2138
      %2482 = vmatprep.subr.mxu0 0.0
      %2483 = vmatpush1.msra.mxu0 %v2139
      %2484 = vmatprep.subr.mxu0 0.0
      %2485 = vmatpush1.msra.mxu0 %v2140
      %2486 = vmatprep.subr.mxu0 0.0
      %2487 = vmatpush1.msra.mxu0 %v2141
      %2488 = vmatprep.subr.mxu0 0.0
      %2489 = vmatpush1.msra.mxu0 %v2142
      %2490 = vmatprep.subr.mxu0 0.0
      %2491 = vmatpush1.msra.mxu0 %v2143
      %2492 = vmatprep.subr.mxu0 0.0
      %2493 = vmatpush1.msra.mxu0 %v2144
      %2494 = vmatprep.subr.mxu0 0.0
      %2495 = vmatpush1.msra.mxu0 %v2145
      %2496 = vmatprep.subr.mxu0 0.0
      %2497 = vmatpush1.msra.mxu0 %v2146
      %2498 = vmatprep.subr.mxu0 0.0
      %2499 = vmatpush1.msra.mxu0 %v2147
      %2500 = vmatprep.subr.mxu0 0.0
      %2501 = vmatpush1.msra.mxu0 %v2148
      %2502 = vmatprep.subr.mxu0 0.0
      %2503 = vmatpush1.msra.mxu0 %v2149
      %2504 = vmatprep.subr.mxu0 0.0
      %2505 = vmatpush1.msra.mxu0 %v2150
      %2506 = vmatprep.subr.mxu0 0.0
      %2507 = vmatpush1.msra.mxu0 %v2151
      %2508 = vmatprep.subr.mxu0 0.0
      %2509 = vmatpush1.msra.mxu0 %v2152
      %2510 = vmatprep.subr.mxu0 0.0
      %2511 = vmatpush1.msra.mxu0 %v2153
      %2512 = vmatprep.subr.mxu0 0.0
      %2513 = vmatpush1.msra.mxu0 %v2154
      %2514 = vmatprep.subr.mxu0 0.0
      %2515 = vmatpush1.msra.mxu0 %v2155
      %2516 = vmatprep.subr.mxu0 0.0
      %2517 = vmatpush1.msra.mxu0 %v2156
      %2518 = vmatprep.subr.mxu0 0.0
      %2519 = vmatpush1.msra.mxu0 %v2157
      %2520 = vmatprep.subr.mxu0 0.0
      %2521 = vmatpush1.msra.mxu0 %v2158
      %2522 = vmatprep.subr.mxu0 0.0
      %2523 = vmatpush1.msra.mxu0 %v2159
      %2524 = vmatprep.subr.mxu0 0.0
      %2525 = vmatpush1.msra.mxu0 %v2160
      %2526 = vmatprep.subr.mxu0 0.0
      %2527 = vmatpush1.msra.mxu0 %v2161
      %2528 = vmatprep.subr.mxu0 0.0
      %2529 = vmatpush1.msra.mxu0 %v2162
      %2530 = vmatprep.subr.mxu0 0.0
      %2531 = vmatpush1.msra.mxu0 %v2163
      %2532 = vmatprep.subr.mxu0 0.0
      %2533 = vmatpush1.msra.mxu0 %v2164
      %2534 = vmatprep.mubr.f32.mxu0 %v363
      %2535 = vmatmul.mubr.f32.gmra.mrb[0].mxu0 %v578
      %v2536 = vpop.f32.mrb[0].mxu0
      %v2537 = vadd.f32 %v2312, %v2536
      %v2538 = vpop.f32.mrb[0].mxu0
      %2539 = vmatprep.mubr.f32.mxu0 %v364
      %2540 = vmatmul.mubr.f32.gmra.mrb[0].mxu0 %v580
      %v2541 = vpop.f32.mrb[0].mxu0
      %v2542 = vadd.f32 %v2317, %v2541
      %v2543 = vpop.f32.mrb[0].mxu0
      %2544 = vmatprep.mubr.f32.mxu0 %v366
      %2545 = vmatmul.mubr.f32.gmra.mrb[0].mxu0 %v583
      %v2546 = vpop.f32.mrb[0].mxu0
      %v2547 = vadd.f32 %v2322, %v2546
      %v2548 = vpop.f32.mrb[0].mxu0
      %2549 = vmatprep.mubr.f32.mxu0 %v367
      %2550 = vmatmul.mubr.f32.gmra.mrb[0].mxu0 %v585
      %v2551 = vpop.f32.mrb[0].mxu0
      %v2552 = vadd.f32 %v2327, %v2551
      %v2553 = vpop.f32.mrb[0].mxu0
      %2554 = vmatprep.mubr.f32.mxu0 %v369
      %2555 = vmatmul.mubr.f32.gmra.mrb[0].mxu0 %v588
      %v2556 = vpop.f32.mrb[0].mxu0
      %v2557 = vadd.f32 %v2332, %v2556
      %v2558 = vpop.f32.mrb[0].mxu0
      %2559 = vmatprep.mubr.f32.mxu0 %v370
      %2560 = vmatmul.mubr.f32.gmra.mrb[0].mxu0 %v590
      %v2561 = vpop.f32.mrb[0].mxu0
      %v2562 = vadd.f32 %v2337, %v2561
      %v2563 = vpop.f32.mrb[0].mxu0
      %2564 = vmatprep.mubr.f32.mxu0 %v372
      %2565 = vmatmul.mubr.f32.gmra.mrb[0].mxu0 %v593
      %v2566 = vpop.f32.mrb[0].mxu0
      %v2567 = vadd.f32 %v2342, %v2566
      %v2568 = vpop.f32.mrb[0].mxu0
      %2569 = vmatprep.mubr.f32.mxu0 %v373
      %2570 = vmatmul.mubr.f32.gmra.mrb[0].mxu0 %v595
      %v2571 = vpop.f32.mrb[0].mxu0
      %v2572 = vadd.f32 %v2347, %v2571
      %v2573 = vpop.f32.mrb[0].mxu0
      %2574 = vmatprep.mubr.f32.mxu0 %v375
      %2575 = vmatmul.mubr.f32.gmra.mrb[0].mxu0 %v598
      %v2576 = vpop.f32.mrb[0].mxu0
      %v2577 = vadd.f32 %v2352, %v2576
      %v2578 = vpop.f32.mrb[0].mxu0
      %2579 = vmatprep.mubr.f32.mxu0 %v376
      %2580 = vmatmul.mubr.f32.gmra.mrb[0].mxu0 %v600
      %v2581 = vpop.f32.mrb[0].mxu0
      %v2582 = vadd.f32 %v2357, %v2581
      %v2583 = vpop.f32.mrb[0].mxu0
      %2584 = vmatprep.mubr.f32.mxu0 %v378
      %2585 = vmatmul.mubr.f32.gmra.mrb[0].mxu0 %v603
      %v2586 = vpop.f32.mrb[0].mxu0
      %v2587 = vadd.f32 %v2362, %v2586
      %v2588 = vpop.f32.mrb[0].mxu0
      %2589 = vmatprep.mubr.f32.mxu0 %v379
      %2590 = vmatmul.mubr.f32.gmra.mrb[0].mxu0 %v605
      %v2591 = vpop.f32.mrb[0].mxu0
      %v2592 = vadd.f32 %v2367, %v2591
      %v2593 = vpop.f32.mrb[0].mxu0
      %2594 = vmatprep.mubr.f32.mxu0 %v381
      %2595 = vmatmul.mubr.f32.gmra.mrb[0].mxu0 %v608
      %v2596 = vpop.f32.mrb[0].mxu0
      %v2597 = vadd.f32 %v2372, %v2596
      %v2598 = vpop.f32.mrb[0].mxu0
      %2599 = vmatprep.mubr.f32.mxu0 %v382
      %2600 = vmatmul.mubr.f32.gmra.mrb[0].mxu0 %v610
      %v2601 = vpop.f32.mrb[0].mxu0
      %v2602 = vadd.f32 %v2377, %v2601
      %v2603 = vpop.f32.mrb[0].mxu0
      %2604 = vmatprep.mubr.f32.mxu0 %v384
      %2605 = vmatmul.mubr.f32.gmra.mrb[0].mxu0 %v613
      %v2606 = vpop.f32.mrb[0].mxu0
      %v2607 = vadd.f32 %v2382, %v2606
      %v2608 = vpop.f32.mrb[0].mxu0
      %2609 = vmatprep.mubr.f32.mxu0 %v385
      %2610 = vmatmul.mubr.f32.gmra.mrb[0].mxu0 %v615
      %v2611 = vpop.f32.mrb[0].mxu0
      %v2612 = vadd.f32 %v2387, %v2611
      %v2613 = vpop.f32.mrb[0].mxu0
      %2614 = vmatprep.mubr.f32.mxu0 %v387
      %2615 = vmatmul.mubr.f32.gmra.mrb[0].mxu0 %v618
      %v2616 = vpop.f32.mrb[0].mxu0
      %v2617 = vadd.f32 %v2392, %v2616
      %v2618 = vpop.f32.mrb[0].mxu0
      %2619 = vmatprep.mubr.f32.mxu0 %v388
      %2620 = vmatmul.mubr.f32.gmra.mrb[0].mxu0 %v620
      %v2621 = vpop.f32.mrb[0].mxu0
      %v2622 = vadd.f32 %v2397, %v2621
      %v2623 = vpop.f32.mrb[0].mxu0
      %2624 = vmatprep.mubr.f32.mxu0 %v390
      %2625 = vmatmul.mubr.f32.gmra.mrb[0].mxu0 %v623
      %v2626 = vpop.f32.mrb[0].mxu0
      %v2627 = vadd.f32 %v2402, %v2626
      %v2628 = vpop.f32.mrb[0].mxu0
      %2629 = vmatprep.mubr.f32.mxu0 %v391
      %2630 = vmatmul.mubr.f32.gmra.mrb[0].mxu0 %v625
      %v2631 = vpop.f32.mrb[0].mxu0
      %v2632 = vadd.f32 %v2407, %v2631
      %v2633 = vpop.f32.mrb[0].mxu0
      %2634 = vmatprep.mubr.f32.mxu0 %v393
      %2635 = vmatmul.mubr.f32.gmra.mrb[0].mxu0 %v628
      %v2636 = vpop.f32.mrb[0].mxu0
      %v2637 = vadd.f32 %v2412, %v2636
      %v2638 = vpop.f32.mrb[0].mxu0
      %2639 = vmatprep.mubr.f32.mxu0 %v394
      %2640 = vmatmul.mubr.f32.gmra.mrb[0].mxu0 %v630
      %v2641 = vpop.f32.mrb[0].mxu0
      %v2642 = vadd.f32 %v2417, %v2641
      %v2643 = vpop.f32.mrb[0].mxu0
      %2644 = vmatprep.mubr.f32.mxu0 %v396
      %2645 = vmatmul.mubr.f32.gmra.mrb[0].mxu0 %v633
      %v2646 = vpop.f32.mrb[0].mxu0
      %v2647 = vadd.f32 %v2422, %v2646
      %v2648 = vpop.f32.mrb[0].mxu0
      %2649 = vmatprep.mubr.f32.mxu0 %v397
      %2650 = vmatmul.mubr.f32.gmra.mrb[0].mxu0 %v635
      %v2651 = vpop.f32.mrb[0].mxu0
      %v2652 = vadd.f32 %v2427, %v2651
      %v2653 = vpop.f32.mrb[0].mxu0
      %2654 = vmatprep.mubr.f32.mxu0 %v399
      %2655 = vmatmul.mubr.f32.gmra.mrb[0].mxu0 %v638
      %v2656 = vpop.f32.mrb[0].mxu0
      %v2657 = vadd.f32 %v2432, %v2656
      %v2658 = vpop.f32.mrb[0].mxu0
      %2659 = vmatprep.mubr.f32.mxu0 %v400
      %2660 = vmatmul.mubr.f32.gmra.mrb[0].mxu0 %v640
      %v2661 = vpop.f32.mrb[0].mxu0
      %v2662 = vadd.f32 %v2437, %v2661
      %v2663 = vpop.f32.mrb[0].mxu0
      %2664 = vmatprep.mubr.f32.mxu0 %v402
      %2665 = vmatmul.mubr.f32.gmra.mrb[0].mxu0 %v643
      %v2666 = vpop.f32.mrb[0].mxu0
      %v2667 = vadd.f32 %v2442, %v2666
      %v2668 = vpop.f32.mrb[0].mxu0
      %2669 = vmatprep.mubr.f32.mxu0 %v403
      %2670 = vmatmul.mubr.f32.gmra.mrb[0].mxu0 %v645
      %v2671 = vpop.f32.mrb[0].mxu0
      %v2672 = vadd.f32 %v2447, %v2671
      %v2673 = vpop.f32.mrb[0].mxu0
      %2674 = vmatprep.mubr.f32.mxu0 %v405
      %2675 = vmatmul.mubr.f32.gmra.mrb[0].mxu0 %v648
      %v2676 = vpop.f32.mrb[0].mxu0
      %v2677 = vadd.f32 %v2452, %v2676
      %v2678 = vpop.f32.mrb[0].mxu0
      %2679 = vmatprep.mubr.f32.mxu0 %v406
      %2680 = vmatmul.mubr.f32.gmra.mrb[0].mxu0 %v650
      %v2681 = vpop.f32.mrb[0].mxu0
      %v2682 = vadd.f32 %v2457, %v2681
      %v2683 = vpop.f32.mrb[0].mxu0
      %2684 = vmatprep.mubr.f32.mxu0 %v408
      %2685 = vmatmul.mubr.f32.gmra.mrb[0].mxu0 %v653
      %v2686 = vpop.f32.mrb[0].mxu0
      %v2687 = vadd.f32 %v2462, %v2686
      %v2688 = vpop.f32.mrb[0].mxu0
      %2689 = vmatprep.mubr.f32.mxu0 %v409
      %2690 = vmatmul.mubr.f32.gmra.mrb[0].mxu0 %v655
      %v2691 = vpop.f32.mrb[0].mxu0
      %v2692 = vadd.f32 %v2467, %v2691
      %v2693 = vpop.f32.mrb[0].mxu0
      %2694 = vdwg.mxu0
      %2695 = vmatprep.subr.mxu0 0.0
      %2696 = vmatpush1.msra.mxu0 %v2165
      %2697 = vmatprep.subr.mxu0 0.0
      %2698 = vmatpush1.msra.mxu0 %v2166
      %2699 = vmatprep.subr.mxu0 0.0
      %2700 = vmatpush1.msra.mxu0 %v2167
      %2701 = vmatprep.subr.mxu0 0.0
      %2702 = vmatpush1.msra.mxu0 %v2168
      %2703 = vmatprep.subr.mxu0 0.0
      %2704 = vmatpush1.msra.mxu0 %v2169
      %2705 = vmatprep.subr.mxu0 0.0
      %2706 = vmatpush1.msra.mxu0 %v2170
      %2707 = vmatprep.subr.mxu0 0.0
      %2708 = vmatpush1.msra.mxu0 %v2171
      %2709 = vmatprep.subr.mxu0 0.0
      %2710 = vmatpush1.msra.mxu0 %v2172
      %2711 = vmatprep.subr.mxu0 0.0
      %2712 = vmatpush1.msra.mxu0 %v2173
      %2713 = vmatprep.subr.mxu0 0.0
      %2714 = vmatpush1.msra.mxu0 %v2174
      %2715 = vmatprep.subr.mxu0 0.0
      %2716 = vmatpush1.msra.mxu0 %v2175
      %2717 = vmatprep.subr.mxu0 0.0
      %2718 = vmatpush1.msra.mxu0 %v2176
      %2719 = vmatprep.subr.mxu0 0.0
      %2720 = vmatpush1.msra.mxu0 %v2177
      %2721 = vmatprep.subr.mxu0 0.0
      %2722 = vmatpush1.msra.mxu0 %v2178
      %2723 = vmatprep.subr.mxu0 0.0
      %2724 = vmatpush1.msra.mxu0 %v2179
      %2725 = vmatprep.subr.mxu0 0.0
      %2726 = vmatpush1.msra.mxu0 %v2180
      %2727 = vmatprep.subr.mxu0 0.0
      %2728 = vmatpush1.msra.mxu0 %v2181
      %2729 = vmatprep.subr.mxu0 0.0
      %2730 = vmatpush1.msra.mxu0 %v2182
      %2731 = vmatprep.subr.mxu0 0.0
      %2732 = vmatpush1.msra.mxu0 %v2183
      %2733 = vmatprep.subr.mxu0 0.0
      %2734 = vmatpush1.msra.mxu0 %v2184
      %2735 = vmatprep.subr.mxu0 0.0
      %2736 = vmatpush1.msra.mxu0 %v2185
      %2737 = vmatprep.subr.mxu0 0.0
      %2738 = vmatpush1.msra.mxu0 %v2186
      %2739 = vmatprep.subr.mxu0 0.0
      %2740 = vmatpush1.msra.mxu0 %v2187
      %2741 = vmatprep.subr.mxu0 0.0
      %2742 = vmatpush1.msra.mxu0 %v2188
      %2743 = vmatprep.subr.mxu0 0.0
      %2744 = vmatpush1.msra.mxu0 %v2189
      %2745 = vmatprep.subr.mxu0 0.0
      %2746 = vmatpush1.msra.mxu0 %v2190
      %2747 = vmatprep.subr.mxu0 0.0
      %2748 = vmatpush1.msra.mxu0 %v2191
      %2749 = vmatprep.subr.mxu0 0.0
      %2750 = vmatpush1.msra.mxu0 %v2192
      %2751 = vmatprep.subr.mxu0 0.0
      %2752 = vmatpush1.msra.mxu0 %v2193
      %2753 = vmatprep.subr.mxu0 0.0
      %2754 = vmatpush1.msra.mxu0 %v2194
      %2755 = vmatprep.subr.mxu0 0.0
      %2756 = vmatpush1.msra.mxu0 %v2195
      %2757 = vmatprep.subr.mxu0 0.0
      %2758 = vmatpush1.msra.mxu0 %v2196
      %2759 = vmatprep.mubr.f32.mxu0 %v583
      %2760 = vmatmul.mubr.f32.gmra.mrb[0].mxu0 %v470
      %v2761 = vpop.f32.mrb[0].mxu0
      %v2762 = vadd.f32 %v2537, %v2761
      %v2763 = vpop.f32.mrb[0].mxu0
      %2764 = vmatprep.mubr.f32.mxu0 %v585
      %2765 = vmatmul.mubr.f32.gmra.mrb[0].mxu0 %v472
      %v2766 = vpop.f32.mrb[0].mxu0
      %v2767 = vadd.f32 %v2542, %v2766
      %v2768 = vpop.f32.mrb[0].mxu0
      %2769 = vmatprep.mubr.f32.mxu0 %v588
      %2770 = vmatmul.mubr.f32.gmra.mrb[0].mxu0 %v475
      %v2771 = vpop.f32.mrb[0].mxu0
      %v2772 = vadd.f32 %v2547, %v2771
      %v2773 = vpop.f32.mrb[0].mxu0
      %2774 = vmatprep.mubr.f32.mxu0 %v590
      %2775 = vmatmul.mubr.f32.gmra.mrb[0].mxu0 %v477
      %v2776 = vpop.f32.mrb[0].mxu0
      %v2777 = vadd.f32 %v2552, %v2776
      %v2778 = vpop.f32.mrb[0].mxu0
      %2779 = vmatprep.mubr.f32.mxu0 %v593
      %2780 = vmatmul.mubr.f32.gmra.mrb[0].mxu0 %v480
      %v2781 = vpop.f32.mrb[0].mxu0
      %v2782 = vadd.f32 %v2557, %v2781
      %v2783 = vpop.f32.mrb[0].mxu0
      %2784 = vmatprep.mubr.f32.mxu0 %v595
      %2785 = vmatmul.mubr.f32.gmra.mrb[0].mxu0 %v482
      %v2786 = vpop.f32.mrb[0].mxu0
      %v2787 = vadd.f32 %v2562, %v2786
      %v2788 = vpop.f32.mrb[0].mxu0
      %2789 = vmatprep.mubr.f32.mxu0 %v598
      %2790 = vmatmul.mubr.f32.gmra.mrb[0].mxu0 %v485
      %v2791 = vpop.f32.mrb[0].mxu0
      %v2792 = vadd.f32 %v2567, %v2791
      %v2793 = vpop.f32.mrb[0].mxu0
      %2794 = vmatprep.mubr.f32.mxu0 %v600
      %2795 = vmatmul.mubr.f32.gmra.mrb[0].mxu0 %v487
      %v2796 = vpop.f32.mrb[0].mxu0
      %v2797 = vadd.f32 %v2572, %v2796
      %v2798 = vpop.f32.mrb[0].mxu0
      %2799 = vmatprep.mubr.f32.mxu0 %v603
      %2800 = vmatmul.mubr.f32.gmra.mrb[0].mxu0 %v490
      %v2801 = vpop.f32.mrb[0].mxu0
      %v2802 = vadd.f32 %v2577, %v2801
      %v2803 = vpop.f32.mrb[0].mxu0
      %2804 = vmatprep.mubr.f32.mxu0 %v605
      %2805 = vmatmul.mubr.f32.gmra.mrb[0].mxu0 %v492
      %v2806 = vpop.f32.mrb[0].mxu0
      %v2807 = vadd.f32 %v2582, %v2806
      %v2808 = vpop.f32.mrb[0].mxu0
      %2809 = vmatprep.mubr.f32.mxu0 %v608
      %2810 = vmatmul.mubr.f32.gmra.mrb[0].mxu0 %v495
      %v2811 = vpop.f32.mrb[0].mxu0
      %v2812 = vadd.f32 %v2587, %v2811
      %v2813 = vpop.f32.mrb[0].mxu0
      %2814 = vmatprep.mubr.f32.mxu0 %v610
      %2815 = vmatmul.mubr.f32.gmra.mrb[0].mxu0 %v497
      %v2816 = vpop.f32.mrb[0].mxu0
      %v2817 = vadd.f32 %v2592, %v2816
      %v2818 = vpop.f32.mrb[0].mxu0
      %2819 = vmatprep.mubr.f32.mxu0 %v613
      %2820 = vmatmul.mubr.f32.gmra.mrb[0].mxu0 %v500
      %v2821 = vpop.f32.mrb[0].mxu0
      %v2822 = vadd.f32 %v2597, %v2821
      %v2823 = vpop.f32.mrb[0].mxu0
      %2824 = vmatprep.mubr.f32.mxu0 %v615
      %2825 = vmatmul.mubr.f32.gmra.mrb[0].mxu0 %v502
      %v2826 = vpop.f32.mrb[0].mxu0
      %v2827 = vadd.f32 %v2602, %v2826
      %v2828 = vpop.f32.mrb[0].mxu0
      %2829 = vmatprep.mubr.f32.mxu0 %v618
      %2830 = vmatmul.mubr.f32.gmra.mrb[0].mxu0 %v505
      %v2831 = vpop.f32.mrb[0].mxu0
      %v2832 = vadd.f32 %v2607, %v2831
      %v2833 = vpop.f32.mrb[0].mxu0
      %2834 = vmatprep.mubr.f32.mxu0 %v620
      %2835 = vmatmul.mubr.f32.gmra.mrb[0].mxu0 %v507
      %v2836 = vpop.f32.mrb[0].mxu0
      %v2837 = vadd.f32 %v2612, %v2836
      %v2838 = vpop.f32.mrb[0].mxu0
      %2839 = vmatprep.mubr.f32.mxu0 %v623
      %2840 = vmatmul.mubr.f32.gmra.mrb[0].mxu0 %v510
      %v2841 = vpop.f32.mrb[0].mxu0
      %v2842 = vadd.f32 %v2617, %v2841
      %v2843 = vpop.f32.mrb[0].mxu0
      %2844 = vmatprep.mubr.f32.mxu0 %v625
      %2845 = vmatmul.mubr.f32.gmra.mrb[0].mxu0 %v512
      %v2846 = vpop.f32.mrb[0].mxu0
      %v2847 = vadd.f32 %v2622, %v2846
      %v2848 = vpop.f32.mrb[0].mxu0
      %2849 = vmatprep.mubr.f32.mxu0 %v628
      %2850 = vmatmul.mubr.f32.gmra.mrb[0].mxu0 %v515
      %v2851 = vpop.f32.mrb[0].mxu0
      %v2852 = vadd.f32 %v2627, %v2851
      %v2853 = vpop.f32.mrb[0].mxu0
      %2854 = vmatprep.mubr.f32.mxu0 %v630
      %2855 = vmatmul.mubr.f32.gmra.mrb[0].mxu0 %v517
      %v2856 = vpop.f32.mrb[0].mxu0
      %v2857 = vadd.f32 %v2632, %v2856
      %v2858 = vpop.f32.mrb[0].mxu0
      %2859 = vmatprep.mubr.f32.mxu0 %v633
      %2860 = vmatmul.mubr.f32.gmra.mrb[0].mxu0 %v520
      %v2861 = vpop.f32.mrb[0].mxu0
      %v2862 = vadd.f32 %v2637, %v2861
      %v2863 = vpop.f32.mrb[0].mxu0
      %2864 = vmatprep.mubr.f32.mxu0 %v635
      %2865 = vmatmul.mubr.f32.gmra.mrb[0].mxu0 %v522
      %v2866 = vpop.f32.mrb[0].mxu0
      %v2867 = vadd.f32 %v2642, %v2866
      %v2868 = vpop.f32.mrb[0].mxu0
      %2869 = vmatprep.mubr.f32.mxu0 %v638
      %2870 = vmatmul.mubr.f32.gmra.mrb[0].mxu0 %v525
      %v2871 = vpop.f32.mrb[0].mxu0
      %v2872 = vadd.f32 %v2647, %v2871
      %v2873 = vpop.f32.mrb[0].mxu0
      %2874 = vmatprep.mubr.f32.mxu0 %v640
      %2875 = vmatmul.mubr.f32.gmra.mrb[0].mxu0 %v527
      %v2876 = vpop.f32.mrb[0].mxu0
      %v2877 = vadd.f32 %v2652, %v2876
      %v2878 = vpop.f32.mrb[0].mxu0
      %2879 = vmatprep.mubr.f32.mxu0 %v643
      %2880 = vmatmul.mubr.f32.gmra.mrb[0].mxu0 %v530
      %v2881 = vpop.f32.mrb[0].mxu0
      %v2882 = vadd.f32 %v2657, %v2881
      %v2883 = vpop.f32.mrb[0].mxu0
      %2884 = vmatprep.mubr.f32.mxu0 %v645
      %2885 = vmatmul.mubr.f32.gmra.mrb[0].mxu0 %v532
      %v2886 = vpop.f32.mrb[0].mxu0
      %v2887 = vadd.f32 %v2662, %v2886
      %v2888 = vpop.f32.mrb[0].mxu0
      %2889 = vmatprep.mubr.f32.mxu0 %v648
      %2890 = vmatmul.mubr.f32.gmra.mrb[0].mxu0 %v535
      %v2891 = vpop.f32.mrb[0].mxu0
      %v2892 = vadd.f32 %v2667, %v2891
      %v2893 = vpop.f32.mrb[0].mxu0
      %2894 = vmatprep.mubr.f32.mxu0 %v650
      %2895 = vmatmul.mubr.f32.gmra.mrb[0].mxu0 %v537
      %v2896 = vpop.f32.mrb[0].mxu0
      %v2897 = vadd.f32 %v2672, %v2896
      %v2898 = vpop.f32.mrb[0].mxu0
      %2899 = vmatprep.mubr.f32.mxu0 %v653
      %2900 = vmatmul.mubr.f32.gmra.mrb[0].mxu0 %v540
      %v2901 = vpop.f32.mrb[0].mxu0
      %v2902 = vadd.f32 %v2677, %v2901
      %v2903 = vpop.f32.mrb[0].mxu0
      %2904 = vmatprep.mubr.f32.mxu0 %v655
      %2905 = vmatmul.mubr.f32.gmra.mrb[0].mxu0 %v542
      %v2906 = vpop.f32.mrb[0].mxu0
      %v2907 = vadd.f32 %v2682, %v2906
      %v2908 = vpop.f32.mrb[0].mxu0
      %2909 = vmatprep.mubr.f32.mxu0 %v700
      %2910 = vmatmul.mubr.f32.gmra.mrb[0].mxu0 %v693
      %v2911 = vpop.f32.mrb[0].mxu0
      %v2912 = vadd.f32 %v2687, %v2911
      %v2913 = vpop.f32.mrb[0].mxu0
      %2914 = vmatprep.mubr.f32.mxu0 %v702
      %2915 = vmatmul.mubr.f32.gmra.mrb[0].mxu0 %v695
      %v2916 = vpop.f32.mrb[0].mxu0
      %v2917 = vadd.f32 %v2692, %v2916
      %v2918 = vpop.f32.mrb[0].mxu0
      %2919 = vdwg.mxu0
      %2920 = vmatprep.subr.mxu0 0.0
      %2921 = vmatpush1.msra.mxu0 %v2197
      %2922 = vmatprep.subr.mxu0 0.0
      %2923 = vmatpush1.msra.mxu0 %v2198
      %2924 = vmatprep.subr.mxu0 0.0
      %2925 = vmatpush1.msra.mxu0 %v2199
      %2926 = vmatprep.subr.mxu0 0.0
      %2927 = vmatpush1.msra.mxu0 %v2200
      %2928 = vmatprep.subr.mxu0 0.0
      %2929 = vmatpush1.msra.mxu0 %v2201
      %2930 = vmatprep.subr.mxu0 0.0
      %2931 = vmatpush1.msra.mxu0 %v2202
      %2932 = vmatprep.subr.mxu0 0.0
      %2933 = vmatpush1.msra.mxu0 %v2203
      %2934 = vmatprep.subr.mxu0 0.0
      %2935 = vmatpush1.msra.mxu0 %v2204
      %2936 = vmatprep.subr.mxu0 0.0
      %2937 = vmatpush1.msra.mxu0 %v2205
      %2938 = vmatprep.subr.mxu0 0.0
      %2939 = vmatpush1.msra.mxu0 %v2206
      %2940 = vmatprep.subr.mxu0 0.0
      %2941 = vmatpush1.msra.mxu0 %v2207
      %2942 = vmatprep.subr.mxu0 0.0
      %2943 = vmatpush1.msra.mxu0 %v2208
      %2944 = vmatprep.subr.mxu0 0.0
      %2945 = vmatpush1.msra.mxu0 %v2209
      %2946 = vmatprep.subr.mxu0 0.0
      %2947 = vmatpush1.msra.mxu0 %v2210
      %2948 = vmatprep.subr.mxu0 0.0
      %2949 = vmatpush1.msra.mxu0 %v2211
      %2950 = vmatprep.subr.mxu0 0.0
      %2951 = vmatpush1.msra.mxu0 %v2212
      %2952 = vmatprep.subr.mxu0 0.0
      %2953 = vmatpush1.msra.mxu0 %v2213
      %2954 = vmatprep.subr.mxu0 0.0
      %2955 = vmatpush1.msra.mxu0 %v2214
      %2956 = vmatprep.subr.mxu0 0.0
      %2957 = vmatpush1.msra.mxu0 %v2215
      %2958 = vmatprep.subr.mxu0 0.0
      %2959 = vmatpush1.msra.mxu0 %v2216
      %2960 = vmatprep.subr.mxu0 0.0
      %2961 = vmatpush1.msra.mxu0 %v2217
      %2962 = vmatprep.subr.mxu0 0.0
      %2963 = vmatpush1.msra.mxu0 %v2218
      %2964 = vmatprep.subr.mxu0 0.0
      %2965 = vmatpush1.msra.mxu0 %v2219
      %2966 = vmatprep.subr.mxu0 0.0
      %2967 = vmatpush1.msra.mxu0 %v2220
      %2968 = vmatprep.subr.mxu0 0.0
      %2969 = vmatpush1.msra.mxu0 %v2221
      %2970 = vmatprep.subr.mxu0 0.0
      %2971 = vmatpush1.msra.mxu0 %v2222
      %2972 = vmatprep.subr.mxu0 0.0
      %2973 = vmatpush1.msra.mxu0 %v2223
      %2974 = vmatprep.subr.mxu0 0.0
      %2975 = vmatpush1.msra.mxu0 %v2224
      %2976 = vmatprep.subr.mxu0 0.0
      %2977 = vmatpush1.msra.mxu0 %v2225
      %2978 = vmatprep.subr.mxu0 0.0
      %2979 = vmatpush1.msra.mxu0 %v2226
      %2980 = vmatprep.subr.mxu0 0.0
      %2981 = vmatpush1.msra.mxu0 %v2227
      %2982 = vmatprep.subr.mxu0 0.0
      %2983 = vmatpush1.msra.mxu0 %v2228
      %2984 = vmatprep.mubr.f32.mxu0 %v475
      %2985 = vmatmul.mubr.f32.gmra.mrb[0].mxu0 %v366
      %v2986 = vpop.f32.mrb[0].mxu0
      %v2987 = vadd.f32 %v2762, %v2986
      %v2988 = vpop.f32.mrb[0].mxu0
      %2989 = vmatprep.mubr.f32.mxu0 %v477
      %2990 = vmatmul.mubr.f32.gmra.mrb[0].mxu0 %v367
      %v2991 = vpop.f32.mrb[0].mxu0
      %v2992 = vadd.f32 %v2767, %v2991
      %v2993 = vpop.f32.mrb[0].mxu0
      %2994 = vmatprep.mubr.f32.mxu0 %v480
      %2995 = vmatmul.mubr.f32.gmra.mrb[0].mxu0 %v369
      %v2996 = vpop.f32.mrb[0].mxu0
      %v2997 = vadd.f32 %v2772, %v2996
      %v2998 = vpop.f32.mrb[0].mxu0
      %2999 = vmatprep.mubr.f32.mxu0 %v482
      %3000 = vmatmul.mubr.f32.gmra.mrb[0].mxu0 %v370
      %v3001 = vpop.f32.mrb[0].mxu0
      %v3002 = vadd.f32 %v2777, %v3001
      %v3003 = vpop.f32.mrb[0].mxu0
      %3004 = vmatprep.mubr.f32.mxu0 %v485
      %3005 = vmatmul.mubr.f32.gmra.mrb[0].mxu0 %v372
      %v3006 = vpop.f32.mrb[0].mxu0
      %v3007 = vadd.f32 %v2782, %v3006
      %v3008 = vpop.f32.mrb[0].mxu0
      %3009 = vmatprep.mubr.f32.mxu0 %v487
      %3010 = vmatmul.mubr.f32.gmra.mrb[0].mxu0 %v373
      %v3011 = vpop.f32.mrb[0].mxu0
      %v3012 = vadd.f32 %v2787, %v3011
      %v3013 = vpop.f32.mrb[0].mxu0
      %3014 = vmatprep.mubr.f32.mxu0 %v490
      %3015 = vmatmul.mubr.f32.gmra.mrb[0].mxu0 %v375
      %v3016 = vpop.f32.mrb[0].mxu0
      %v3017 = vadd.f32 %v2792, %v3016
      %v3018 = vpop.f32.mrb[0].mxu0
      %3019 = vmatprep.mubr.f32.mxu0 %v492
      %3020 = vmatmul.mubr.f32.gmra.mrb[0].mxu0 %v376
      %v3021 = vpop.f32.mrb[0].mxu0
      %v3022 = vadd.f32 %v2797, %v3021
      %v3023 = vpop.f32.mrb[0].mxu0
      %3024 = vmatprep.mubr.f32.mxu0 %v495
      %3025 = vmatmul.mubr.f32.gmra.mrb[0].mxu0 %v378
      %v3026 = vpop.f32.mrb[0].mxu0
      %v3027 = vadd.f32 %v2802, %v3026
      %v3028 = vpop.f32.mrb[0].mxu0
      %3029 = vmatprep.mubr.f32.mxu0 %v497
      %3030 = vmatmul.mubr.f32.gmra.mrb[0].mxu0 %v379
      %v3031 = vpop.f32.mrb[0].mxu0
      %v3032 = vadd.f32 %v2807, %v3031
      %v3033 = vpop.f32.mrb[0].mxu0
      %3034 = vmatprep.mubr.f32.mxu0 %v500
      %3035 = vmatmul.mubr.f32.gmra.mrb[0].mxu0 %v381
      %v3036 = vpop.f32.mrb[0].mxu0
      %v3037 = vadd.f32 %v2812, %v3036
      %v3038 = vpop.f32.mrb[0].mxu0
      %3039 = vmatprep.mubr.f32.mxu0 %v502
      %3040 = vmatmul.mubr.f32.gmra.mrb[0].mxu0 %v382
      %v3041 = vpop.f32.mrb[0].mxu0
      %v3042 = vadd.f32 %v2817, %v3041
      %v3043 = vpop.f32.mrb[0].mxu0
      %3044 = vmatprep.mubr.f32.mxu0 %v505
      %3045 = vmatmul.mubr.f32.gmra.mrb[0].mxu0 %v384
      %v3046 = vpop.f32.mrb[0].mxu0
      %v3047 = vadd.f32 %v2822, %v3046
      %v3048 = vpop.f32.mrb[0].mxu0
      %3049 = vmatprep.mubr.f32.mxu0 %v507
      %3050 = vmatmul.mubr.f32.gmra.mrb[0].mxu0 %v385
      %v3051 = vpop.f32.mrb[0].mxu0
      %v3052 = vadd.f32 %v2827, %v3051
      %v3053 = vpop.f32.mrb[0].mxu0
      %3054 = vmatprep.mubr.f32.mxu0 %v510
      %3055 = vmatmul.mubr.f32.gmra.mrb[0].mxu0 %v387
      %v3056 = vpop.f32.mrb[0].mxu0
      %v3057 = vadd.f32 %v2832, %v3056
      %v3058 = vpop.f32.mrb[0].mxu0
      %3059 = vmatprep.mubr.f32.mxu0 %v512
      %3060 = vmatmul.mubr.f32.gmra.mrb[0].mxu0 %v388
      %v3061 = vpop.f32.mrb[0].mxu0
      %v3062 = vadd.f32 %v2837, %v3061
      %v3063 = vpop.f32.mrb[0].mxu0
      %3064 = vmatprep.mubr.f32.mxu0 %v515
      %3065 = vmatmul.mubr.f32.gmra.mrb[0].mxu0 %v390
      %v3066 = vpop.f32.mrb[0].mxu0
      %v3067 = vadd.f32 %v2842, %v3066
      %v3068 = vpop.f32.mrb[0].mxu0
      %3069 = vmatprep.mubr.f32.mxu0 %v517
      %3070 = vmatmul.mubr.f32.gmra.mrb[0].mxu0 %v391
      %v3071 = vpop.f32.mrb[0].mxu0
      %v3072 = vadd.f32 %v2847, %v3071
      %v3073 = vpop.f32.mrb[0].mxu0
      %3074 = vmatprep.mubr.f32.mxu0 %v520
      %3075 = vmatmul.mubr.f32.gmra.mrb[0].mxu0 %v393
      %v3076 = vpop.f32.mrb[0].mxu0
      %v3077 = vadd.f32 %v2852, %v3076
      %v3078 = vpop.f32.mrb[0].mxu0
      %3079 = vmatprep.mubr.f32.mxu0 %v522
      %3080 = vmatmul.mubr.f32.gmra.mrb[0].mxu0 %v394
      %v3081 = vpop.f32.mrb[0].mxu0
      %v3082 = vadd.f32 %v2857, %v3081
      %v3083 = vpop.f32.mrb[0].mxu0
      %3084 = vmatprep.mubr.f32.mxu0 %v525
      %3085 = vmatmul.mubr.f32.gmra.mrb[0].mxu0 %v396
      %v3086 = vpop.f32.mrb[0].mxu0
      %v3087 = vadd.f32 %v2862, %v3086
      %v3088 = vpop.f32.mrb[0].mxu0
      %3089 = vmatprep.mubr.f32.mxu0 %v527
      %3090 = vmatmul.mubr.f32.gmra.mrb[0].mxu0 %v397
      %v3091 = vpop.f32.mrb[0].mxu0
      %v3092 = vadd.f32 %v2867, %v3091
      %v3093 = vpop.f32.mrb[0].mxu0
      %3094 = vmatprep.mubr.f32.mxu0 %v530
      %3095 = vmatmul.mubr.f32.gmra.mrb[0].mxu0 %v399
      %v3096 = vpop.f32.mrb[0].mxu0
      %v3097 = vadd.f32 %v2872, %v3096
      %v3098 = vpop.f32.mrb[0].mxu0
      %3099 = vmatprep.mubr.f32.mxu0 %v532
      %3100 = vmatmul.mubr.f32.gmra.mrb[0].mxu0 %v400
      %v3101 = vpop.f32.mrb[0].mxu0
      %v3102 = vadd.f32 %v2877, %v3101
      %v3103 = vpop.f32.mrb[0].mxu0
      %3104 = vmatprep.mubr.f32.mxu0 %v535
      %3105 = vmatmul.mubr.f32.gmra.mrb[0].mxu0 %v402
      %v3106 = vpop.f32.mrb[0].mxu0
      %v3107 = vadd.f32 %v2882, %v3106
      %v3108 = vpop.f32.mrb[0].mxu0
      %3109 = vmatprep.mubr.f32.mxu0 %v537
      %3110 = vmatmul.mubr.f32.gmra.mrb[0].mxu0 %v403
      %v3111 = vpop.f32.mrb[0].mxu0
      %v3112 = vadd.f32 %v2887, %v3111
      %v3113 = vpop.f32.mrb[0].mxu0
      %3114 = vmatprep.mubr.f32.mxu0 %v540
      %3115 = vmatmul.mubr.f32.gmra.mrb[0].mxu0 %v405
      %v3116 = vpop.f32.mrb[0].mxu0
      %v3117 = vadd.f32 %v2892, %v3116
      %v3118 = vpop.f32.mrb[0].mxu0
      %3119 = vmatprep.mubr.f32.mxu0 %v542
      %3120 = vmatmul.mubr.f32.gmra.mrb[0].mxu0 %v406
      %v3121 = vpop.f32.mrb[0].mxu0
      %v3122 = vadd.f32 %v2897, %v3121
      %v3123 = vpop.f32.mrb[0].mxu0
      %3124 = vmatprep.mubr.f32.mxu0 %v693
      %3125 = vmatmul.mubr.f32.gmra.mrb[0].mxu0 %v408
      %v3126 = vpop.f32.mrb[0].mxu0
      %v3127 = vadd.f32 %v2902, %v3126
      %v3128 = vpop.f32.mrb[0].mxu0
      %3129 = vmatprep.mubr.f32.mxu0 %v695
      %3130 = vmatmul.mubr.f32.gmra.mrb[0].mxu0 %v409
      %v3131 = vpop.f32.mrb[0].mxu0
      %v3132 = vadd.f32 %v2907, %v3131
      %v3133 = vpop.f32.mrb[0].mxu0
      %3134 = vmatprep.mubr.f32.mxu0 %v710
      %3135 = vmatmul.mubr.f32.gmra.mrb[0].mxu0 %v411
      %v3136 = vpop.f32.mrb[0].mxu0
      %v3137 = vadd.f32 %v2912, %v3136
      %v3138 = vpop.f32.mrb[0].mxu0
      %3139 = vmatprep.mubr.f32.mxu0 %v712
      %3140 = vmatmul.mubr.f32.gmra.mrb[0].mxu0 %v412
      %v3141 = vpop.f32.mrb[0].mxu0
      %v3142 = vadd.f32 %v2917, %v3141
      %v3143 = vpop.f32.mrb[0].mxu0
      %3144 = vdwg.mxu0
      %3145 = vmatprep.subr.mxu0 0.0
      %3146 = vmatpush1.msra.mxu0 %v2229
      %3147 = vmatprep.subr.mxu0 0.0
      %3148 = vmatpush1.msra.mxu0 %v2230
      %3149 = vmatprep.subr.mxu0 0.0
      %3150 = vmatpush1.msra.mxu0 %v2231
      %3151 = vmatprep.subr.mxu0 0.0
      %3152 = vmatpush1.msra.mxu0 %v2232
      %3153 = vmatprep.subr.mxu0 0.0
      %3154 = vmatpush1.msra.mxu0 %v2233
      %3155 = vmatprep.subr.mxu0 0.0
      %3156 = vmatpush1.msra.mxu0 %v2234
      %3157 = vmatprep.subr.mxu0 0.0
      %3158 = vmatpush1.msra.mxu0 %v2235
      %3159 = vmatprep.subr.mxu0 0.0
      %3160 = vmatpush1.msra.mxu0 %v2236
      %3161 = vmatprep.subr.mxu0 0.0
      %3162 = vmatpush1.msra.mxu0 %v2237
      %3163 = vmatprep.subr.mxu0 0.0
      %3164 = vmatpush1.msra.mxu0 %v2238
      %3165 = vmatprep.subr.mxu0 0.0
      %3166 = vmatpush1.msra.mxu0 %v2239
      %3167 = vmatprep.subr.mxu0 0.0
      %3168 = vmatpush1.msra.mxu0 %v2240
      %3169 = vmatprep.subr.mxu0 0.0
      %3170 = vmatpush1.msra.mxu0 %v2241
      %3171 = vmatprep.subr.mxu0 0.0
      %3172 = vmatpush1.msra.mxu0 %v2242
      %3173 = vmatprep.subr.mxu0 0.0
      %3174 = vmatpush1.msra.mxu0 %v2243
      %3175 = vmatprep.subr.mxu0 0.0
      %3176 = vmatpush1.msra.mxu0 %v2244
      %3177 = vmatprep.subr.mxu0 0.0
      %3178 = vmatpush1.msra.mxu0 0.0
      %3179 = vmatprep.subr.mxu0 0.0
      %3180 = vmatpush1.msra.mxu0 0.0
      %3181 = vmatprep.subr.mxu0 0.0
      %3182 = vmatpush1.msra.mxu0 0.0
      %3183 = vmatprep.subr.mxu0 0.0
      %3184 = vmatpush1.msra.mxu0 0.0
      %3185 = vmatprep.subr.mxu0 0.0
      %3186 = vmatpush1.msra.mxu0 0.0
      %3187 = vmatprep.subr.mxu0 0.0
      %3188 = vmatpush1.msra.mxu0 0.0
      %3189 = vmatprep.subr.mxu0 0.0
      %3190 = vmatpush1.msra.mxu0 0.0
      %3191 = vmatprep.subr.mxu0 0.0
      %3192 = vmatpush1.msra.mxu0 0.0
      %3193 = vmatprep.subr.mxu0 0.0
      %3194 = vmatpush1.msra.mxu0 0.0
      %3195 = vmatprep.subr.mxu0 0.0
      %3196 = vmatpush1.msra.mxu0 0.0
      %3197 = vmatprep.subr.mxu0 0.0
      %3198 = vmatpush1.msra.mxu0 0.0
      %3199 = vmatprep.subr.mxu0 0.0
      %3200 = vmatpush1.msra.mxu0 0.0
      %3201 = vmatprep.subr.mxu0 0.0
      %3202 = vmatpush1.msra.mxu0 0.0
      %3203 = vmatprep.subr.mxu0 0.0
      %3204 = vmatpush1.msra.mxu0 0.0
      %3205 = vmatprep.subr.mxu0 0.0
      %3206 = vmatpush1.msra.mxu0 0.0
      %3207 = vmatprep.subr.mxu0 0.0
      %3208 = vmatpush1.msra.mxu0 0.0
      %3209 = vmatprep.mubr.f32.mxu0 0.0
      %3210 = vmatmul.mubr.f32.gmra.mrb[0].mxu0 %v588
      %v3211 = vpop.f32.mrb[0].mxu0
      %v3212 = vadd.f32 %v2987, %v3211
      %v3213 = vpop.f32.mrb[0].mxu0
      %3214 = vmatprep.mubr.f32.mxu0 0.0
      %3215 = vmatmul.mubr.f32.gmra.mrb[0].mxu0 %v590
      %v3216 = vpop.f32.mrb[0].mxu0
      %v3217 = vadd.f32 %v2992, %v3216
      %v3218 = vpop.f32.mrb[0].mxu0
      %3219 = vmatprep.mubr.f32.mxu0 0.0
      %3220 = vmatmul.mubr.f32.gmra.mrb[0].mxu0 %v593
      %v3221 = vpop.f32.mrb[0].mxu0
      %v3222 = vadd.f32 %v2997, %v3221
      %v3223 = vpop.f32.mrb[0].mxu0
      %3224 = vmatprep.mubr.f32.mxu0 0.0
      %3225 = vmatmul.mubr.f32.gmra.mrb[0].mxu0 %v595
      %v3226 = vpop.f32.mrb[0].mxu0
      %v3227 = vadd.f32 %v3002, %v3226
      %v3228 = vpop.f32.mrb[0].mxu0
      %3229 = vmatprep.mubr.f32.mxu0 0.0
      %3230 = vmatmul.mubr.f32.gmra.mrb[0].mxu0 %v598
      %v3231 = vpop.f32.mrb[0].mxu0
      %v3232 = vadd.f32 %v3007, %v3231
      %v3233 = vpop.f32.mrb[0].mxu0
      %3234 = vmatprep.mubr.f32.mxu0 0.0
      %3235 = vmatmul.mubr.f32.gmra.mrb[0].mxu0 %v600
      %v3236 = vpop.f32.mrb[0].mxu0
      %v3237 = vadd.f32 %v3012, %v3236
      %v3238 = vpop.f32.mrb[0].mxu0
      %3239 = vmatprep.mubr.f32.mxu0 0.0
      %3240 = vmatmul.mubr.f32.gmra.mrb[0].mxu0 %v603
      %v3241 = vpop.f32.mrb[0].mxu0
      %v3242 = vadd.f32 %v3017, %v3241
      %v3243 = vpop.f32.mrb[0].mxu0
      %3244 = vmatprep.mubr.f32.mxu0 0.0
      %3245 = vmatmul.mubr.f32.gmra.mrb[0].mxu0 %v605
      %v3246 = vpop.f32.mrb[0].mxu0
      %v3247 = vadd.f32 %v3022, %v3246
      %v3248 = vpop.f32.mrb[0].mxu0
      %3249 = vmatprep.mubr.f32.mxu0 0.0
      %3250 = vmatmul.mubr.f32.gmra.mrb[0].mxu0 %v608
      %v3251 = vpop.f32.mrb[0].mxu0
      %v3252 = vadd.f32 %v3027, %v3251
      %v3253 = vpop.f32.mrb[0].mxu0
      %3254 = vmatprep.mubr.f32.mxu0 0.0
      %3255 = vmatmul.mubr.f32.gmra.mrb[0].mxu0 %v610
      %v3256 = vpop.f32.mrb[0].mxu0
      %v3257 = vadd.f32 %v3032, %v3256
      %v3258 = vpop.f32.mrb[0].mxu0
      %3259 = vmatprep.mubr.f32.mxu0 0.0
      %3260 = vmatmul.mubr.f32.gmra.mrb[0].mxu0 %v613
      %v3261 = vpop.f32.mrb[0].mxu0
      %v3262 = vadd.f32 %v3037, %v3261
      %v3263 = vpop.f32.mrb[0].mxu0
      %3264 = vmatprep.mubr.f32.mxu0 0.0
      %3265 = vmatmul.mubr.f32.gmra.mrb[0].mxu0 %v615
      %v3266 = vpop.f32.mrb[0].mxu0
      %v3267 = vadd.f32 %v3042, %v3266
      %v3268 = vpop.f32.mrb[0].mxu0
      %3269 = vmatprep.mubr.f32.mxu0 0.0
      %3270 = vmatmul.mubr.f32.gmra.mrb[0].mxu0 %v618
      %v3271 = vpop.f32.mrb[0].mxu0
      %v3272 = vadd.f32 %v3047, %v3271
      %v3273 = vpop.f32.mrb[0].mxu0
      %3274 = vmatprep.mubr.f32.mxu0 0.0
      %3275 = vmatmul.mubr.f32.gmra.mrb[0].mxu0 %v620
      %v3276 = vpop.f32.mrb[0].mxu0
      %v3277 = vadd.f32 %v3052, %v3276
      %v3278 = vpop.f32.mrb[0].mxu0
      %3279 = vmatprep.mubr.f32.mxu0 0.0
      %3280 = vmatmul.mubr.f32.gmra.mrb[0].mxu0 %v623
      %v3281 = vpop.f32.mrb[0].mxu0
      %v3282 = vadd.f32 %v3057, %v3281
      %v3283 = vpop.f32.mrb[0].mxu0
      %3284 = vmatprep.mubr.f32.mxu0 0.0
      %3285 = vmatmul.mubr.f32.gmra.mrb[0].mxu0 %v625
      %v3286 = vpop.f32.mrb[0].mxu0
      %v3287 = vadd.f32 %v3062, %v3286
      %v3288 = vpop.f32.mrb[0].mxu0
      %3289 = vmatprep.mubr.f32.mxu0 0.0
      %3290 = vmatmul.mubr.f32.gmra.mrb[0].mxu0 %v628
      %v3291 = vpop.f32.mrb[0].mxu0
      %v3292 = vadd.f32 %v3067, %v3291
      %v3293 = vpop.f32.mrb[0].mxu0
      %3294 = vmatprep.mubr.f32.mxu0 0.0
      %3295 = vmatmul.mubr.f32.gmra.mrb[0].mxu0 %v630
      %v3296 = vpop.f32.mrb[0].mxu0
      %v3297 = vadd.f32 %v3072, %v3296
      %v3298 = vpop.f32.mrb[0].mxu0
      %3299 = vmatprep.mubr.f32.mxu0 0.0
      %3300 = vmatmul.mubr.f32.gmra.mrb[0].mxu0 %v633
      %v3301 = vpop.f32.mrb[0].mxu0
      %v3302 = vadd.f32 %v3077, %v3301
      %v3303 = vpop.f32.mrb[0].mxu0
      %3304 = vmatprep.mubr.f32.mxu0 0.0
      %3305 = vmatmul.mubr.f32.gmra.mrb[0].mxu0 %v635
      %v3306 = vpop.f32.mrb[0].mxu0
      %v3307 = vadd.f32 %v3082, %v3306
      %v3308 = vpop.f32.mrb[0].mxu0
      %3309 = vmatprep.mubr.f32.mxu0 0.0
      %3310 = vmatmul.mubr.f32.gmra.mrb[0].mxu0 %v638
      %v3311 = vpop.f32.mrb[0].mxu0
      %v3312 = vadd.f32 %v3087, %v3311
      %v3313 = vpop.f32.mrb[0].mxu0
      %3314 = vmatprep.mubr.f32.mxu0 0.0
      %3315 = vmatmul.mubr.f32.gmra.mrb[0].mxu0 %v640
      %v3316 = vpop.f32.mrb[0].mxu0
      %v3317 = vadd.f32 %v3092, %v3316
      %v3318 = vpop.f32.mrb[0].mxu0
      %3319 = vmatprep.mubr.f32.mxu0 0.0
      %3320 = vmatmul.mubr.f32.gmra.mrb[0].mxu0 %v643
      %v3321 = vpop.f32.mrb[0].mxu0
      %v3322 = vadd.f32 %v3097, %v3321
      %v3323 = vpop.f32.mrb[0].mxu0
      %3324 = vmatprep.mubr.f32.mxu0 0.0
      %3325 = vmatmul.mubr.f32.gmra.mrb[0].mxu0 %v645
      %v3326 = vpop.f32.mrb[0].mxu0
      %v3327 = vadd.f32 %v3102, %v3326
      %v3328 = vpop.f32.mrb[0].mxu0
      %3329 = vmatprep.mubr.f32.mxu0 0.0
      %3330 = vmatmul.mubr.f32.gmra.mrb[0].mxu0 %v648
      %v3331 = vpop.f32.mrb[0].mxu0
      %v3332 = vadd.f32 %v3107, %v3331
      %v3333 = vpop.f32.mrb[0].mxu0
      %3334 = vmatprep.mubr.f32.mxu0 0.0
      %3335 = vmatmul.mubr.f32.gmra.mrb[0].mxu0 %v650
      %v3336 = vpop.f32.mrb[0].mxu0
      %v3337 = vadd.f32 %v3112, %v3336
      %v3338 = vpop.f32.mrb[0].mxu0
      %3339 = vmatprep.mubr.f32.mxu0 0.0
      %3340 = vmatmul.mubr.f32.gmra.mrb[0].mxu0 %v653
      %v3341 = vpop.f32.mrb[0].mxu0
      %v3342 = vadd.f32 %v3117, %v3341
      %v3343 = vpop.f32.mrb[0].mxu0
      %3344 = vmatprep.mubr.f32.mxu0 0.0
      %3345 = vmatmul.mubr.f32.gmra.mrb[0].mxu0 %v655
      %v3346 = vpop.f32.mrb[0].mxu0
      %v3347 = vadd.f32 %v3122, %v3346
      %v3348 = vpop.f32.mrb[0].mxu0
      %3349 = vmatprep.mubr.f32.mxu0 0.0
      %3350 = vmatmul.mubr.f32.gmra.mrb[0].mxu0 %v700
      %v3351 = vpop.f32.mrb[0].mxu0
      %v3352 = vadd.f32 %v3127, %v3351
      %v3353 = vpop.f32.mrb[0].mxu0
      %3354 = vmatprep.mubr.f32.mxu0 0.0
      %3355 = vmatmul.mubr.f32.gmra.mrb[0].mxu0 %v702
      %v3356 = vpop.f32.mrb[0].mxu0
      %v3357 = vadd.f32 %v3132, %v3356
      %v3358 = vpop.f32.mrb[0].mxu0
      %3359 = vmatprep.mubr.f32.mxu0 0.0
      %3360 = vmatmul.mubr.f32.gmra.mrb[0].mxu0 %v717
      %v3361 = vpop.f32.mrb[0].mxu0
      %v3362 = vadd.f32 %v3137, %v3361
      %v3363 = vpop.f32.mrb[0].mxu0
      %3364 = vmatprep.mubr.f32.mxu0 0.0
      %3365 = vmatmul.mubr.f32.gmra.mrb[0].mxu0 %v719
      %v3366 = vpop.f32.mrb[0].mxu0
      %v3367 = vadd.f32 %v3142, %v3366
      %v3368 = vpop.f32.mrb[0].mxu0
      %3369 = vdwg.mxu0
      %v3370 = vld [vmem:[%s2] sm:$0x1]
      %v3372 = vlaneseq
      %v3373 = vshrl.u32 %v3372, 7
      %v3374 = vsub.s32 0, %v3373
      %v3375 = vrot.slane %v3370, %v3374
      %v3377 = vmul.f32 %v3212, %v3375
      %v3378 = vmul.f32 %v3217, %v3375
      %v3379 = vmul.f32 %v3222, %v3375
      %v3380 = vmul.f32 %v3227, %v3375
      %v3381 = vmul.f32 %v3232, %v3375
      %v3382 = vmul.f32 %v3237, %v3375
      %v3383 = vmul.f32 %v3242, %v3375
      %v3384 = vmul.f32 %v3247, %v3375
      %v3385 = vmul.f32 %v3252, %v3375
      %v3386 = vmul.f32 %v3257, %v3375
      %v3387 = vmul.f32 %v3262, %v3375
      %v3388 = vmul.f32 %v3267, %v3375
      %v3389 = vmul.f32 %v3272, %v3375
      %v3390 = vmul.f32 %v3277, %v3375
      %v3391 = vmul.f32 %v3282, %v3375
      %v3392 = vmul.f32 %v3287, %v3375
      %v3393 = vmul.f32 %v3292, %v3375
      %v3394 = vmul.f32 %v3297, %v3375
      %v3395 = vmul.f32 %v3302, %v3375
      %v3396 = vmul.f32 %v3307, %v3375
      %v3397 = vmul.f32 %v3312, %v3375
      %v3398 = vmul.f32 %v3317, %v3375
      %v3399 = vmul.f32 %v3322, %v3375
      %v3400 = vmul.f32 %v3327, %v3375
      %v3401 = vmul.f32 %v3332, %v3375
      %v3402 = vmul.f32 %v3337, %v3375
      %v3403 = vmul.f32 %v3342, %v3375
      %v3404 = vmul.f32 %v3347, %v3375
      %v3405 = vmul.f32 %v3352, %v3375
      %v3406 = vmul.f32 %v3357, %v3375
      %v3407 = vmul.f32 %v3362, %v3375
      %v3408 = vmul.f32 %v3367, %v3375
      %v3409 = vld [vmem:[%s3] sm:$0x1]
      %v3411 = vlaneseq
      %v3412 = vshrl.u32 %v3411, 7
      %v3413 = vsub.s32 0, %v3412
      %v3414 = vrot.slane %v3409, %v3413
      %v3416 = vadd.f32 %v3377, %v3414
      %v3417 = vadd.f32 %v3378, %v3414
      %v3418 = vadd.f32 %v3379, %v3414
      %v3419 = vadd.f32 %v3380, %v3414
      %v3420 = vadd.f32 %v3381, %v3414
      %v3421 = vadd.f32 %v3382, %v3414
      %v3422 = vadd.f32 %v3383, %v3414
      %v3423 = vadd.f32 %v3384, %v3414
      %v3424 = vadd.f32 %v3385, %v3414
      %v3425 = vadd.f32 %v3386, %v3414
      %v3426 = vadd.f32 %v3387, %v3414
      %v3427 = vadd.f32 %v3388, %v3414
      %v3428 = vadd.f32 %v3389, %v3414
      %v3429 = vadd.f32 %v3390, %v3414
      %v3430 = vadd.f32 %v3391, %v3414
      %v3431 = vadd.f32 %v3392, %v3414
      %v3432 = vadd.f32 %v3393, %v3414
      %v3433 = vadd.f32 %v3394, %v3414
      %v3434 = vadd.f32 %v3395, %v3414
      %v3435 = vadd.f32 %v3396, %v3414
      %v3436 = vadd.f32 %v3397, %v3414
      %v3437 = vadd.f32 %v3398, %v3414
      %v3438 = vadd.f32 %v3399, %v3414
      %v3439 = vadd.f32 %v3400, %v3414
      %v3440 = vadd.f32 %v3401, %v3414
      %v3441 = vadd.f32 %v3402, %v3414
      %v3442 = vadd.f32 %v3403, %v3414
      %v3443 = vadd.f32 %v3404, %v3414
      %v3444 = vadd.f32 %v3405, %v3414
      %v3445 = vadd.f32 %v3406, %v3414
      %v3446 = vadd.f32 %v3407, %v3414
      %v3447 = vadd.f32 %v3408, %v3414
      %v3448 = vmax.f32 %v3416, 0.0
      %v3449 = vmax.f32 %v3417, 0.0
      %v3450 = vmax.f32 %v3418, 0.0
      %v3451 = vmax.f32 %v3419, 0.0
      %v3452 = vmax.f32 %v3420, 0.0
      %v3453 = vmax.f32 %v3421, 0.0
      %v3454 = vmax.f32 %v3422, 0.0
      %v3455 = vmax.f32 %v3423, 0.0
      %v3456 = vmax.f32 %v3424, 0.0
      %v3457 = vmax.f32 %v3425, 0.0
      %v3458 = vmax.f32 %v3426, 0.0
      %v3459 = vmax.f32 %v3427, 0.0
      %v3460 = vmax.f32 %v3428, 0.0
      %v3461 = vmax.f32 %v3429, 0.0
      %v3462 = vmax.f32 %v3430, 0.0
      %v3463 = vmax.f32 %v3431, 0.0
      %v3464 = vmax.f32 %v3432, 0.0
      %v3465 = vmax.f32 %v3433, 0.0
      %v3466 = vmax.f32 %v3434, 0.0
      %v3467 = vmax.f32 %v3435, 0.0
      %v3468 = vmax.f32 %v3436, 0.0
      %v3469 = vmax.f32 %v3437, 0.0
      %v3470 = vmax.f32 %v3438, 0.0
      %v3471 = vmax.f32 %v3439, 0.0
      %v3472 = vmax.f32 %v3440, 0.0
      %v3473 = vmax.f32 %v3441, 0.0
      %v3474 = vmax.f32 %v3442, 0.0
      %v3475 = vmax.f32 %v3443, 0.0
      %v3476 = vmax.f32 %v3444, 0.0
      %v3477 = vmax.f32 %v3445, 0.0
      %v3478 = vmax.f32 %v3446, 0.0
      %v3479 = vmax.f32 %v3447, 0.0
      %3480 = vst [vmem:[#allocation2] sm:$0xff] 0.0
      %3481 = vst [vmem:[#allocation2 + $0x8] sm:$0xff] 0.0
      %3482 = vst [vmem:[#allocation2 + $0x10] sm:$0x3] 0.0
      %3483 = vst [vmem:[#allocation2 + $0x18] sm:$0xff] 0.0
      %3484 = vst [vmem:[#allocation2 + $0x20] sm:$0xff] 0.0
      %3485 = vst [vmem:[#allocation2 + $0x28] sm:$0x3] 0.0
      %3486 = vst [vmem:[#allocation2 + $0x30] sm:$0xff] 0.0
      %3487 = vst [vmem:[#allocation2 + $0x38] sm:$0xff] 0.0
      %3488 = vst [vmem:[#allocation2 + $0x40] sm:$0x3] 0.0
      %3489 = vst [vmem:[#allocation2 + $0x48] sm:$0xff] 0.0
      %3490 = vst [vmem:[#allocation2 + $0x50] sm:$0xff] 0.0
      %3491 = vst [vmem:[#allocation2 + $0x58] sm:$0x3] 0.0
      %3492 = vst [vmem:[#allocation2 + $0x60] sm:$0xff] 0.0
      %3493 = vst [vmem:[#allocation2 + $0x68] sm:$0xff] 0.0
      %3494 = vst [vmem:[#allocation2 + $0x70] sm:$0x3] 0.0
      %3495 = vst [vmem:[#allocation2 + $0x78] sm:$0xff] 0.0
      %3496 = vst [vmem:[#allocation2 + $0x80] sm:$0xff] 0.0
      %3497 = vst [vmem:[#allocation2 + $0x88] sm:$0x3] 0.0
      %3498 = vst [vmem:[#allocation2 + $0x90] sm:$0xff] 0.0
      %3499 = vst [vmem:[#allocation2 + $0x98] sm:$0xff] 0.0
      %3500 = vst [vmem:[#allocation2 + $0xa0] sm:$0x3] 0.0
      %3501 = vst [vmem:[#allocation2 + $0xa8] sm:$0xff] 0.0
      %3502 = vst [vmem:[#allocation2 + $0xb0] sm:$0xff] 0.0
      %3503 = vst [vmem:[#allocation2 + $0xb8] sm:$0x3] 0.0
      %3504 = vst [vmem:[#allocation2 + $0xc0] sm:$0xff] 0.0
      %3505 = vst [vmem:[#allocation2 + $0xc8] sm:$0xff] 0.0
      %3506 = vst [vmem:[#allocation2 + $0xd0] sm:$0x3] 0.0
      %3507 = vst [vmem:[#allocation2 + $0xd8] sm:$0xff] 0.0
      %3508 = vst [vmem:[#allocation2 + $0xe0] sm:$0xff] 0.0
      %3509 = vst [vmem:[#allocation2 + $0xe8] sm:$0x3] 0.0
      %3510 = vst [vmem:[#allocation2 + $0xf0] sm:$0xff] 0.0
      %3511 = vst [vmem:[#allocation2 + $0xf8] sm:$0xff] 0.0
      %3512 = vst [vmem:[#allocation2 + $0x100] sm:$0x3] 0.0
      %3513 = vst [vmem:[#allocation2 + $0x108] sm:$0xff] 0.0
      %3514 = vst [vmem:[#allocation2 + $0x110] sm:$0xff] 0.0
      %3515 = vst [vmem:[#allocation2 + $0x118] sm:$0x3] 0.0
      %3516 = vst [vmem:[#allocation2 + $0x120] sm:$0xff] 0.0
      %3517 = vst [vmem:[#allocation2 + $0x128] sm:$0xff] 0.0
      %3518 = vst [vmem:[#allocation2 + $0x130] sm:$0x3] 0.0
      %3519 = vst [vmem:[#allocation2 + $0x138] sm:$0xff] 0.0
      %3520 = vst [vmem:[#allocation2 + $0x140] sm:$0xff] 0.0
      %3521 = vst [vmem:[#allocation2 + $0x148] sm:$0x3] 0.0
      %3522 = vst [vmem:[#allocation2 + $0x150] sm:$0xff] 0.0
      %3523 = vst [vmem:[#allocation2 + $0x158] sm:$0xff] 0.0
      %3524 = vst [vmem:[#allocation2 + $0x160] sm:$0x3] 0.0
      %3525 = vst [vmem:[#allocation2 + $0x168] sm:$0xff] 0.0
      %3526 = vst [vmem:[#allocation2 + $0x170] sm:$0xff] 0.0
      %3527 = vst [vmem:[#allocation2 + $0x178] sm:$0x3] 0.0
      %3528 = vst [vmem:[#allocation2 + $0x180] sm:$0xff] 0.0
      %3529 = vst [vmem:[#allocation2 + $0x188] sm:$0xff] 0.0
      %3530 = vst [vmem:[#allocation2 + $0x190] sm:$0x3] 0.0
      %3531 = vst [vmem:[#allocation2 + $0x198] sm:$0xff] 0.0
      %3532 = vst [vmem:[#allocation2 + $0x1a0] sm:$0xff] 0.0
      %3533 = vst [vmem:[#allocation2 + $0x1a8] sm:$0x3] 0.0
      %s3534 = scalar_lea.vmem [#allocation2], 24
      %3535 = vst [vmem:[%s3534 + $0x1] sm:$0xff] %v3448
      %3536 = vst [vmem:[%s3534 + $0x9] sm:$0xff] %v3449
      %3537 = vst [vmem:[%s3534 + $0x19] sm:$0xff] %v3450
      %3538 = vst [vmem:[%s3534 + $0x21] sm:$0xff] %v3451
      %3539 = vst [vmem:[%s3534 + $0x31] sm:$0xff] %v3452
      %3540 = vst [vmem:[%s3534 + $0x39] sm:$0xff] %v3453
      %3541 = vst [vmem:[%s3534 + $0x49] sm:$0xff] %v3454
      %3542 = vst [vmem:[%s3534 + $0x51] sm:$0xff] %v3455
      %3543 = vst [vmem:[%s3534 + $0x61] sm:$0xff] %v3456
      %3544 = vst [vmem:[%s3534 + $0x69] sm:$0xff] %v3457
      %3545 = vst [vmem:[%s3534 + $0x79] sm:$0xff] %v3458
      %3546 = vst [vmem:[%s3534 + $0x81] sm:$0xff] %v3459
      %3547 = vst [vmem:[%s3534 + $0x91] sm:$0xff] %v3460
      %3548 = vst [vmem:[%s3534 + $0x99] sm:$0xff] %v3461
      %3549 = vst [vmem:[%s3534 + $0xa9] sm:$0xff] %v3462
      %3550 = vst [vmem:[%s3534 + $0xb1] sm:$0xff] %v3463
      %3551 = vst [vmem:[%s3534 + $0xc1] sm:$0xff] %v3464
      %3552 = vst [vmem:[%s3534 + $0xc9] sm:$0xff] %v3465
      %3553 = vst [vmem:[%s3534 + $0xd9] sm:$0xff] %v3466
      %3554 = vst [vmem:[%s3534 + $0xe1] sm:$0xff] %v3467
      %3555 = vst [vmem:[%s3534 + $0xf1] sm:$0xff] %v3468
      %3556 = vst [vmem:[%s3534 + $0xf9] sm:$0xff] %v3469
      %3557 = vst [vmem:[%s3534 + $0x109] sm:$0xff] %v3470
      %3558 = vst [vmem:[%s3534 + $0x111] sm:$0xff] %v3471
      %3559 = vst [vmem:[%s3534 + $0x121] sm:$0xff] %v3472
      %3560 = vst [vmem:[%s3534 + $0x129] sm:$0xff] %v3473
      %3561 = vst [vmem:[%s3534 + $0x139] sm:$0xff] %v3474
      %3562 = vst [vmem:[%s3534 + $0x141] sm:$0xff] %v3475
      %3563 = vst [vmem:[%s3534 + $0x151] sm:$0xff] %v3476
      %3564 = vst [vmem:[%s3534 + $0x159] sm:$0xff] %v3477
      %3565 = vst [vmem:[%s3534 + $0x169] sm:$0xff] %v3478
      %3566 = vst [vmem:[%s3534 + $0x171] sm:$0xff] %v3479
      %v3567 = vld [vmem:[#allocation2] sm:$0xff]
      %v3568 = vld [vmem:[#allocation2 + $0x8] sm:$0xff]
      %v3569 = vld [vmem:[#allocation2 + $0x10] sm:$0x3]
      %v3570 = vld [vmem:[#allocation2 + $0x18] sm:$0xff]
      %v3571 = vld [vmem:[#allocation2 + $0x20] sm:$0xff]
      %v3572 = vld [vmem:[#allocation2 + $0x28] sm:$0x3]
      %v3573 = vld [vmem:[#allocation2 + $0x30] sm:$0xff]
      %v3574 = vld [vmem:[#allocation2 + $0x38] sm:$0xff]
      %v3575 = vld [vmem:[#allocation2 + $0x40] sm:$0x3]
      %v3576 = vld [vmem:[#allocation2 + $0x48] sm:$0xff]
      %v3577 = vld [vmem:[#allocation2 + $0x50] sm:$0xff]
      %v3578 = vld [vmem:[#allocation2 + $0x58] sm:$0x3]
      %v3579 = vld [vmem:[#allocation2 + $0x60] sm:$0xff]
      %v3580 = vld [vmem:[#allocation2 + $0x68] sm:$0xff]
      %v3581 = vld [vmem:[#allocation2 + $0x70] sm:$0x3]
      %v3582 = vld [vmem:[#allocation2 + $0x78] sm:$0xff]
      %v3583 = vld [vmem:[#allocation2 + $0x80] sm:$0xff]
      %v3584 = vld [vmem:[#allocation2 + $0x88] sm:$0x3]
      %v3585 = vld [vmem:[#allocation2 + $0x90] sm:$0xff]
      %v3586 = vld [vmem:[#allocation2 + $0x98] sm:$0xff]
      %v3587 = vld [vmem:[#allocation2 + $0xa0] sm:$0x3]
      %v3588 = vld [vmem:[#allocation2 + $0xa8] sm:$0xff]
      %v3589 = vld [vmem:[#allocation2 + $0xb0] sm:$0xff]
      %v3590 = vld [vmem:[#allocation2 + $0xb8] sm:$0x3]
      %v3591 = vld [vmem:[#allocation2 + $0xc0] sm:$0xff]
      %v3592 = vld [vmem:[#allocation2 + $0xc8] sm:$0xff]
      %v3593 = vld [vmem:[#allocation2 + $0xd0] sm:$0x3]
      %v3594 = vld [vmem:[#allocation2 + $0xd8] sm:$0xff]
      %v3595 = vld [vmem:[#allocation2 + $0xe0] sm:$0xff]
      %v3596 = vld [vmem:[#allocation2 + $0xe8] sm:$0x3]
      %v3597 = vld [vmem:[#allocation2 + $0xf0] sm:$0xff]
      %v3598 = vld [vmem:[#allocation2 + $0xf8] sm:$0xff]
      %v3599 = vld [vmem:[#allocation2 + $0x100] sm:$0x3]
      %v3600 = vld [vmem:[#allocation2 + $0x108] sm:$0xff]
      %v3601 = vld [vmem:[#allocation2 + $0x110] sm:$0xff]
      %v3602 = vld [vmem:[#allocation2 + $0x118] sm:$0x3]
      %v3603 = vld [vmem:[#allocation2 + $0x120] sm:$0xff]
      %v3604 = vld [vmem:[#allocation2 + $0x128] sm:$0xff]
      %v3605 = vld [vmem:[#allocation2 + $0x130] sm:$0x3]
      %v3606 = vld [vmem:[#allocation2 + $0x138] sm:$0xff]
      %v3607 = vld [vmem:[#allocation2 + $0x140] sm:$0xff]
      %v3608 = vld [vmem:[#allocation2 + $0x148] sm:$0x3]
      %v3609 = vld [vmem:[#allocation2 + $0x150] sm:$0xff]
      %v3610 = vld [vmem:[#allocation2 + $0x158] sm:$0xff]
      %v3611 = vld [vmem:[#allocation2 + $0x160] sm:$0x3]
      %v3612 = vld [vmem:[#allocation2 + $0x168] sm:$0xff]
      %v3613 = vld [vmem:[#allocation2 + $0x170] sm:$0xff]
      %v3614 = vld [vmem:[#allocation2 + $0x178] sm:$0x3]
      %v3615 = vld [vmem:[#allocation2 + $0x180] sm:$0xff]
      %v3616 = vld [vmem:[#allocation2 + $0x188] sm:$0xff]
      %v3617 = vld [vmem:[#allocation2 + $0x190] sm:$0x3]
      %v3618 = vld [vmem:[#allocation2 + $0x198] sm:$0xff]
      %v3619 = vld [vmem:[#allocation2 + $0x1a0] sm:$0xff]
      %v3620 = vld [vmem:[#allocation2 + $0x1a8] sm:$0x3]
      %v3669 = vrot.slane %v3567, 1
      %v3670 = vrot.slane %v3568, 1
      %v3671 = vsel %vm462, %v3669, %v3670
      %v3672 = vrot.slane %v3569, 1
      %v3673 = vsel %vm462, %v3670, %v3672
      %v3674 = vrot.slane %v3570, 1
      %v3675 = vrot.slane %v3571, 1
      %v3676 = vsel %vm462, %v3674, %v3675
      %v3677 = vrot.slane %v3572, 1
      %v3678 = vsel %vm462, %v3675, %v3677
      %v3679 = vrot.slane %v3573, 1
      %v3680 = vrot.slane %v3574, 1
      %v3681 = vsel %vm462, %v3679, %v3680
      %v3682 = vrot.slane %v3575, 1
      %v3683 = vsel %vm462, %v3680, %v3682
      %v3684 = vrot.slane %v3576, 1
      %v3685 = vrot.slane %v3577, 1
      %v3686 = vsel %vm462, %v3684, %v3685
      %v3687 = vrot.slane %v3578, 1
      %v3688 = vsel %vm462, %v3685, %v3687
      %v3689 = vrot.slane %v3579, 1
      %v3690 = vrot.slane %v3580, 1
      %v3691 = vsel %vm462, %v3689, %v3690
      %v3692 = vrot.slane %v3581, 1
      %v3693 = vsel %vm462, %v3690, %v3692
      %v3694 = vrot.slane %v3582, 1
      %v3695 = vrot.slane %v3583, 1
      %v3696 = vsel %vm462, %v3694, %v3695
      %v3697 = vrot.slane %v3584, 1
      %v3698 = vsel %vm462, %v3695, %v3697
      %v3699 = vrot.slane %v3585, 1
      %v3700 = vrot.slane %v3586, 1
      %v3701 = vsel %vm462, %v3699, %v3700
      %v3702 = vrot.slane %v3587, 1
      %v3703 = vsel %vm462, %v3700, %v3702
      %v3704 = vrot.slane %v3588, 1
      %v3705 = vrot.slane %v3589, 1
      %v3706 = vsel %vm462, %v3704, %v3705
      %v3707 = vrot.slane %v3590, 1
      %v3708 = vsel %vm462, %v3705, %v3707
      %v3709 = vrot.slane %v3591, 1
      %v3710 = vrot.slane %v3592, 1
      %v3711 = vsel %vm462, %v3709, %v3710
      %v3712 = vrot.slane %v3593, 1
      %v3713 = vsel %vm462, %v3710, %v3712
      %v3714 = vrot.slane %v3594, 1
      %v3715 = vrot.slane %v3595, 1
      %v3716 = vsel %vm462, %v3714, %v3715
      %v3717 = vrot.slane %v3596, 1
      %v3718 = vsel %vm462, %v3715, %v3717
      %v3719 = vrot.slane %v3597, 1
      %v3720 = vrot.slane %v3598, 1
      %v3721 = vsel %vm462, %v3719, %v3720
      %v3722 = vrot.slane %v3599, 1
      %v3723 = vsel %vm462, %v3720, %v3722
      %v3724 = vrot.slane %v3600, 1
      %v3725 = vrot.slane %v3601, 1
      %v3726 = vsel %vm462, %v3724, %v3725
      %v3727 = vrot.slane %v3602, 1
      %v3728 = vsel %vm462, %v3725, %v3727
      %v3729 = vrot.slane %v3603, 1
      %v3730 = vrot.slane %v3604, 1
      %v3731 = vsel %vm462, %v3729, %v3730
      %v3732 = vrot.slane %v3605, 1
      %v3733 = vsel %vm462, %v3730, %v3732
      %v3734 = vrot.slane %v3606, 1
      %v3735 = vrot.slane %v3607, 1
      %v3736 = vsel %vm462, %v3734, %v3735
      %v3737 = vrot.slane %v3608, 1
      %v3738 = vsel %vm462, %v3735, %v3737
      %v3739 = vrot.slane %v3609, 1
      %v3740 = vrot.slane %v3610, 1
      %v3741 = vsel %vm462, %v3739, %v3740
      %v3742 = vrot.slane %v3611, 1
      %v3743 = vsel %vm462, %v3740, %v3742
      %v3744 = vrot.slane %v3612, 1
      %v3745 = vrot.slane %v3613, 1
      %v3746 = vsel %vm462, %v3744, %v3745
      %v3747 = vrot.slane %v3614, 1
      %v3748 = vsel %vm462, %v3745, %v3747
      %v3781 = vrot.slane %v3567, 2
      %v3782 = vrot.slane %v3568, 2
      %v3783 = vsel %vm575, %v3781, %v3782
      %v3784 = vrot.slane %v3569, 2
      %v3785 = vsel %vm575, %v3782, %v3784
      %v3786 = vrot.slane %v3570, 2
      %v3787 = vrot.slane %v3571, 2
      %v3788 = vsel %vm575, %v3786, %v3787
      %v3789 = vrot.slane %v3572, 2
      %v3790 = vsel %vm575, %v3787, %v3789
      %v3791 = vrot.slane %v3573, 2
      %v3792 = vrot.slane %v3574, 2
      %v3793 = vsel %vm575, %v3791, %v3792
      %v3794 = vrot.slane %v3575, 2
      %v3795 = vsel %vm575, %v3792, %v3794
      %v3796 = vrot.slane %v3576, 2
      %v3797 = vrot.slane %v3577, 2
      %v3798 = vsel %vm575, %v3796, %v3797
      %v3799 = vrot.slane %v3578, 2
      %v3800 = vsel %vm575, %v3797, %v3799
      %v3801 = vrot.slane %v3579, 2
      %v3802 = vrot.slane %v3580, 2
      %v3803 = vsel %vm575, %v3801, %v3802
      %v3804 = vrot.slane %v3581, 2
      %v3805 = vsel %vm575, %v3802, %v3804
      %v3806 = vrot.slane %v3582, 2
      %v3807 = vrot.slane %v3583, 2
      %v3808 = vsel %vm575, %v3806, %v3807
      %v3809 = vrot.slane %v3584, 2
      %v3810 = vsel %vm575, %v3807, %v3809
      %v3811 = vrot.slane %v3585, 2
      %v3812 = vrot.slane %v3586, 2
      %v3813 = vsel %vm575, %v3811, %v3812
      %v3814 = vrot.slane %v3587, 2
      %v3815 = vsel %vm575, %v3812, %v3814
      %v3816 = vrot.slane %v3588, 2
      %v3817 = vrot.slane %v3589, 2
      %v3818 = vsel %vm575, %v3816, %v3817
      %v3819 = vrot.slane %v3590, 2
      %v3820 = vsel %vm575, %v3817, %v3819
      %v3821 = vrot.slane %v3591, 2
      %v3822 = vrot.slane %v3592, 2
      %v3823 = vsel %vm575, %v3821, %v3822
      %v3824 = vrot.slane %v3593, 2
      %v3825 = vsel %vm575, %v3822, %v3824
      %v3826 = vrot.slane %v3594, 2
      %v3827 = vrot.slane %v3595, 2
      %v3828 = vsel %vm575, %v3826, %v3827
      %v3829 = vrot.slane %v3596, 2
      %v3830 = vsel %vm575, %v3827, %v3829
      %v3831 = vrot.slane %v3597, 2
      %v3832 = vrot.slane %v3598, 2
      %v3833 = vsel %vm575, %v3831, %v3832
      %v3834 = vrot.slane %v3599, 2
      %v3835 = vsel %vm575, %v3832, %v3834
      %v3836 = vrot.slane %v3600, 2
      %v3837 = vrot.slane %v3601, 2
      %v3838 = vsel %vm575, %v3836, %v3837
      %v3839 = vrot.slane %v3602, 2
      %v3840 = vsel %vm575, %v3837, %v3839
      %v3841 = vrot.slane %v3603, 2
      %v3842 = vrot.slane %v3604, 2
      %v3843 = vsel %vm575, %v3841, %v3842
      %v3844 = vrot.slane %v3605, 2
      %v3845 = vsel %vm575, %v3842, %v3844
      %v3846 = vrot.slane %v3606, 2
      %v3847 = vrot.slane %v3607, 2
      %v3848 = vsel %vm575, %v3846, %v3847
      %v3849 = vrot.slane %v3608, 2
      %v3850 = vsel %vm575, %v3847, %v3849
      %v3851 = vrot.slane %v3609, 2
      %v3852 = vrot.slane %v3610, 2
      %v3853 = vsel %vm575, %v3851, %v3852
      %v3854 = vrot.slane %v3611, 2
      %v3855 = vsel %vm575, %v3852, %v3854
      %v3856 = vrot.slane %v3612, 2
      %v3857 = vrot.slane %v3613, 2
      %v3858 = vsel %vm575, %v3856, %v3857
      %v3859 = vrot.slane %v3614, 2
      %v3860 = vsel %vm575, %v3857, %v3859
      %v3896 = vrot.slane %v3615, 1
      %v3897 = vrot.slane %v3616, 1
      %v3898 = vsel %vm462, %v3896, %v3897
      %v3899 = vrot.slane %v3617, 1
      %v3900 = vsel %vm462, %v3897, %v3899
      %v3903 = vrot.slane %v3615, 2
      %v3904 = vrot.slane %v3616, 2
      %v3905 = vsel %vm575, %v3903, %v3904
      %v3906 = vrot.slane %v3617, 2
      %v3907 = vsel %vm575, %v3904, %v3906
      %v3913 = vrot.slane %v3618, 1
      %v3914 = vrot.slane %v3619, 1
      %v3915 = vsel %vm462, %v3913, %v3914
      %v3916 = vrot.slane %v3620, 1
      %v3917 = vsel %vm462, %v3914, %v3916
      %v3920 = vrot.slane %v3618, 2
      %v3921 = vrot.slane %v3619, 2
      %v3922 = vsel %vm575, %v3920, %v3921
      %v3923 = vrot.slane %v3620, 2
      %v3924 = vsel %vm575, %v3921, %v3923
      %v3927 = vld [vmem:[%s4] sm:$0xff]
      %v3928 = vld [vmem:[%s4 + $0x8] sm:$0xff]
      %v3929 = vld [vmem:[%s4 + $0x10] sm:$0xff]
      %v3930 = vld [vmem:[%s4 + $0x18] sm:$0xff]
      %v3931 = vld [vmem:[%s4 + $0x20] sm:$0xff]
      %v3932 = vld [vmem:[%s4 + $0x28] sm:$0xff]
      %v3933 = vld [vmem:[%s4 + $0x30] sm:$0xff]
      %v3934 = vld [vmem:[%s4 + $0x38] sm:$0xff]
      %v3935 = vld [vmem:[%s4 + $0x40] sm:$0xff]
      %v3936 = vld [vmem:[%s4 + $0x48] sm:$0xff]
      %v3937 = vld [vmem:[%s4 + $0x50] sm:$0xff]
      %v3938 = vld [vmem:[%s4 + $0x58] sm:$0xff]
      %v3939 = vld [vmem:[%s4 + $0x60] sm:$0xff]
      %v3940 = vld [vmem:[%s4 + $0x68] sm:$0xff]
      %v3941 = vld [vmem:[%s4 + $0x70] sm:$0xff]
      %v3942 = vld [vmem:[%s4 + $0x78] sm:$0xff]
      %v3943 = vld [vmem:[%s4 + $0x80] sm:$0xff]
      %v3944 = vld [vmem:[%s4 + $0x88] sm:$0xff]
      %v3945 = vld [vmem:[%s4 + $0x90] sm:$0xff]
      %v3946 = vld [vmem:[%s4 + $0x98] sm:$0xff]
      %v3947 = vld [vmem:[%s4 + $0xa0] sm:$0xff]
      %v3948 = vld [vmem:[%s4 + $0xa8] sm:$0xff]
      %v3949 = vld [vmem:[%s4 + $0xb0] sm:$0xff]
      %v3950 = vld [vmem:[%s4 + $0xb8] sm:$0xff]
      %v3951 = vld [vmem:[%s4 + $0xc0] sm:$0xff]
      %v3952 = vld [vmem:[%s4 + $0xc8] sm:$0xff]
      %v3953 = vld [vmem:[%s4 + $0xd0] sm:$0xff]
      %v3954 = vld [vmem:[%s4 + $0xd8] sm:$0xff]
      %v3955 = vld [vmem:[%s4 + $0xe0] sm:$0xff]
      %v3956 = vld [vmem:[%s4 + $0xe8] sm:$0xff]
      %v3957 = vld [vmem:[%s4 + $0xf0] sm:$0xff]
      %v3958 = vld [vmem:[%s4 + $0xf8] sm:$0xff]
      %v3959 = vld [vmem:[%s4 + $0x100] sm:$0xff]
      %v3960 = vld [vmem:[%s4 + $0x108] sm:$0xff]
      %v3961 = vld [vmem:[%s4 + $0x110] sm:$0xff]
      %v3962 = vld [vmem:[%s4 + $0x118] sm:$0xff]
      %v3963 = vld [vmem:[%s4 + $0x120] sm:$0xff]
      %v3964 = vld [vmem:[%s4 + $0x128] sm:$0xff]
      %v3965 = vld [vmem:[%s4 + $0x130] sm:$0xff]
      %v3966 = vld [vmem:[%s4 + $0x138] sm:$0xff]
      %v3967 = vld [vmem:[%s4 + $0x140] sm:$0xff]
      %v3968 = vld [vmem:[%s4 + $0x148] sm:$0xff]
      %v3969 = vld [vmem:[%s4 + $0x150] sm:$0xff]
      %v3970 = vld [vmem:[%s4 + $0x158] sm:$0xff]
      %v3971 = vld [vmem:[%s4 + $0x160] sm:$0xff]
      %v3972 = vld [vmem:[%s4 + $0x168] sm:$0xff]
      %v3973 = vld [vmem:[%s4 + $0x170] sm:$0xff]
      %v3974 = vld [vmem:[%s4 + $0x178] sm:$0xff]
      %v3975 = vld [vmem:[%s4 + $0x180] sm:$0xff]
      %v3976 = vld [vmem:[%s4 + $0x188] sm:$0xff]
      %v3977 = vld [vmem:[%s4 + $0x190] sm:$0xff]
      %v3978 = vld [vmem:[%s4 + $0x198] sm:$0xff]
      %v3979 = vld [vmem:[%s4 + $0x1a0] sm:$0xff]
      %v3980 = vld [vmem:[%s4 + $0x1a8] sm:$0xff]
      %v3981 = vld [vmem:[%s4 + $0x1b0] sm:$0xff]
      %v3982 = vld [vmem:[%s4 + $0x1b8] sm:$0xff]
      %v3983 = vld [vmem:[%s4 + $0x1c0] sm:$0xff]
      %v3984 = vld [vmem:[%s4 + $0x1c8] sm:$0xff]
      %v3985 = vld [vmem:[%s4 + $0x1d0] sm:$0xff]
      %v3986 = vld [vmem:[%s4 + $0x1d8] sm:$0xff]
      %v3987 = vld [vmem:[%s4 + $0x1e0] sm:$0xff]
      %v3988 = vld [vmem:[%s4 + $0x1e8] sm:$0xff]
      %v3989 = vld [vmem:[%s4 + $0x1f0] sm:$0xff]
      %v3990 = vld [vmem:[%s4 + $0x1f8] sm:$0xff]
      %v3991 = vld [vmem:[%s4 + $0x200] sm:$0xff]
      %v3992 = vld [vmem:[%s4 + $0x208] sm:$0xff]
      %v3993 = vld [vmem:[%s4 + $0x210] sm:$0xff]
      %v3994 = vld [vmem:[%s4 + $0x218] sm:$0xff]
      %v3995 = vld [vmem:[%s4 + $0x220] sm:$0xff]
      %v3996 = vld [vmem:[%s4 + $0x228] sm:$0xff]
      %v3997 = vld [vmem:[%s4 + $0x230] sm:$0xff]
      %v3998 = vld [vmem:[%s4 + $0x238] sm:$0xff]
      %v3999 = vld [vmem:[%s4 + $0x240] sm:$0xff]
      %v4000 = vld [vmem:[%s4 + $0x248] sm:$0xff]
      %v4001 = vld [vmem:[%s4 + $0x250] sm:$0xff]
      %v4002 = vld [vmem:[%s4 + $0x258] sm:$0xff]
      %v4003 = vld [vmem:[%s4 + $0x260] sm:$0xff]
      %v4004 = vld [vmem:[%s4 + $0x268] sm:$0xff]
      %v4005 = vld [vmem:[%s4 + $0x270] sm:$0xff]
      %v4006 = vld [vmem:[%s4 + $0x278] sm:$0xff]
      %v4007 = vld [vmem:[%s4 + $0x280] sm:$0xff]
      %v4008 = vld [vmem:[%s4 + $0x288] sm:$0xff]
      %v4009 = vld [vmem:[%s4 + $0x290] sm:$0xff]
      %v4010 = vld [vmem:[%s4 + $0x298] sm:$0xff]
      %v4011 = vld [vmem:[%s4 + $0x2a0] sm:$0xff]
      %v4012 = vld [vmem:[%s4 + $0x2a8] sm:$0xff]
      %v4013 = vld [vmem:[%s4 + $0x2b0] sm:$0xff]
      %v4014 = vld [vmem:[%s4 + $0x2b8] sm:$0xff]
      %v4015 = vld [vmem:[%s4 + $0x2c0] sm:$0xff]
      %v4016 = vld [vmem:[%s4 + $0x2c8] sm:$0xff]
      %v4017 = vld [vmem:[%s4 + $0x2d0] sm:$0xff]
      %v4018 = vld [vmem:[%s4 + $0x2d8] sm:$0xff]
      %v4019 = vld [vmem:[%s4 + $0x2e0] sm:$0xff]
      %v4020 = vld [vmem:[%s4 + $0x2e8] sm:$0xff]
      %v4021 = vld [vmem:[%s4 + $0x2f0] sm:$0xff]
      %v4022 = vld [vmem:[%s4 + $0x2f8] sm:$0xff]
      %v4023 = vld [vmem:[%s4 + $0x300] sm:$0xff]
      %v4024 = vld [vmem:[%s4 + $0x308] sm:$0xff]
      %v4025 = vld [vmem:[%s4 + $0x310] sm:$0xff]
      %v4026 = vld [vmem:[%s4 + $0x318] sm:$0xff]
      %v4027 = vld [vmem:[%s4 + $0x320] sm:$0xff]
      %v4028 = vld [vmem:[%s4 + $0x328] sm:$0xff]
      %v4029 = vld [vmem:[%s4 + $0x330] sm:$0xff]
      %v4030 = vld [vmem:[%s4 + $0x338] sm:$0xff]
      %v4031 = vld [vmem:[%s4 + $0x340] sm:$0xff]
      %v4032 = vld [vmem:[%s4 + $0x348] sm:$0xff]
      %v4033 = vld [vmem:[%s4 + $0x350] sm:$0xff]
      %v4034 = vld [vmem:[%s4 + $0x358] sm:$0xff]
      %v4035 = vld [vmem:[%s4 + $0x360] sm:$0xff]
      %v4036 = vld [vmem:[%s4 + $0x368] sm:$0xff]
      %v4037 = vld [vmem:[%s4 + $0x370] sm:$0xff]
      %v4038 = vld [vmem:[%s4 + $0x378] sm:$0xff]
      %v4039 = vld [vmem:[%s4 + $0x380] sm:$0xff]
      %v4040 = vld [vmem:[%s4 + $0x388] sm:$0xff]
      %v4041 = vld [vmem:[%s4 + $0x390] sm:$0xff]
      %v4042 = vld [vmem:[%s4 + $0x398] sm:$0xff]
      %v4043 = vld [vmem:[%s4 + $0x3a0] sm:$0xff]
      %v4044 = vld [vmem:[%s4 + $0x3a8] sm:$0xff]
      %v4045 = vld [vmem:[%s4 + $0x3b0] sm:$0xff]
      %v4046 = vld [vmem:[%s4 + $0x3b8] sm:$0xff]
      %v4047 = vld [vmem:[%s4 + $0x3c0] sm:$0xff]
      %v4048 = vld [vmem:[%s4 + $0x3c8] sm:$0xff]
      %v4049 = vld [vmem:[%s4 + $0x3d0] sm:$0xff]
      %v4050 = vld [vmem:[%s4 + $0x3d8] sm:$0xff]
      %v4051 = vld [vmem:[%s4 + $0x3e0] sm:$0xff]
      %v4052 = vld [vmem:[%s4 + $0x3e8] sm:$0xff]
      %v4053 = vld [vmem:[%s4 + $0x3f0] sm:$0xff]
      %v4054 = vld [vmem:[%s4 + $0x3f8] sm:$0xff]
      %v4055 = vld [vmem:[%s4 + $0x400] sm:$0xff]
      %v4056 = vld [vmem:[%s4 + $0x408] sm:$0xff]
      %v4057 = vld [vmem:[%s4 + $0x410] sm:$0xff]
      %v4058 = vld [vmem:[%s4 + $0x418] sm:$0xff]
      %v4059 = vld [vmem:[%s4 + $0x420] sm:$0xff]
      %v4060 = vld [vmem:[%s4 + $0x428] sm:$0xff]
      %v4061 = vld [vmem:[%s4 + $0x430] sm:$0xff]
      %v4062 = vld [vmem:[%s4 + $0x438] sm:$0xff]
      %v4063 = vld [vmem:[%s4 + $0x440] sm:$0xff]
      %v4064 = vld [vmem:[%s4 + $0x448] sm:$0xff]
      %v4065 = vld [vmem:[%s4 + $0x450] sm:$0xff]
      %v4066 = vld [vmem:[%s4 + $0x458] sm:$0xff]
      %v4067 = vld [vmem:[%s4 + $0x460] sm:$0xff]
      %v4068 = vld [vmem:[%s4 + $0x468] sm:$0xff]
      %v4069 = vld [vmem:[%s4 + $0x470] sm:$0xff]
      %v4070 = vld [vmem:[%s4 + $0x478] sm:$0xff]
      %4071 = vmatprep.subr.mxu0 0.0
      %4072 = vmatpush1.msra.mxu0 %v3927
      %4073 = vmatprep.subr.mxu0 0.0
      %4074 = vmatpush1.msra.mxu0 %v3928
      %4075 = vmatprep.subr.mxu0 0.0
      %4076 = vmatpush1.msra.mxu0 %v3929
      %4077 = vmatprep.subr.mxu0 0.0
      %4078 = vmatpush1.msra.mxu0 %v3930
      %4079 = vmatprep.subr.mxu0 0.0
      %4080 = vmatpush1.msra.mxu0 %v3931
      %4081 = vmatprep.subr.mxu0 0.0
      %4082 = vmatpush1.msra.mxu0 %v3932
      %4083 = vmatprep.subr.mxu0 0.0
      %4084 = vmatpush1.msra.mxu0 %v3933
      %4085 = vmatprep.subr.mxu0 0.0
      %4086 = vmatpush1.msra.mxu0 %v3934
      %4087 = vmatprep.subr.mxu0 0.0
      %4088 = vmatpush1.msra.mxu0 %v3935
      %4089 = vmatprep.subr.mxu0 0.0
      %4090 = vmatpush1.msra.mxu0 %v3936
      %4091 = vmatprep.subr.mxu0 0.0
      %4092 = vmatpush1.msra.mxu0 %v3937
      %4093 = vmatprep.subr.mxu0 0.0
      %4094 = vmatpush1.msra.mxu0 %v3938
      %4095 = vmatprep.subr.mxu0 0.0
      %4096 = vmatpush1.msra.mxu0 %v3939
      %4097 = vmatprep.subr.mxu0 0.0
      %4098 = vmatpush1.msra.mxu0 %v3940
      %4099 = vmatprep.subr.mxu0 0.0
      %4100 = vmatpush1.msra.mxu0 %v3941
      %4101 = vmatprep.subr.mxu0 0.0
      %4102 = vmatpush1.msra.mxu0 %v3942
      %4103 = vmatprep.subr.mxu0 0.0
      %4104 = vmatpush1.msra.mxu0 %v3943
      %4105 = vmatprep.subr.mxu0 0.0
      %4106 = vmatpush1.msra.mxu0 %v3944
      %4107 = vmatprep.subr.mxu0 0.0
      %4108 = vmatpush1.msra.mxu0 %v3945
      %4109 = vmatprep.subr.mxu0 0.0
      %4110 = vmatpush1.msra.mxu0 %v3946
      %4111 = vmatprep.subr.mxu0 0.0
      %4112 = vmatpush1.msra.mxu0 %v3947
      %4113 = vmatprep.subr.mxu0 0.0
      %4114 = vmatpush1.msra.mxu0 %v3948
      %4115 = vmatprep.subr.mxu0 0.0
      %4116 = vmatpush1.msra.mxu0 %v3949
      %4117 = vmatprep.subr.mxu0 0.0
      %4118 = vmatpush1.msra.mxu0 %v3950
      %4119 = vmatprep.subr.mxu0 0.0
      %4120 = vmatpush1.msra.mxu0 %v3951
      %4121 = vmatprep.subr.mxu0 0.0
      %4122 = vmatpush1.msra.mxu0 %v3952
      %4123 = vmatprep.subr.mxu0 0.0
      %4124 = vmatpush1.msra.mxu0 %v3953
      %4125 = vmatprep.subr.mxu0 0.0
      %4126 = vmatpush1.msra.mxu0 %v3954
      %4127 = vmatprep.subr.mxu0 0.0
      %4128 = vmatpush1.msra.mxu0 %v3955
      %4129 = vmatprep.subr.mxu0 0.0
      %4130 = vmatpush1.msra.mxu0 %v3956
      %4131 = vmatprep.subr.mxu0 0.0
      %4132 = vmatpush1.msra.mxu0 %v3957
      %4133 = vmatprep.subr.mxu0 0.0
      %4134 = vmatpush1.msra.mxu0 %v3958
      %4135 = vmatprep.mubr.f32.mxu0 %v3671
      %4136 = vmatmul.mubr.f32.gmra.mrb[0].mxu0 %v3567
      %v4137 = vpop.f32.mrb[0].mxu0
      %v4138 = vadd.f32 0.0, %v4137
      %v4139 = vpop.f32.mrb[0].mxu0
      %4140 = vmatprep.mubr.f32.mxu0 %v3673
      %4141 = vmatmul.mubr.f32.gmra.mrb[0].mxu0 %v3568
      %v4142 = vpop.f32.mrb[0].mxu0
      %v4143 = vadd.f32 0.0, %v4142
      %v4144 = vpop.f32.mrb[0].mxu0
      %4145 = vmatprep.mubr.f32.mxu0 %v3676
      %4146 = vmatmul.mubr.f32.gmra.mrb[0].mxu0 %v3570
      %v4147 = vpop.f32.mrb[0].mxu0
      %v4148 = vadd.f32 0.0, %v4147
      %v4149 = vpop.f32.mrb[0].mxu0
      %4150 = vmatprep.mubr.f32.mxu0 %v3678
      %4151 = vmatmul.mubr.f32.gmra.mrb[0].mxu0 %v3571
      %v4152 = vpop.f32.mrb[0].mxu0
      %v4153 = vadd.f32 0.0, %v4152
      %v4154 = vpop.f32.mrb[0].mxu0
      %4155 = vmatprep.mubr.f32.mxu0 %v3681
      %4156 = vmatmul.mubr.f32.gmra.mrb[0].mxu0 %v3573
      %v4157 = vpop.f32.mrb[0].mxu0
      %v4158 = vadd.f32 0.0, %v4157
      %v4159 = vpop.f32.mrb[0].mxu0
      %4160 = vmatprep.mubr.f32.mxu0 %v3683
      %4161 = vmatmul.mubr.f32.gmra.mrb[0].mxu0 %v3574
      %v4162 = vpop.f32.mrb[0].mxu0
      %v4163 = vadd.f32 0.0, %v4162
      %v4164 = vpop.f32.mrb[0].mxu0
      %4165 = vmatprep.mubr.f32.mxu0 %v3686
      %4166 = vmatmul.mubr.f32.gmra.mrb[0].mxu0 %v3576
      %v4167 = vpop.f32.mrb[0].mxu0
      %v4168 = vadd.f32 0.0, %v4167
      %v4169 = vpop.f32.mrb[0].mxu0
      %4170 = vmatprep.mubr.f32.mxu0 %v3688
      %4171 = vmatmul.mubr.f32.gmra.mrb[0].mxu0 %v3577
      %v4172 = vpop.f32.mrb[0].mxu0
      %v4173 = vadd.f32 0.0, %v4172
      %v4174 = vpop.f32.mrb[0].mxu0
      %4175 = vmatprep.mubr.f32.mxu0 %v3691
      %4176 = vmatmul.mubr.f32.gmra.mrb[0].mxu0 %v3579
      %v4177 = vpop.f32.mrb[0].mxu0
      %v4178 = vadd.f32 0.0, %v4177
      %v4179 = vpop.f32.mrb[0].mxu0
      %4180 = vmatprep.mubr.f32.mxu0 %v3693
      %4181 = vmatmul.mubr.f32.gmra.mrb[0].mxu0 %v3580
      %v4182 = vpop.f32.mrb[0].mxu0
      %v4183 = vadd.f32 0.0, %v4182
      %v4184 = vpop.f32.mrb[0].mxu0
      %4185 = vmatprep.mubr.f32.mxu0 %v3696
      %4186 = vmatmul.mubr.f32.gmra.mrb[0].mxu0 %v3582
      %v4187 = vpop.f32.mrb[0].mxu0
      %v4188 = vadd.f32 0.0, %v4187
      %v4189 = vpop.f32.mrb[0].mxu0
      %4190 = vmatprep.mubr.f32.mxu0 %v3698
      %4191 = vmatmul.mubr.f32.gmra.mrb[0].mxu0 %v3583
      %v4192 = vpop.f32.mrb[0].mxu0
      %v4193 = vadd.f32 0.0, %v4192
      %v4194 = vpop.f32.mrb[0].mxu0
      %4195 = vmatprep.mubr.f32.mxu0 %v3701
      %4196 = vmatmul.mubr.f32.gmra.mrb[0].mxu0 %v3585
      %v4197 = vpop.f32.mrb[0].mxu0
      %v4198 = vadd.f32 0.0, %v4197
      %v4199 = vpop.f32.mrb[0].mxu0
      %4200 = vmatprep.mubr.f32.mxu0 %v3703
      %4201 = vmatmul.mubr.f32.gmra.mrb[0].mxu0 %v3586
      %v4202 = vpop.f32.mrb[0].mxu0
      %v4203 = vadd.f32 0.0, %v4202
      %v4204 = vpop.f32.mrb[0].mxu0
      %4205 = vmatprep.mubr.f32.mxu0 %v3706
      %4206 = vmatmul.mubr.f32.gmra.mrb[0].mxu0 %v3588
      %v4207 = vpop.f32.mrb[0].mxu0
      %v4208 = vadd.f32 0.0, %v4207
      %v4209 = vpop.f32.mrb[0].mxu0
      %4210 = vmatprep.mubr.f32.mxu0 %v3708
      %4211 = vmatmul.mubr.f32.gmra.mrb[0].mxu0 %v3589
      %v4212 = vpop.f32.mrb[0].mxu0
      %v4213 = vadd.f32 0.0, %v4212
      %v4214 = vpop.f32.mrb[0].mxu0
      %4215 = vmatprep.mubr.f32.mxu0 %v3711
      %4216 = vmatmul.mubr.f32.gmra.mrb[0].mxu0 %v3591
      %v4217 = vpop.f32.mrb[0].mxu0
      %v4218 = vadd.f32 0.0, %v4217
      %v4219 = vpop.f32.mrb[0].mxu0
      %4220 = vmatprep.mubr.f32.mxu0 %v3713
      %4221 = vmatmul.mubr.f32.gmra.mrb[0].mxu0 %v3592
      %v4222 = vpop.f32.mrb[0].mxu0
      %v4223 = vadd.f32 0.0, %v4222
      %v4224 = vpop.f32.mrb[0].mxu0
      %4225 = vmatprep.mubr.f32.mxu0 %v3716
      %4226 = vmatmul.mubr.f32.gmra.mrb[0].mxu0 %v3594
      %v4227 = vpop.f32.mrb[0].mxu0
      %v4228 = vadd.f32 0.0, %v4227
      %v4229 = vpop.f32.mrb[0].mxu0
      %4230 = vmatprep.mubr.f32.mxu0 %v3718
      %4231 = vmatmul.mubr.f32.gmra.mrb[0].mxu0 %v3595
      %v4232 = vpop.f32.mrb[0].mxu0
      %v4233 = vadd.f32 0.0, %v4232
      %v4234 = vpop.f32.mrb[0].mxu0
      %4235 = vmatprep.mubr.f32.mxu0 %v3721
      %4236 = vmatmul.mubr.f32.gmra.mrb[0].mxu0 %v3597
      %v4237 = vpop.f32.mrb[0].mxu0
      %v4238 = vadd.f32 0.0, %v4237
      %v4239 = vpop.f32.mrb[0].mxu0
      %4240 = vmatprep.mubr.f32.mxu0 %v3723
      %4241 = vmatmul.mubr.f32.gmra.mrb[0].mxu0 %v3598
      %v4242 = vpop.f32.mrb[0].mxu0
      %v4243 = vadd.f32 0.0, %v4242
      %v4244 = vpop.f32.mrb[0].mxu0
      %4245 = vmatprep.mubr.f32.mxu0 %v3726
      %4246 = vmatmul.mubr.f32.gmra.mrb[0].mxu0 %v3600
      %v4247 = vpop.f32.mrb[0].mxu0
      %v4248 = vadd.f32 0.0, %v4247
      %v4249 = vpop.f32.mrb[0].mxu0
      %4250 = vmatprep.mubr.f32.mxu0 %v3728
      %4251 = vmatmul.mubr.f32.gmra.mrb[0].mxu0 %v3601
      %v4252 = vpop.f32.mrb[0].mxu0
      %v4253 = vadd.f32 0.0, %v4252
      %v4254 = vpop.f32.mrb[0].mxu0
      %4255 = vmatprep.mubr.f32.mxu0 %v3731
      %4256 = vmatmul.mubr.f32.gmra.mrb[0].mxu0 %v3603
      %v4257 = vpop.f32.mrb[0].mxu0
      %v4258 = vadd.f32 0.0, %v4257
      %v4259 = vpop.f32.mrb[0].mxu0
      %4260 = vmatprep.mubr.f32.mxu0 %v3733
      %4261 = vmatmul.mubr.f32.gmra.mrb[0].mxu0 %v3604
      %v4262 = vpop.f32.mrb[0].mxu0
      %v4263 = vadd.f32 0.0, %v4262
      %v4264 = vpop.f32.mrb[0].mxu0
      %4265 = vmatprep.mubr.f32.mxu0 %v3736
      %4266 = vmatmul.mubr.f32.gmra.mrb[0].mxu0 %v3606
      %v4267 = vpop.f32.mrb[0].mxu0
      %v4268 = vadd.f32 0.0, %v4267
      %v4269 = vpop.f32.mrb[0].mxu0
      %4270 = vmatprep.mubr.f32.mxu0 %v3738
      %4271 = vmatmul.mubr.f32.gmra.mrb[0].mxu0 %v3607
      %v4272 = vpop.f32.mrb[0].mxu0
      %v4273 = vadd.f32 0.0, %v4272
      %v4274 = vpop.f32.mrb[0].mxu0
      %4275 = vmatprep.mubr.f32.mxu0 %v3741
      %4276 = vmatmul.mubr.f32.gmra.mrb[0].mxu0 %v3609
      %v4277 = vpop.f32.mrb[0].mxu0
      %v4278 = vadd.f32 0.0, %v4277
      %v4279 = vpop.f32.mrb[0].mxu0
      %4280 = vmatprep.mubr.f32.mxu0 %v3743
      %4281 = vmatmul.mubr.f32.gmra.mrb[0].mxu0 %v3610
      %v4282 = vpop.f32.mrb[0].mxu0
      %v4283 = vadd.f32 0.0, %v4282
      %v4284 = vpop.f32.mrb[0].mxu0
      %4285 = vmatprep.mubr.f32.mxu0 %v3746
      %4286 = vmatmul.mubr.f32.gmra.mrb[0].mxu0 %v3612
      %v4287 = vpop.f32.mrb[0].mxu0
      %v4288 = vadd.f32 0.0, %v4287
      %v4289 = vpop.f32.mrb[0].mxu0
      %4290 = vmatprep.mubr.f32.mxu0 %v3748
      %4291 = vmatmul.mubr.f32.gmra.mrb[0].mxu0 %v3613
      %v4292 = vpop.f32.mrb[0].mxu0
      %v4293 = vadd.f32 0.0, %v4292
      %v4294 = vpop.f32.mrb[0].mxu0
      %4295 = vdwg.mxu0
      %4296 = vmatprep.subr.mxu0 0.0
      %4297 = vmatpush1.msra.mxu0 %v3959
      %4298 = vmatprep.subr.mxu0 0.0
      %4299 = vmatpush1.msra.mxu0 %v3960
      %4300 = vmatprep.subr.mxu0 0.0
      %4301 = vmatpush1.msra.mxu0 %v3961
      %4302 = vmatprep.subr.mxu0 0.0
      %4303 = vmatpush1.msra.mxu0 %v3962
      %4304 = vmatprep.subr.mxu0 0.0
      %4305 = vmatpush1.msra.mxu0 %v3963
      %4306 = vmatprep.subr.mxu0 0.0
      %4307 = vmatpush1.msra.mxu0 %v3964
      %4308 = vmatprep.subr.mxu0 0.0
      %4309 = vmatpush1.msra.mxu0 %v3965
      %4310 = vmatprep.subr.mxu0 0.0
      %4311 = vmatpush1.msra.mxu0 %v3966
      %4312 = vmatprep.subr.mxu0 0.0
      %4313 = vmatpush1.msra.mxu0 %v3967
      %4314 = vmatprep.subr.mxu0 0.0
      %4315 = vmatpush1.msra.mxu0 %v3968
      %4316 = vmatprep.subr.mxu0 0.0
      %4317 = vmatpush1.msra.mxu0 %v3969
      %4318 = vmatprep.subr.mxu0 0.0
      %4319 = vmatpush1.msra.mxu0 %v3970
      %4320 = vmatprep.subr.mxu0 0.0
      %4321 = vmatpush1.msra.mxu0 %v3971
      %4322 = vmatprep.subr.mxu0 0.0
      %4323 = vmatpush1.msra.mxu0 %v3972
      %4324 = vmatprep.subr.mxu0 0.0
      %4325 = vmatpush1.msra.mxu0 %v3973
      %4326 = vmatprep.subr.mxu0 0.0
      %4327 = vmatpush1.msra.mxu0 %v3974
      %4328 = vmatprep.subr.mxu0 0.0
      %4329 = vmatpush1.msra.mxu0 %v3975
      %4330 = vmatprep.subr.mxu0 0.0
      %4331 = vmatpush1.msra.mxu0 %v3976
      %4332 = vmatprep.subr.mxu0 0.0
      %4333 = vmatpush1.msra.mxu0 %v3977
      %4334 = vmatprep.subr.mxu0 0.0
      %4335 = vmatpush1.msra.mxu0 %v3978
      %4336 = vmatprep.subr.mxu0 0.0
      %4337 = vmatpush1.msra.mxu0 %v3979
      %4338 = vmatprep.subr.mxu0 0.0
      %4339 = vmatpush1.msra.mxu0 %v3980
      %4340 = vmatprep.subr.mxu0 0.0
      %4341 = vmatpush1.msra.mxu0 %v3981
      %4342 = vmatprep.subr.mxu0 0.0
      %4343 = vmatpush1.msra.mxu0 %v3982
      %4344 = vmatprep.subr.mxu0 0.0
      %4345 = vmatpush1.msra.mxu0 %v3983
      %4346 = vmatprep.subr.mxu0 0.0
      %4347 = vmatpush1.msra.mxu0 %v3984
      %4348 = vmatprep.subr.mxu0 0.0
      %4349 = vmatpush1.msra.mxu0 %v3985
      %4350 = vmatprep.subr.mxu0 0.0
      %4351 = vmatpush1.msra.mxu0 %v3986
      %4352 = vmatprep.subr.mxu0 0.0
      %4353 = vmatpush1.msra.mxu0 %v3987
      %4354 = vmatprep.subr.mxu0 0.0
      %4355 = vmatpush1.msra.mxu0 %v3988
      %4356 = vmatprep.subr.mxu0 0.0
      %4357 = vmatpush1.msra.mxu0 %v3989
      %4358 = vmatprep.subr.mxu0 0.0
      %4359 = vmatpush1.msra.mxu0 %v3990
      %4360 = vmatprep.mubr.f32.mxu0 %v3570
      %4361 = vmatmul.mubr.f32.gmra.mrb[0].mxu0 %v3783
      %v4362 = vpop.f32.mrb[0].mxu0
      %v4363 = vadd.f32 %v4138, %v4362
      %v4364 = vpop.f32.mrb[0].mxu0
      %4365 = vmatprep.mubr.f32.mxu0 %v3571
      %4366 = vmatmul.mubr.f32.gmra.mrb[0].mxu0 %v3785
      %v4367 = vpop.f32.mrb[0].mxu0
      %v4368 = vadd.f32 %v4143, %v4367
      %v4369 = vpop.f32.mrb[0].mxu0
      %4370 = vmatprep.mubr.f32.mxu0 %v3573
      %4371 = vmatmul.mubr.f32.gmra.mrb[0].mxu0 %v3788
      %v4372 = vpop.f32.mrb[0].mxu0
      %v4373 = vadd.f32 %v4148, %v4372
      %v4374 = vpop.f32.mrb[0].mxu0
      %4375 = vmatprep.mubr.f32.mxu0 %v3574
      %4376 = vmatmul.mubr.f32.gmra.mrb[0].mxu0 %v3790
      %v4377 = vpop.f32.mrb[0].mxu0
      %v4378 = vadd.f32 %v4153, %v4377
      %v4379 = vpop.f32.mrb[0].mxu0
      %4380 = vmatprep.mubr.f32.mxu0 %v3576
      %4381 = vmatmul.mubr.f32.gmra.mrb[0].mxu0 %v3793
      %v4382 = vpop.f32.mrb[0].mxu0
      %v4383 = vadd.f32 %v4158, %v4382
      %v4384 = vpop.f32.mrb[0].mxu0
      %4385 = vmatprep.mubr.f32.mxu0 %v3577
      %4386 = vmatmul.mubr.f32.gmra.mrb[0].mxu0 %v3795
      %v4387 = vpop.f32.mrb[0].mxu0
      %v4388 = vadd.f32 %v4163, %v4387
      %v4389 = vpop.f32.mrb[0].mxu0
      %4390 = vmatprep.mubr.f32.mxu0 %v3579
      %4391 = vmatmul.mubr.f32.gmra.mrb[0].mxu0 %v3798
      %v4392 = vpop.f32.mrb[0].mxu0
      %v4393 = vadd.f32 %v4168, %v4392
      %v4394 = vpop.f32.mrb[0].mxu0
      %4395 = vmatprep.mubr.f32.mxu0 %v3580
      %4396 = vmatmul.mubr.f32.gmra.mrb[0].mxu0 %v3800
      %v4397 = vpop.f32.mrb[0].mxu0
      %v4398 = vadd.f32 %v4173, %v4397
      %v4399 = vpop.f32.mrb[0].mxu0
      %4400 = vmatprep.mubr.f32.mxu0 %v3582
      %4401 = vmatmul.mubr.f32.gmra.mrb[0].mxu0 %v3803
      %v4402 = vpop.f32.mrb[0].mxu0
      %v4403 = vadd.f32 %v4178, %v4402
      %v4404 = vpop.f32.mrb[0].mxu0
      %4405 = vmatprep.mubr.f32.mxu0 %v3583
      %4406 = vmatmul.mubr.f32.gmra.mrb[0].mxu0 %v3805
      %v4407 = vpop.f32.mrb[0].mxu0
      %v4408 = vadd.f32 %v4183, %v4407
      %v4409 = vpop.f32.mrb[0].mxu0
      %4410 = vmatprep.mubr.f32.mxu0 %v3585
      %4411 = vmatmul.mubr.f32.gmra.mrb[0].mxu0 %v3808
      %v4412 = vpop.f32.mrb[0].mxu0
      %v4413 = vadd.f32 %v4188, %v4412
      %v4414 = vpop.f32.mrb[0].mxu0
      %4415 = vmatprep.mubr.f32.mxu0 %v3586
      %4416 = vmatmul.mubr.f32.gmra.mrb[0].mxu0 %v3810
      %v4417 = vpop.f32.mrb[0].mxu0
      %v4418 = vadd.f32 %v4193, %v4417
      %v4419 = vpop.f32.mrb[0].mxu0
      %4420 = vmatprep.mubr.f32.mxu0 %v3588
      %4421 = vmatmul.mubr.f32.gmra.mrb[0].mxu0 %v3813
      %v4422 = vpop.f32.mrb[0].mxu0
      %v4423 = vadd.f32 %v4198, %v4422
      %v4424 = vpop.f32.mrb[0].mxu0
      %4425 = vmatprep.mubr.f32.mxu0 %v3589
      %4426 = vmatmul.mubr.f32.gmra.mrb[0].mxu0 %v3815
      %v4427 = vpop.f32.mrb[0].mxu0
      %v4428 = vadd.f32 %v4203, %v4427
      %v4429 = vpop.f32.mrb[0].mxu0
      %4430 = vmatprep.mubr.f32.mxu0 %v3591
      %4431 = vmatmul.mubr.f32.gmra.mrb[0].mxu0 %v3818
      %v4432 = vpop.f32.mrb[0].mxu0
      %v4433 = vadd.f32 %v4208, %v4432
      %v4434 = vpop.f32.mrb[0].mxu0
      %4435 = vmatprep.mubr.f32.mxu0 %v3592
      %4436 = vmatmul.mubr.f32.gmra.mrb[0].mxu0 %v3820
      %v4437 = vpop.f32.mrb[0].mxu0
      %v4438 = vadd.f32 %v4213, %v4437
      %v4439 = vpop.f32.mrb[0].mxu0
      %4440 = vmatprep.mubr.f32.mxu0 %v3594
      %4441 = vmatmul.mubr.f32.gmra.mrb[0].mxu0 %v3823
      %v4442 = vpop.f32.mrb[0].mxu0
      %v4443 = vadd.f32 %v4218, %v4442
      %v4444 = vpop.f32.mrb[0].mxu0
      %4445 = vmatprep.mubr.f32.mxu0 %v3595
      %4446 = vmatmul.mubr.f32.gmra.mrb[0].mxu0 %v3825
      %v4447 = vpop.f32.mrb[0].mxu0
      %v4448 = vadd.f32 %v4223, %v4447
      %v4449 = vpop.f32.mrb[0].mxu0
      %4450 = vmatprep.mubr.f32.mxu0 %v3597
      %4451 = vmatmul.mubr.f32.gmra.mrb[0].mxu0 %v3828
      %v4452 = vpop.f32.mrb[0].mxu0
      %v4453 = vadd.f32 %v4228, %v4452
      %v4454 = vpop.f32.mrb[0].mxu0
      %4455 = vmatprep.mubr.f32.mxu0 %v3598
      %4456 = vmatmul.mubr.f32.gmra.mrb[0].mxu0 %v3830
      %v4457 = vpop.f32.mrb[0].mxu0
      %v4458 = vadd.f32 %v4233, %v4457
      %v4459 = vpop.f32.mrb[0].mxu0
      %4460 = vmatprep.mubr.f32.mxu0 %v3600
      %4461 = vmatmul.mubr.f32.gmra.mrb[0].mxu0 %v3833
      %v4462 = vpop.f32.mrb[0].mxu0
      %v4463 = vadd.f32 %v4238, %v4462
      %v4464 = vpop.f32.mrb[0].mxu0
      %4465 = vmatprep.mubr.f32.mxu0 %v3601
      %4466 = vmatmul.mubr.f32.gmra.mrb[0].mxu0 %v3835
      %v4467 = vpop.f32.mrb[0].mxu0
      %v4468 = vadd.f32 %v4243, %v4467
      %v4469 = vpop.f32.mrb[0].mxu0
      %4470 = vmatprep.mubr.f32.mxu0 %v3603
      %4471 = vmatmul.mubr.f32.gmra.mrb[0].mxu0 %v3838
      %v4472 = vpop.f32.mrb[0].mxu0
      %v4473 = vadd.f32 %v4248, %v4472
      %v4474 = vpop.f32.mrb[0].mxu0
      %4475 = vmatprep.mubr.f32.mxu0 %v3604
      %4476 = vmatmul.mubr.f32.gmra.mrb[0].mxu0 %v3840
      %v4477 = vpop.f32.mrb[0].mxu0
      %v4478 = vadd.f32 %v4253, %v4477
      %v4479 = vpop.f32.mrb[0].mxu0
      %4480 = vmatprep.mubr.f32.mxu0 %v3606
      %4481 = vmatmul.mubr.f32.gmra.mrb[0].mxu0 %v3843
      %v4482 = vpop.f32.mrb[0].mxu0
      %v4483 = vadd.f32 %v4258, %v4482
      %v4484 = vpop.f32.mrb[0].mxu0
      %4485 = vmatprep.mubr.f32.mxu0 %v3607
      %4486 = vmatmul.mubr.f32.gmra.mrb[0].mxu0 %v3845
      %v4487 = vpop.f32.mrb[0].mxu0
      %v4488 = vadd.f32 %v4263, %v4487
      %v4489 = vpop.f32.mrb[0].mxu0
      %4490 = vmatprep.mubr.f32.mxu0 %v3609
      %4491 = vmatmul.mubr.f32.gmra.mrb[0].mxu0 %v3848
      %v4492 = vpop.f32.mrb[0].mxu0
      %v4493 = vadd.f32 %v4268, %v4492
      %v4494 = vpop.f32.mrb[0].mxu0
      %4495 = vmatprep.mubr.f32.mxu0 %v3610
      %4496 = vmatmul.mubr.f32.gmra.mrb[0].mxu0 %v3850
      %v4497 = vpop.f32.mrb[0].mxu0
      %v4498 = vadd.f32 %v4273, %v4497
      %v4499 = vpop.f32.mrb[0].mxu0
      %4500 = vmatprep.mubr.f32.mxu0 %v3612
      %4501 = vmatmul.mubr.f32.gmra.mrb[0].mxu0 %v3853
      %v4502 = vpop.f32.mrb[0].mxu0
      %v4503 = vadd.f32 %v4278, %v4502
      %v4504 = vpop.f32.mrb[0].mxu0
      %4505 = vmatprep.mubr.f32.mxu0 %v3613
      %4506 = vmatmul.mubr.f32.gmra.mrb[0].mxu0 %v3855
      %v4507 = vpop.f32.mrb[0].mxu0
      %v4508 = vadd.f32 %v4283, %v4507
      %v4509 = vpop.f32.mrb[0].mxu0
      %4510 = vmatprep.mubr.f32.mxu0 %v3615
      %4511 = vmatmul.mubr.f32.gmra.mrb[0].mxu0 %v3858
      %v4512 = vpop.f32.mrb[0].mxu0
      %v4513 = vadd.f32 %v4288, %v4512
      %v4514 = vpop.f32.mrb[0].mxu0
      %4515 = vmatprep.mubr.f32.mxu0 %v3616
      %4516 = vmatmul.mubr.f32.gmra.mrb[0].mxu0 %v3860
      %v4517 = vpop.f32.mrb[0].mxu0
      %v4518 = vadd.f32 %v4293, %v4517
      %v4519 = vpop.f32.mrb[0].mxu0
      %4520 = vdwg.mxu0
      %4521 = vmatprep.subr.mxu0 0.0
      %4522 = vmatpush1.msra.mxu0 %v3991
      %4523 = vmatprep.subr.mxu0 0.0
      %4524 = vmatpush1.msra.mxu0 %v3992
      %4525 = vmatprep.subr.mxu0 0.0
      %4526 = vmatpush1.msra.mxu0 %v3993
      %4527 = vmatprep.subr.mxu0 0.0
      %4528 = vmatpush1.msra.mxu0 %v3994
      %4529 = vmatprep.subr.mxu0 0.0
      %4530 = vmatpush1.msra.mxu0 %v3995
      %4531 = vmatprep.subr.mxu0 0.0
      %4532 = vmatpush1.msra.mxu0 %v3996
      %4533 = vmatprep.subr.mxu0 0.0
      %4534 = vmatpush1.msra.mxu0 %v3997
      %4535 = vmatprep.subr.mxu0 0.0
      %4536 = vmatpush1.msra.mxu0 %v3998
      %4537 = vmatprep.subr.mxu0 0.0
      %4538 = vmatpush1.msra.mxu0 %v3999
      %4539 = vmatprep.subr.mxu0 0.0
      %4540 = vmatpush1.msra.mxu0 %v4000
      %4541 = vmatprep.subr.mxu0 0.0
      %4542 = vmatpush1.msra.mxu0 %v4001
      %4543 = vmatprep.subr.mxu0 0.0
      %4544 = vmatpush1.msra.mxu0 %v4002
      %4545 = vmatprep.subr.mxu0 0.0
      %4546 = vmatpush1.msra.mxu0 %v4003
      %4547 = vmatprep.subr.mxu0 0.0
      %4548 = vmatpush1.msra.mxu0 %v4004
      %4549 = vmatprep.subr.mxu0 0.0
      %4550 = vmatpush1.msra.mxu0 %v4005
      %4551 = vmatprep.subr.mxu0 0.0
      %4552 = vmatpush1.msra.mxu0 %v4006
      %4553 = vmatprep.subr.mxu0 0.0
      %4554 = vmatpush1.msra.mxu0 %v4007
      %4555 = vmatprep.subr.mxu0 0.0
      %4556 = vmatpush1.msra.mxu0 %v4008
      %4557 = vmatprep.subr.mxu0 0.0
      %4558 = vmatpush1.msra.mxu0 %v4009
      %4559 = vmatprep.subr.mxu0 0.0
      %4560 = vmatpush1.msra.mxu0 %v4010
      %4561 = vmatprep.subr.mxu0 0.0
      %4562 = vmatpush1.msra.mxu0 %v4011
      %4563 = vmatprep.subr.mxu0 0.0
      %4564 = vmatpush1.msra.mxu0 %v4012
      %4565 = vmatprep.subr.mxu0 0.0
      %4566 = vmatpush1.msra.mxu0 %v4013
      %4567 = vmatprep.subr.mxu0 0.0
      %4568 = vmatpush1.msra.mxu0 %v4014
      %4569 = vmatprep.subr.mxu0 0.0
      %4570 = vmatpush1.msra.mxu0 %v4015
      %4571 = vmatprep.subr.mxu0 0.0
      %4572 = vmatpush1.msra.mxu0 %v4016
      %4573 = vmatprep.subr.mxu0 0.0
      %4574 = vmatpush1.msra.mxu0 %v4017
      %4575 = vmatprep.subr.mxu0 0.0
      %4576 = vmatpush1.msra.mxu0 %v4018
      %4577 = vmatprep.subr.mxu0 0.0
      %4578 = vmatpush1.msra.mxu0 %v4019
      %4579 = vmatprep.subr.mxu0 0.0
      %4580 = vmatpush1.msra.mxu0 %v4020
      %4581 = vmatprep.subr.mxu0 0.0
      %4582 = vmatpush1.msra.mxu0 %v4021
      %4583 = vmatprep.subr.mxu0 0.0
      %4584 = vmatpush1.msra.mxu0 %v4022
      %4585 = vmatprep.mubr.f32.mxu0 %v3788
      %4586 = vmatmul.mubr.f32.gmra.mrb[0].mxu0 %v3676
      %v4587 = vpop.f32.mrb[0].mxu0
      %v4588 = vadd.f32 %v4363, %v4587
      %v4589 = vpop.f32.mrb[0].mxu0
      %4590 = vmatprep.mubr.f32.mxu0 %v3790
      %4591 = vmatmul.mubr.f32.gmra.mrb[0].mxu0 %v3678
      %v4592 = vpop.f32.mrb[0].mxu0
      %v4593 = vadd.f32 %v4368, %v4592
      %v4594 = vpop.f32.mrb[0].mxu0
      %4595 = vmatprep.mubr.f32.mxu0 %v3793
      %4596 = vmatmul.mubr.f32.gmra.mrb[0].mxu0 %v3681
      %v4597 = vpop.f32.mrb[0].mxu0
      %v4598 = vadd.f32 %v4373, %v4597
      %v4599 = vpop.f32.mrb[0].mxu0
      %4600 = vmatprep.mubr.f32.mxu0 %v3795
      %4601 = vmatmul.mubr.f32.gmra.mrb[0].mxu0 %v3683
      %v4602 = vpop.f32.mrb[0].mxu0
      %v4603 = vadd.f32 %v4378, %v4602
      %v4604 = vpop.f32.mrb[0].mxu0
      %4605 = vmatprep.mubr.f32.mxu0 %v3798
      %4606 = vmatmul.mubr.f32.gmra.mrb[0].mxu0 %v3686
      %v4607 = vpop.f32.mrb[0].mxu0
      %v4608 = vadd.f32 %v4383, %v4607
      %v4609 = vpop.f32.mrb[0].mxu0
      %4610 = vmatprep.mubr.f32.mxu0 %v3800
      %4611 = vmatmul.mubr.f32.gmra.mrb[0].mxu0 %v3688
      %v4612 = vpop.f32.mrb[0].mxu0
      %v4613 = vadd.f32 %v4388, %v4612
      %v4614 = vpop.f32.mrb[0].mxu0
      %4615 = vmatprep.mubr.f32.mxu0 %v3803
      %4616 = vmatmul.mubr.f32.gmra.mrb[0].mxu0 %v3691
      %v4617 = vpop.f32.mrb[0].mxu0
      %v4618 = vadd.f32 %v4393, %v4617
      %v4619 = vpop.f32.mrb[0].mxu0
      %4620 = vmatprep.mubr.f32.mxu0 %v3805
      %4621 = vmatmul.mubr.f32.gmra.mrb[0].mxu0 %v3693
      %v4622 = vpop.f32.mrb[0].mxu0
      %v4623 = vadd.f32 %v4398, %v4622
      %v4624 = vpop.f32.mrb[0].mxu0
      %4625 = vmatprep.mubr.f32.mxu0 %v3808
      %4626 = vmatmul.mubr.f32.gmra.mrb[0].mxu0 %v3696
      %v4627 = vpop.f32.mrb[0].mxu0
      %v4628 = vadd.f32 %v4403, %v4627
      %v4629 = vpop.f32.mrb[0].mxu0
      %4630 = vmatprep.mubr.f32.mxu0 %v3810
      %4631 = vmatmul.mubr.f32.gmra.mrb[0].mxu0 %v3698
      %v4632 = vpop.f32.mrb[0].mxu0
      %v4633 = vadd.f32 %v4408, %v4632
      %v4634 = vpop.f32.mrb[0].mxu0
      %4635 = vmatprep.mubr.f32.mxu0 %v3813
      %4636 = vmatmul.mubr.f32.gmra.mrb[0].mxu0 %v3701
      %v4637 = vpop.f32.mrb[0].mxu0
      %v4638 = vadd.f32 %v4413, %v4637
      %v4639 = vpop.f32.mrb[0].mxu0
      %4640 = vmatprep.mubr.f32.mxu0 %v3815
      %4641 = vmatmul.mubr.f32.gmra.mrb[0].mxu0 %v3703
      %v4642 = vpop.f32.mrb[0].mxu0
      %v4643 = vadd.f32 %v4418, %v4642
      %v4644 = vpop.f32.mrb[0].mxu0
      %4645 = vmatprep.mubr.f32.mxu0 %v3818
      %4646 = vmatmul.mubr.f32.gmra.mrb[0].mxu0 %v3706
      %v4647 = vpop.f32.mrb[0].mxu0
      %v4648 = vadd.f32 %v4423, %v4647
      %v4649 = vpop.f32.mrb[0].mxu0
      %4650 = vmatprep.mubr.f32.mxu0 %v3820
      %4651 = vmatmul.mubr.f32.gmra.mrb[0].mxu0 %v3708
      %v4652 = vpop.f32.mrb[0].mxu0
      %v4653 = vadd.f32 %v4428, %v4652
      %v4654 = vpop.f32.mrb[0].mxu0
      %4655 = vmatprep.mubr.f32.mxu0 %v3823
      %4656 = vmatmul.mubr.f32.gmra.mrb[0].mxu0 %v3711
      %v4657 = vpop.f32.mrb[0].mxu0
      %v4658 = vadd.f32 %v4433, %v4657
      %v4659 = vpop.f32.mrb[0].mxu0
      %4660 = vmatprep.mubr.f32.mxu0 %v3825
      %4661 = vmatmul.mubr.f32.gmra.mrb[0].mxu0 %v3713
      %v4662 = vpop.f32.mrb[0].mxu0
      %v4663 = vadd.f32 %v4438, %v4662
      %v4664 = vpop.f32.mrb[0].mxu0
      %4665 = vmatprep.mubr.f32.mxu0 %v3828
      %4666 = vmatmul.mubr.f32.gmra.mrb[0].mxu0 %v3716
      %v4667 = vpop.f32.mrb[0].mxu0
      %v4668 = vadd.f32 %v4443, %v4667
      %v4669 = vpop.f32.mrb[0].mxu0
      %4670 = vmatprep.mubr.f32.mxu0 %v3830
      %4671 = vmatmul.mubr.f32.gmra.mrb[0].mxu0 %v3718
      %v4672 = vpop.f32.mrb[0].mxu0
      %v4673 = vadd.f32 %v4448, %v4672
      %v4674 = vpop.f32.mrb[0].mxu0
      %4675 = vmatprep.mubr.f32.mxu0 %v3833
      %4676 = vmatmul.mubr.f32.gmra.mrb[0].mxu0 %v3721
      %v4677 = vpop.f32.mrb[0].mxu0
      %v4678 = vadd.f32 %v4453, %v4677
      %v4679 = vpop.f32.mrb[0].mxu0
      %4680 = vmatprep.mubr.f32.mxu0 %v3835
      %4681 = vmatmul.mubr.f32.gmra.mrb[0].mxu0 %v3723
      %v4682 = vpop.f32.mrb[0].mxu0
      %v4683 = vadd.f32 %v4458, %v4682
      %v4684 = vpop.f32.mrb[0].mxu0
      %4685 = vmatprep.mubr.f32.mxu0 %v3838
      %4686 = vmatmul.mubr.f32.gmra.mrb[0].mxu0 %v3726
      %v4687 = vpop.f32.mrb[0].mxu0
      %v4688 = vadd.f32 %v4463, %v4687
      %v4689 = vpop.f32.mrb[0].mxu0
      %4690 = vmatprep.mubr.f32.mxu0 %v3840
      %4691 = vmatmul.mubr.f32.gmra.mrb[0].mxu0 %v3728
      %v4692 = vpop.f32.mrb[0].mxu0
      %v4693 = vadd.f32 %v4468, %v4692
      %v4694 = vpop.f32.mrb[0].mxu0
      %4695 = vmatprep.mubr.f32.mxu0 %v3843
      %4696 = vmatmul.mubr.f32.gmra.mrb[0].mxu0 %v3731
      %v4697 = vpop.f32.mrb[0].mxu0
      %v4698 = vadd.f32 %v4473, %v4697
      %v4699 = vpop.f32.mrb[0].mxu0
      %4700 = vmatprep.mubr.f32.mxu0 %v3845
      %4701 = vmatmul.mubr.f32.gmra.mrb[0].mxu0 %v3733
      %v4702 = vpop.f32.mrb[0].mxu0
      %v4703 = vadd.f32 %v4478, %v4702
      %v4704 = vpop.f32.mrb[0].mxu0
      %4705 = vmatprep.mubr.f32.mxu0 %v3848
      %4706 = vmatmul.mubr.f32.gmra.mrb[0].mxu0 %v3736
      %v4707 = vpop.f32.mrb[0].mxu0
      %v4708 = vadd.f32 %v4483, %v4707
      %v4709 = vpop.f32.mrb[0].mxu0
      %4710 = vmatprep.mubr.f32.mxu0 %v3850
      %4711 = vmatmul.mubr.f32.gmra.mrb[0].mxu0 %v3738
      %v4712 = vpop.f32.mrb[0].mxu0
      %v4713 = vadd.f32 %v4488, %v4712
      %v4714 = vpop.f32.mrb[0].mxu0
      %4715 = vmatprep.mubr.f32.mxu0 %v3853
      %4716 = vmatmul.mubr.f32.gmra.mrb[0].mxu0 %v3741
      %v4717 = vpop.f32.mrb[0].mxu0
      %v4718 = vadd.f32 %v4493, %v4717
      %v4719 = vpop.f32.mrb[0].mxu0
      %4720 = vmatprep.mubr.f32.mxu0 %v3855
      %4721 = vmatmul.mubr.f32.gmra.mrb[0].mxu0 %v3743
      %v4722 = vpop.f32.mrb[0].mxu0
      %v4723 = vadd.f32 %v4498, %v4722
      %v4724 = vpop.f32.mrb[0].mxu0
      %4725 = vmatprep.mubr.f32.mxu0 %v3858
      %4726 = vmatmul.mubr.f32.gmra.mrb[0].mxu0 %v3746
      %v4727 = vpop.f32.mrb[0].mxu0
      %v4728 = vadd.f32 %v4503, %v4727
      %v4729 = vpop.f32.mrb[0].mxu0
      %4730 = vmatprep.mubr.f32.mxu0 %v3860
      %4731 = vmatmul.mubr.f32.gmra.mrb[0].mxu0 %v3748
      %v4732 = vpop.f32.mrb[0].mxu0
      %v4733 = vadd.f32 %v4508, %v4732
      %v4734 = vpop.f32.mrb[0].mxu0
      %4735 = vmatprep.mubr.f32.mxu0 %v3905
      %4736 = vmatmul.mubr.f32.gmra.mrb[0].mxu0 %v3898
      %v4737 = vpop.f32.mrb[0].mxu0
      %v4738 = vadd.f32 %v4513, %v4737
      %v4739 = vpop.f32.mrb[0].mxu0
      %4740 = vmatprep.mubr.f32.mxu0 %v3907
      %4741 = vmatmul.mubr.f32.gmra.mrb[0].mxu0 %v3900
      %v4742 = vpop.f32.mrb[0].mxu0
      %v4743 = vadd.f32 %v4518, %v4742
      %v4744 = vpop.f32.mrb[0].mxu0
      %4745 = vdwg.mxu0
      %4746 = vmatprep.subr.mxu0 0.0
      %4747 = vmatpush1.msra.mxu0 %v4023
      %4748 = vmatprep.subr.mxu0 0.0
      %4749 = vmatpush1.msra.mxu0 %v4024
      %4750 = vmatprep.subr.mxu0 0.0
      %4751 = vmatpush1.msra.mxu0 %v4025
      %4752 = vmatprep.subr.mxu0 0.0
      %4753 = vmatpush1.msra.mxu0 %v4026
      %4754 = vmatprep.subr.mxu0 0.0
      %4755 = vmatpush1.msra.mxu0 %v4027
      %4756 = vmatprep.subr.mxu0 0.0
      %4757 = vmatpush1.msra.mxu0 %v4028
      %4758 = vmatprep.subr.mxu0 0.0
      %4759 = vmatpush1.msra.mxu0 %v4029
      %4760 = vmatprep.subr.mxu0 0.0
      %4761 = vmatpush1.msra.mxu0 %v4030
      %4762 = vmatprep.subr.mxu0 0.0
      %4763 = vmatpush1.msra.mxu0 %v4031
      %4764 = vmatprep.subr.mxu0 0.0
      %4765 = vmatpush1.msra.mxu0 %v4032
      %4766 = vmatprep.subr.mxu0 0.0
      %4767 = vmatpush1.msra.mxu0 %v4033
      %4768 = vmatprep.subr.mxu0 0.0
      %4769 = vmatpush1.msra.mxu0 %v4034
      %4770 = vmatprep.subr.mxu0 0.0
      %4771 = vmatpush1.msra.mxu0 %v4035
      %4772 = vmatprep.subr.mxu0 0.0
      %4773 = vmatpush1.msra.mxu0 %v4036
      %4774 = vmatprep.subr.mxu0 0.0
      %4775 = vmatpush1.msra.mxu0 %v4037
      %4776 = vmatprep.subr.mxu0 0.0
      %4777 = vmatpush1.msra.mxu0 %v4038
      %4778 = vmatprep.subr.mxu0 0.0
      %4779 = vmatpush1.msra.mxu0 %v4039
      %4780 = vmatprep.subr.mxu0 0.0
      %4781 = vmatpush1.msra.mxu0 %v4040
      %4782 = vmatprep.subr.mxu0 0.0
      %4783 = vmatpush1.msra.mxu0 %v4041
      %4784 = vmatprep.subr.mxu0 0.0
      %4785 = vmatpush1.msra.mxu0 %v4042
      %4786 = vmatprep.subr.mxu0 0.0
      %4787 = vmatpush1.msra.mxu0 %v4043
      %4788 = vmatprep.subr.mxu0 0.0
      %4789 = vmatpush1.msra.mxu0 %v4044
      %4790 = vmatprep.subr.mxu0 0.0
      %4791 = vmatpush1.msra.mxu0 %v4045
      %4792 = vmatprep.subr.mxu0 0.0
      %4793 = vmatpush1.msra.mxu0 %v4046
      %4794 = vmatprep.subr.mxu0 0.0
      %4795 = vmatpush1.msra.mxu0 %v4047
      %4796 = vmatprep.subr.mxu0 0.0
      %4797 = vmatpush1.msra.mxu0 %v4048
      %4798 = vmatprep.subr.mxu0 0.0
      %4799 = vmatpush1.msra.mxu0 %v4049
      %4800 = vmatprep.subr.mxu0 0.0
      %4801 = vmatpush1.msra.mxu0 %v4050
      %4802 = vmatprep.subr.mxu0 0.0
      %4803 = vmatpush1.msra.mxu0 %v4051
      %4804 = vmatprep.subr.mxu0 0.0
      %4805 = vmatpush1.msra.mxu0 %v4052
      %4806 = vmatprep.subr.mxu0 0.0
      %4807 = vmatpush1.msra.mxu0 %v4053
      %4808 = vmatprep.subr.mxu0 0.0
      %4809 = vmatpush1.msra.mxu0 %v4054
      %4810 = vmatprep.mubr.f32.mxu0 %v3681
      %4811 = vmatmul.mubr.f32.gmra.mrb[0].mxu0 %v3573
      %v4812 = vpop.f32.mrb[0].mxu0
      %v4813 = vadd.f32 %v4588, %v4812
      %v4814 = vpop.f32.mrb[0].mxu0
      %4815 = vmatprep.mubr.f32.mxu0 %v3683
      %4816 = vmatmul.mubr.f32.gmra.mrb[0].mxu0 %v3574
      %v4817 = vpop.f32.mrb[0].mxu0
      %v4818 = vadd.f32 %v4593, %v4817
      %v4819 = vpop.f32.mrb[0].mxu0
      %4820 = vmatprep.mubr.f32.mxu0 %v3686
      %4821 = vmatmul.mubr.f32.gmra.mrb[0].mxu0 %v3576
      %v4822 = vpop.f32.mrb[0].mxu0
      %v4823 = vadd.f32 %v4598, %v4822
      %v4824 = vpop.f32.mrb[0].mxu0
      %4825 = vmatprep.mubr.f32.mxu0 %v3688
      %4826 = vmatmul.mubr.f32.gmra.mrb[0].mxu0 %v3577
      %v4827 = vpop.f32.mrb[0].mxu0
      %v4828 = vadd.f32 %v4603, %v4827
      %v4829 = vpop.f32.mrb[0].mxu0
      %4830 = vmatprep.mubr.f32.mxu0 %v3691
      %4831 = vmatmul.mubr.f32.gmra.mrb[0].mxu0 %v3579
      %v4832 = vpop.f32.mrb[0].mxu0
      %v4833 = vadd.f32 %v4608, %v4832
      %v4834 = vpop.f32.mrb[0].mxu0
      %4835 = vmatprep.mubr.f32.mxu0 %v3693
      %4836 = vmatmul.mubr.f32.gmra.mrb[0].mxu0 %v3580
      %v4837 = vpop.f32.mrb[0].mxu0
      %v4838 = vadd.f32 %v4613, %v4837
      %v4839 = vpop.f32.mrb[0].mxu0
      %4840 = vmatprep.mubr.f32.mxu0 %v3696
      %4841 = vmatmul.mubr.f32.gmra.mrb[0].mxu0 %v3582
      %v4842 = vpop.f32.mrb[0].mxu0
      %v4843 = vadd.f32 %v4618, %v4842
      %v4844 = vpop.f32.mrb[0].mxu0
      %4845 = vmatprep.mubr.f32.mxu0 %v3698
      %4846 = vmatmul.mubr.f32.gmra.mrb[0].mxu0 %v3583
      %v4847 = vpop.f32.mrb[0].mxu0
      %v4848 = vadd.f32 %v4623, %v4847
      %v4849 = vpop.f32.mrb[0].mxu0
      %4850 = vmatprep.mubr.f32.mxu0 %v3701
      %4851 = vmatmul.mubr.f32.gmra.mrb[0].mxu0 %v3585
      %v4852 = vpop.f32.mrb[0].mxu0
      %v4853 = vadd.f32 %v4628, %v4852
      %v4854 = vpop.f32.mrb[0].mxu0
      %4855 = vmatprep.mubr.f32.mxu0 %v3703
      %4856 = vmatmul.mubr.f32.gmra.mrb[0].mxu0 %v3586
      %v4857 = vpop.f32.mrb[0].mxu0
      %v4858 = vadd.f32 %v4633, %v4857
      %v4859 = vpop.f32.mrb[0].mxu0
      %4860 = vmatprep.mubr.f32.mxu0 %v3706
      %4861 = vmatmul.mubr.f32.gmra.mrb[0].mxu0 %v3588
      %v4862 = vpop.f32.mrb[0].mxu0
      %v4863 = vadd.f32 %v4638, %v4862
      %v4864 = vpop.f32.mrb[0].mxu0
      %4865 = vmatprep.mubr.f32.mxu0 %v3708
      %4866 = vmatmul.mubr.f32.gmra.mrb[0].mxu0 %v3589
      %v4867 = vpop.f32.mrb[0].mxu0
      %v4868 = vadd.f32 %v4643, %v4867
      %v4869 = vpop.f32.mrb[0].mxu0
      %4870 = vmatprep.mubr.f32.mxu0 %v3711
      %4871 = vmatmul.mubr.f32.gmra.mrb[0].mxu0 %v3591
      %v4872 = vpop.f32.mrb[0].mxu0
      %v4873 = vadd.f32 %v4648, %v4872
      %v4874 = vpop.f32.mrb[0].mxu0
      %4875 = vmatprep.mubr.f32.mxu0 %v3713
      %4876 = vmatmul.mubr.f32.gmra.mrb[0].mxu0 %v3592
      %v4877 = vpop.f32.mrb[0].mxu0
      %v4878 = vadd.f32 %v4653, %v4877
      %v4879 = vpop.f32.mrb[0].mxu0
      %4880 = vmatprep.mubr.f32.mxu0 %v3716
      %4881 = vmatmul.mubr.f32.gmra.mrb[0].mxu0 %v3594
      %v4882 = vpop.f32.mrb[0].mxu0
      %v4883 = vadd.f32 %v4658, %v4882
      %v4884 = vpop.f32.mrb[0].mxu0
      %4885 = vmatprep.mubr.f32.mxu0 %v3718
      %4886 = vmatmul.mubr.f32.gmra.mrb[0].mxu0 %v3595
      %v4887 = vpop.f32.mrb[0].mxu0
      %v4888 = vadd.f32 %v4663, %v4887
      %v4889 = vpop.f32.mrb[0].mxu0
      %4890 = vmatprep.mubr.f32.mxu0 %v3721
      %4891 = vmatmul.mubr.f32.gmra.mrb[0].mxu0 %v3597
      %v4892 = vpop.f32.mrb[0].mxu0
      %v4893 = vadd.f32 %v4668, %v4892
      %v4894 = vpop.f32.mrb[0].mxu0
      %4895 = vmatprep.mubr.f32.mxu0 %v3723
      %4896 = vmatmul.mubr.f32.gmra.mrb[0].mxu0 %v3598
      %v4897 = vpop.f32.mrb[0].mxu0
      %v4898 = vadd.f32 %v4673, %v4897
      %v4899 = vpop.f32.mrb[0].mxu0
      %4900 = vmatprep.mubr.f32.mxu0 %v3726
      %4901 = vmatmul.mubr.f32.gmra.mrb[0].mxu0 %v3600
      %v4902 = vpop.f32.mrb[0].mxu0
      %v4903 = vadd.f32 %v4678, %v4902
      %v4904 = vpop.f32.mrb[0].mxu0
      %4905 = vmatprep.mubr.f32.mxu0 %v3728
      %4906 = vmatmul.mubr.f32.gmra.mrb[0].mxu0 %v3601
      %v4907 = vpop.f32.mrb[0].mxu0
      %v4908 = vadd.f32 %v4683, %v4907
      %v4909 = vpop.f32.mrb[0].mxu0
      %4910 = vmatprep.mubr.f32.mxu0 %v3731
      %4911 = vmatmul.mubr.f32.gmra.mrb[0].mxu0 %v3603
      %v4912 = vpop.f32.mrb[0].mxu0
      %v4913 = vadd.f32 %v4688, %v4912
      %v4914 = vpop.f32.mrb[0].mxu0
      %4915 = vmatprep.mubr.f32.mxu0 %v3733
      %4916 = vmatmul.mubr.f32.gmra.mrb[0].mxu0 %v3604
      %v4917 = vpop.f32.mrb[0].mxu0
      %v4918 = vadd.f32 %v4693, %v4917
      %v4919 = vpop.f32.mrb[0].mxu0
      %4920 = vmatprep.mubr.f32.mxu0 %v3736
      %4921 = vmatmul.mubr.f32.gmra.mrb[0].mxu0 %v3606
      %v4922 = vpop.f32.mrb[0].mxu0
      %v4923 = vadd.f32 %v4698, %v4922
      %v4924 = vpop.f32.mrb[0].mxu0
      %4925 = vmatprep.mubr.f32.mxu0 %v3738
      %4926 = vmatmul.mubr.f32.gmra.mrb[0].mxu0 %v3607
      %v4927 = vpop.f32.mrb[0].mxu0
      %v4928 = vadd.f32 %v4703, %v4927
      %v4929 = vpop.f32.mrb[0].mxu0
      %4930 = vmatprep.mubr.f32.mxu0 %v3741
      %4931 = vmatmul.mubr.f32.gmra.mrb[0].mxu0 %v3609
      %v4932 = vpop.f32.mrb[0].mxu0
      %v4933 = vadd.f32 %v4708, %v4932
      %v4934 = vpop.f32.mrb[0].mxu0
      %4935 = vmatprep.mubr.f32.mxu0 %v3743
      %4936 = vmatmul.mubr.f32.gmra.mrb[0].mxu0 %v3610
      %v4937 = vpop.f32.mrb[0].mxu0
      %v4938 = vadd.f32 %v4713, %v4937
      %v4939 = vpop.f32.mrb[0].mxu0
      %4940 = vmatprep.mubr.f32.mxu0 %v3746
      %4941 = vmatmul.mubr.f32.gmra.mrb[0].mxu0 %v3612
      %v4942 = vpop.f32.mrb[0].mxu0
      %v4943 = vadd.f32 %v4718, %v4942
      %v4944 = vpop.f32.mrb[0].mxu0
      %4945 = vmatprep.mubr.f32.mxu0 %v3748
      %4946 = vmatmul.mubr.f32.gmra.mrb[0].mxu0 %v3613
      %v4947 = vpop.f32.mrb[0].mxu0
      %v4948 = vadd.f32 %v4723, %v4947
      %v4949 = vpop.f32.mrb[0].mxu0
      %4950 = vmatprep.mubr.f32.mxu0 %v3898
      %4951 = vmatmul.mubr.f32.gmra.mrb[0].mxu0 %v3615
      %v4952 = vpop.f32.mrb[0].mxu0
      %v4953 = vadd.f32 %v4728, %v4952
      %v4954 = vpop.f32.mrb[0].mxu0
      %4955 = vmatprep.mubr.f32.mxu0 %v3900
      %4956 = vmatmul.mubr.f32.gmra.mrb[0].mxu0 %v3616
      %v4957 = vpop.f32.mrb[0].mxu0
      %v4958 = vadd.f32 %v4733, %v4957
      %v4959 = vpop.f32.mrb[0].mxu0
      %4960 = vmatprep.mubr.f32.mxu0 %v3915
      %4961 = vmatmul.mubr.f32.gmra.mrb[0].mxu0 %v3618
      %v4962 = vpop.f32.mrb[0].mxu0
      %v4963 = vadd.f32 %v4738, %v4962
      %v4964 = vpop.f32.mrb[0].mxu0
      %4965 = vmatprep.mubr.f32.mxu0 %v3917
      %4966 = vmatmul.mubr.f32.gmra.mrb[0].mxu0 %v3619
      %v4967 = vpop.f32.mrb[0].mxu0
      %v4968 = vadd.f32 %v4743, %v4967
      %v4969 = vpop.f32.mrb[0].mxu0
      %4970 = vdwg.mxu0
      %4971 = vmatprep.subr.mxu0 0.0
      %4972 = vmatpush1.msra.mxu0 %v4055
      %4973 = vmatprep.subr.mxu0 0.0
      %4974 = vmatpush1.msra.mxu0 %v4056
      %4975 = vmatprep.subr.mxu0 0.0
      %4976 = vmatpush1.msra.mxu0 %v4057
      %4977 = vmatprep.subr.mxu0 0.0
      %4978 = vmatpush1.msra.mxu0 %v4058
      %4979 = vmatprep.subr.mxu0 0.0
      %4980 = vmatpush1.msra.mxu0 %v4059
      %4981 = vmatprep.subr.mxu0 0.0
      %4982 = vmatpush1.msra.mxu0 %v4060
      %4983 = vmatprep.subr.mxu0 0.0
      %4984 = vmatpush1.msra.mxu0 %v4061
      %4985 = vmatprep.subr.mxu0 0.0
      %4986 = vmatpush1.msra.mxu0 %v4062
      %4987 = vmatprep.subr.mxu0 0.0
      %4988 = vmatpush1.msra.mxu0 %v4063
      %4989 = vmatprep.subr.mxu0 0.0
      %4990 = vmatpush1.msra.mxu0 %v4064
      %4991 = vmatprep.subr.mxu0 0.0
      %4992 = vmatpush1.msra.mxu0 %v4065
      %4993 = vmatprep.subr.mxu0 0.0
      %4994 = vmatpush1.msra.mxu0 %v4066
      %4995 = vmatprep.subr.mxu0 0.0
      %4996 = vmatpush1.msra.mxu0 %v4067
      %4997 = vmatprep.subr.mxu0 0.0
      %4998 = vmatpush1.msra.mxu0 %v4068
      %4999 = vmatprep.subr.mxu0 0.0
      %5000 = vmatpush1.msra.mxu0 %v4069
      %5001 = vmatprep.subr.mxu0 0.0
      %5002 = vmatpush1.msra.mxu0 %v4070
      %5003 = vmatprep.subr.mxu0 0.0
      %5004 = vmatpush1.msra.mxu0 0.0
      %5005 = vmatprep.subr.mxu0 0.0
      %5006 = vmatpush1.msra.mxu0 0.0
      %5007 = vmatprep.subr.mxu0 0.0
      %5008 = vmatpush1.msra.mxu0 0.0
      %5009 = vmatprep.subr.mxu0 0.0
      %5010 = vmatpush1.msra.mxu0 0.0
      %5011 = vmatprep.subr.mxu0 0.0
      %5012 = vmatpush1.msra.mxu0 0.0
      %5013 = vmatprep.subr.mxu0 0.0
      %5014 = vmatpush1.msra.mxu0 0.0
      %5015 = vmatprep.subr.mxu0 0.0
      %5016 = vmatpush1.msra.mxu0 0.0
      %5017 = vmatprep.subr.mxu0 0.0
      %5018 = vmatpush1.msra.mxu0 0.0
      %5019 = vmatprep.subr.mxu0 0.0
      %5020 = vmatpush1.msra.mxu0 0.0
      %5021 = vmatprep.subr.mxu0 0.0
      %5022 = vmatpush1.msra.mxu0 0.0
      %5023 = vmatprep.subr.mxu0 0.0
      %5024 = vmatpush1.msra.mxu0 0.0
      %5025 = vmatprep.subr.mxu0 0.0
      %5026 = vmatpush1.msra.mxu0 0.0
      %5027 = vmatprep.subr.mxu0 0.0
      %5028 = vmatpush1.msra.mxu0 0.0
      %5029 = vmatprep.subr.mxu0 0.0
      %5030 = vmatpush1.msra.mxu0 0.0
      %5031 = vmatprep.subr.mxu0 0.0
      %5032 = vmatpush1.msra.mxu0 0.0
      %5033 = vmatprep.subr.mxu0 0.0
      %5034 = vmatpush1.msra.mxu0 0.0
      %5035 = vmatprep.mubr.f32.mxu0 0.0
      %5036 = vmatmul.mubr.f32.gmra.mrb[0].mxu0 %v3793
      %v5037 = vpop.f32.mrb[0].mxu0
      %v5038 = vadd.f32 %v4813, %v5037
      %v5039 = vpop.f32.mrb[0].mxu0
      %5040 = vmatprep.mubr.f32.mxu0 0.0
      %5041 = vmatmul.mubr.f32.gmra.mrb[0].mxu0 %v3795
      %v5042 = vpop.f32.mrb[0].mxu0
      %v5043 = vadd.f32 %v4818, %v5042
      %v5044 = vpop.f32.mrb[0].mxu0
      %5045 = vmatprep.mubr.f32.mxu0 0.0
      %5046 = vmatmul.mubr.f32.gmra.mrb[0].mxu0 %v3798
      %v5047 = vpop.f32.mrb[0].mxu0
      %v5048 = vadd.f32 %v4823, %v5047
      %v5049 = vpop.f32.mrb[0].mxu0
      %5050 = vmatprep.mubr.f32.mxu0 0.0
      %5051 = vmatmul.mubr.f32.gmra.mrb[0].mxu0 %v3800
      %v5052 = vpop.f32.mrb[0].mxu0
      %v5053 = vadd.f32 %v4828, %v5052
      %v5054 = vpop.f32.mrb[0].mxu0
      %5055 = vmatprep.mubr.f32.mxu0 0.0
      %5056 = vmatmul.mubr.f32.gmra.mrb[0].mxu0 %v3803
      %v5057 = vpop.f32.mrb[0].mxu0
      %v5058 = vadd.f32 %v4833, %v5057
      %v5059 = vpop.f32.mrb[0].mxu0
      %5060 = vmatprep.mubr.f32.mxu0 0.0
      %5061 = vmatmul.mubr.f32.gmra.mrb[0].mxu0 %v3805
      %v5062 = vpop.f32.mrb[0].mxu0
      %v5063 = vadd.f32 %v4838, %v5062
      %v5064 = vpop.f32.mrb[0].mxu0
      %5065 = vmatprep.mubr.f32.mxu0 0.0
      %5066 = vmatmul.mubr.f32.gmra.mrb[0].mxu0 %v3808
      %v5067 = vpop.f32.mrb[0].mxu0
      %v5068 = vadd.f32 %v4843, %v5067
      %v5069 = vpop.f32.mrb[0].mxu0
      %5070 = vmatprep.mubr.f32.mxu0 0.0
      %5071 = vmatmul.mubr.f32.gmra.mrb[0].mxu0 %v3810
      %v5072 = vpop.f32.mrb[0].mxu0
      %v5073 = vadd.f32 %v4848, %v5072
      %v5074 = vpop.f32.mrb[0].mxu0
      %5075 = vmatprep.mubr.f32.mxu0 0.0
      %5076 = vmatmul.mubr.f32.gmra.mrb[0].mxu0 %v3813
      %v5077 = vpop.f32.mrb[0].mxu0
      %v5078 = vadd.f32 %v4853, %v5077
      %v5079 = vpop.f32.mrb[0].mxu0
      %5080 = vmatprep.mubr.f32.mxu0 0.0
      %5081 = vmatmul.mubr.f32.gmra.mrb[0].mxu0 %v3815
      %v5082 = vpop.f32.mrb[0].mxu0
      %v5083 = vadd.f32 %v4858, %v5082
      %v5084 = vpop.f32.mrb[0].mxu0
      %5085 = vmatprep.mubr.f32.mxu0 0.0
      %5086 = vmatmul.mubr.f32.gmra.mrb[0].mxu0 %v3818
      %v5087 = vpop.f32.mrb[0].mxu0
      %v5088 = vadd.f32 %v4863, %v5087
      %v5089 = vpop.f32.mrb[0].mxu0
      %5090 = vmatprep.mubr.f32.mxu0 0.0
      %5091 = vmatmul.mubr.f32.gmra.mrb[0].mxu0 %v3820
      %v5092 = vpop.f32.mrb[0].mxu0
      %v5093 = vadd.f32 %v4868, %v5092
      %v5094 = vpop.f32.mrb[0].mxu0
      %5095 = vmatprep.mubr.f32.mxu0 0.0
      %5096 = vmatmul.mubr.f32.gmra.mrb[0].mxu0 %v3823
      %v5097 = vpop.f32.mrb[0].mxu0
      %v5098 = vadd.f32 %v4873, %v5097
      %v5099 = vpop.f32.mrb[0].mxu0
      %5100 = vmatprep.mubr.f32.mxu0 0.0
      %5101 = vmatmul.mubr.f32.gmra.mrb[0].mxu0 %v3825
      %v5102 = vpop.f32.mrb[0].mxu0
      %v5103 = vadd.f32 %v4878, %v5102
      %v5104 = vpop.f32.mrb[0].mxu0
      %5105 = vmatprep.mubr.f32.mxu0 0.0
      %5106 = vmatmul.mubr.f32.gmra.mrb[0].mxu0 %v3828
      %v5107 = vpop.f32.mrb[0].mxu0
      %v5108 = vadd.f32 %v4883, %v5107
      %v5109 = vpop.f32.mrb[0].mxu0
      %5110 = vmatprep.mubr.f32.mxu0 0.0
      %5111 = vmatmul.mubr.f32.gmra.mrb[0].mxu0 %v3830
      %v5112 = vpop.f32.mrb[0].mxu0
      %v5113 = vadd.f32 %v4888, %v5112
      %v5114 = vpop.f32.mrb[0].mxu0
      %5115 = vmatprep.mubr.f32.mxu0 0.0
      %5116 = vmatmul.mubr.f32.gmra.mrb[0].mxu0 %v3833
      %v5117 = vpop.f32.mrb[0].mxu0
      %v5118 = vadd.f32 %v4893, %v5117
      %v5119 = vpop.f32.mrb[0].mxu0
      %5120 = vmatprep.mubr.f32.mxu0 0.0
      %5121 = vmatmul.mubr.f32.gmra.mrb[0].mxu0 %v3835
      %v5122 = vpop.f32.mrb[0].mxu0
      %v5123 = vadd.f32 %v4898, %v5122
      %v5124 = vpop.f32.mrb[0].mxu0
      %5125 = vmatprep.mubr.f32.mxu0 0.0
      %5126 = vmatmul.mubr.f32.gmra.mrb[0].mxu0 %v3838
      %v5127 = vpop.f32.mrb[0].mxu0
      %v5128 = vadd.f32 %v4903, %v5127
      %v5129 = vpop.f32.mrb[0].mxu0
      %5130 = vmatprep.mubr.f32.mxu0 0.0
      %5131 = vmatmul.mubr.f32.gmra.mrb[0].mxu0 %v3840
      %v5132 = vpop.f32.mrb[0].mxu0
      %v5133 = vadd.f32 %v4908, %v5132
      %v5134 = vpop.f32.mrb[0].mxu0
      %5135 = vmatprep.mubr.f32.mxu0 0.0
      %5136 = vmatmul.mubr.f32.gmra.mrb[0].mxu0 %v3843
      %v5137 = vpop.f32.mrb[0].mxu0
      %v5138 = vadd.f32 %v4913, %v5137
      %v5139 = vpop.f32.mrb[0].mxu0
      %5140 = vmatprep.mubr.f32.mxu0 0.0
      %5141 = vmatmul.mubr.f32.gmra.mrb[0].mxu0 %v3845
      %v5142 = vpop.f32.mrb[0].mxu0
      %v5143 = vadd.f32 %v4918, %v5142
      %v5144 = vpop.f32.mrb[0].mxu0
      %5145 = vmatprep.mubr.f32.mxu0 0.0
      %5146 = vmatmul.mubr.f32.gmra.mrb[0].mxu0 %v3848
      %v5147 = vpop.f32.mrb[0].mxu0
      %v5148 = vadd.f32 %v4923, %v5147
      %v5149 = vpop.f32.mrb[0].mxu0
      %5150 = vmatprep.mubr.f32.mxu0 0.0
      %5151 = vmatmul.mubr.f32.gmra.mrb[0].mxu0 %v3850
      %v5152 = vpop.f32.mrb[0].mxu0
      %v5153 = vadd.f32 %v4928, %v5152
      %v5154 = vpop.f32.mrb[0].mxu0
      %5155 = vmatprep.mubr.f32.mxu0 0.0
      %5156 = vmatmul.mubr.f32.gmra.mrb[0].mxu0 %v3853
      %v5157 = vpop.f32.mrb[0].mxu0
      %v5158 = vadd.f32 %v4933, %v5157
      %v5159 = vpop.f32.mrb[0].mxu0
      %5160 = vmatprep.mubr.f32.mxu0 0.0
      %5161 = vmatmul.mubr.f32.gmra.mrb[0].mxu0 %v3855
      %v5162 = vpop.f32.mrb[0].mxu0
      %v5163 = vadd.f32 %v4938, %v5162
      %v5164 = vpop.f32.mrb[0].mxu0
      %5165 = vmatprep.mubr.f32.mxu0 0.0
      %5166 = vmatmul.mubr.f32.gmra.mrb[0].mxu0 %v3858
      %v5167 = vpop.f32.mrb[0].mxu0
      %v5168 = vadd.f32 %v4943, %v5167
      %v5169 = vpop.f32.mrb[0].mxu0
      %5170 = vmatprep.mubr.f32.mxu0 0.0
      %5171 = vmatmul.mubr.f32.gmra.mrb[0].mxu0 %v3860
      %v5172 = vpop.f32.mrb[0].mxu0
      %v5173 = vadd.f32 %v4948, %v5172
      %v5174 = vpop.f32.mrb[0].mxu0
      %5175 = vmatprep.mubr.f32.mxu0 0.0
      %5176 = vmatmul.mubr.f32.gmra.mrb[0].mxu0 %v3905
      %v5177 = vpop.f32.mrb[0].mxu0
      %v5178 = vadd.f32 %v4953, %v5177
      %v5179 = vpop.f32.mrb[0].mxu0
      %5180 = vmatprep.mubr.f32.mxu0 0.0
      %5181 = vmatmul.mubr.f32.gmra.mrb[0].mxu0 %v3907
      %v5182 = vpop.f32.mrb[0].mxu0
      %v5183 = vadd.f32 %v4958, %v5182
      %v5184 = vpop.f32.mrb[0].mxu0
      %5185 = vmatprep.mubr.f32.mxu0 0.0
      %5186 = vmatmul.mubr.f32.gmra.mrb[0].mxu0 %v3922
      %v5187 = vpop.f32.mrb[0].mxu0
      %v5188 = vadd.f32 %v4963, %v5187
      %v5189 = vpop.f32.mrb[0].mxu0
      %5190 = vmatprep.mubr.f32.mxu0 0.0
      %5191 = vmatmul.mubr.f32.gmra.mrb[0].mxu0 %v3924
      %v5192 = vpop.f32.mrb[0].mxu0
      %v5193 = vadd.f32 %v4968, %v5192
      %v5194 = vpop.f32.mrb[0].mxu0
      %5195 = vdwg.mxu0
      %v5196 = vld [vmem:[%s5] sm:$0x1]
      %v5198 = vlaneseq
      %v5199 = vshrl.u32 %v5198, 7
      %v5200 = vsub.s32 0, %v5199
      %v5201 = vrot.slane %v5196, %v5200
      %v5203 = vmul.f32 %v5038, %v5201
      %v5204 = vmul.f32 %v5043, %v5201
      %v5205 = vmul.f32 %v5048, %v5201
      %v5206 = vmul.f32 %v5053, %v5201
      %v5207 = vmul.f32 %v5058, %v5201
      %v5208 = vmul.f32 %v5063, %v5201
      %v5209 = vmul.f32 %v5068, %v5201
      %v5210 = vmul.f32 %v5073, %v5201
      %v5211 = vmul.f32 %v5078, %v5201
      %v5212 = vmul.f32 %v5083, %v5201
      %v5213 = vmul.f32 %v5088, %v5201
      %v5214 = vmul.f32 %v5093, %v5201
      %v5215 = vmul.f32 %v5098, %v5201
      %v5216 = vmul.f32 %v5103, %v5201
      %v5217 = vmul.f32 %v5108, %v5201
      %v5218 = vmul.f32 %v5113, %v5201
      %v5219 = vmul.f32 %v5118, %v5201
      %v5220 = vmul.f32 %v5123, %v5201
      %v5221 = vmul.f32 %v5128, %v5201
      %v5222 = vmul.f32 %v5133, %v5201
      %v5223 = vmul.f32 %v5138, %v5201
      %v5224 = vmul.f32 %v5143, %v5201
      %v5225 = vmul.f32 %v5148, %v5201
      %v5226 = vmul.f32 %v5153, %v5201
      %v5227 = vmul.f32 %v5158, %v5201
      %v5228 = vmul.f32 %v5163, %v5201
      %v5229 = vmul.f32 %v5168, %v5201
      %v5230 = vmul.f32 %v5173, %v5201
      %v5231 = vmul.f32 %v5178, %v5201
      %v5232 = vmul.f32 %v5183, %v5201
      %v5233 = vmul.f32 %v5188, %v5201
      %v5234 = vmul.f32 %v5193, %v5201
      %v5235 = vld [vmem:[%s6] sm:$0x1]
      %v5237 = vlaneseq
      %v5238 = vshrl.u32 %v5237, 7
      %v5239 = vsub.s32 0, %v5238
      %v5240 = vrot.slane %v5235, %v5239
      %v5242 = vadd.f32 %v5203, %v5240
      %v5243 = vadd.f32 %v5204, %v5240
      %v5244 = vadd.f32 %v5205, %v5240
      %v5245 = vadd.f32 %v5206, %v5240
      %v5246 = vadd.f32 %v5207, %v5240
      %v5247 = vadd.f32 %v5208, %v5240
      %v5248 = vadd.f32 %v5209, %v5240
      %v5249 = vadd.f32 %v5210, %v5240
      %v5250 = vadd.f32 %v5211, %v5240
      %v5251 = vadd.f32 %v5212, %v5240
      %v5252 = vadd.f32 %v5213, %v5240
      %v5253 = vadd.f32 %v5214, %v5240
      %v5254 = vadd.f32 %v5215, %v5240
      %v5255 = vadd.f32 %v5216, %v5240
      %v5256 = vadd.f32 %v5217, %v5240
      %v5257 = vadd.f32 %v5218, %v5240
      %v5258 = vadd.f32 %v5219, %v5240
      %v5259 = vadd.f32 %v5220, %v5240
      %v5260 = vadd.f32 %v5221, %v5240
      %v5261 = vadd.f32 %v5222, %v5240
      %v5262 = vadd.f32 %v5223, %v5240
      %v5263 = vadd.f32 %v5224, %v5240
      %v5264 = vadd.f32 %v5225, %v5240
      %v5265 = vadd.f32 %v5226, %v5240
      %v5266 = vadd.f32 %v5227, %v5240
      %v5267 = vadd.f32 %v5228, %v5240
      %v5268 = vadd.f32 %v5229, %v5240
      %v5269 = vadd.f32 %v5230, %v5240
      %v5270 = vadd.f32 %v5231, %v5240
      %v5271 = vadd.f32 %v5232, %v5240
      %v5272 = vadd.f32 %v5233, %v5240
      %v5273 = vadd.f32 %v5234, %v5240
      %v5274 = vld [vmem:[#allocation3] sm:$0xff]
      %v5275 = vld [vmem:[#allocation3 + $0x8] sm:$0xff]
      %v5276 = vld [vmem:[#allocation3 + $0x10] sm:$0xff]
      %v5277 = vld [vmem:[#allocation3 + $0x18] sm:$0xff]
      %v5278 = vld [vmem:[#allocation3 + $0x20] sm:$0xff]
      %v5279 = vld [vmem:[#allocation3 + $0x28] sm:$0xff]
      %v5280 = vld [vmem:[#allocation3 + $0x30] sm:$0xff]
      %v5281 = vld [vmem:[#allocation3 + $0x38] sm:$0xff]
      %v5282 = vld [vmem:[#allocation3 + $0x40] sm:$0xff]
      %v5283 = vld [vmem:[#allocation3 + $0x48] sm:$0xff]
      %v5284 = vld [vmem:[#allocation3 + $0x50] sm:$0xff]
      %v5285 = vld [vmem:[#allocation3 + $0x58] sm:$0xff]
      %v5286 = vld [vmem:[#allocation3 + $0x60] sm:$0xff]
      %v5287 = vld [vmem:[#allocation3 + $0x68] sm:$0xff]
      %v5288 = vld [vmem:[#allocation3 + $0x70] sm:$0xff]
      %v5289 = vld [vmem:[#allocation3 + $0x78] sm:$0xff]
      %v5290 = vld [vmem:[#allocation3 + $0x80] sm:$0xff]
      %v5291 = vld [vmem:[#allocation3 + $0x88] sm:$0xff]
      %v5292 = vld [vmem:[#allocation3 + $0x90] sm:$0xff]
      %v5293 = vld [vmem:[#allocation3 + $0x98] sm:$0xff]
      %v5294 = vld [vmem:[#allocation3 + $0xa0] sm:$0xff]
      %v5295 = vld [vmem:[#allocation3 + $0xa8] sm:$0xff]
      %v5296 = vld [vmem:[#allocation3 + $0xb0] sm:$0xff]
      %v5297 = vld [vmem:[#allocation3 + $0xb8] sm:$0xff]
      %v5298 = vld [vmem:[#allocation3 + $0xc0] sm:$0xff]
      %v5299 = vld [vmem:[#allocation3 + $0xc8] sm:$0xff]
      %v5300 = vld [vmem:[#allocation3 + $0xd0] sm:$0xff]
      %v5301 = vld [vmem:[#allocation3 + $0xd8] sm:$0xff]
      %v5302 = vld [vmem:[#allocation3 + $0xe0] sm:$0xff]
      %v5303 = vld [vmem:[#allocation3 + $0xe8] sm:$0xff]
      %v5304 = vld [vmem:[#allocation3 + $0xf0] sm:$0xff]
      %v5305 = vld [vmem:[#allocation3 + $0xf8] sm:$0xff]
      %v5306 = vadd.f32 %v5242, %v5274
      %v5307 = vadd.f32 %v5243, %v5275
      %v5308 = vadd.f32 %v5244, %v5276
      %v5309 = vadd.f32 %v5245, %v5277
      %v5310 = vadd.f32 %v5246, %v5278
      %v5311 = vadd.f32 %v5247, %v5279
      %v5312 = vadd.f32 %v5248, %v5280
      %v5313 = vadd.f32 %v5249, %v5281
      %v5314 = vadd.f32 %v5250, %v5282
      %v5315 = vadd.f32 %v5251, %v5283
      %v5316 = vadd.f32 %v5252, %v5284
      %v5317 = vadd.f32 %v5253, %v5285
      %v5318 = vadd.f32 %v5254, %v5286
      %v5319 = vadd.f32 %v5255, %v5287
      %v5320 = vadd.f32 %v5256, %v5288
      %v5321 = vadd.f32 %v5257, %v5289
      %v5322 = vadd.f32 %v5258, %v5290
      %v5323 = vadd.f32 %v5259, %v5291
      %v5324 = vadd.f32 %v5260, %v5292
      %v5325 = vadd.f32 %v5261, %v5293
      %v5326 = vadd.f32 %v5262, %v5294
      %v5327 = vadd.f32 %v5263, %v5295
      %v5328 = vadd.f32 %v5264, %v5296
      %v5329 = vadd.f32 %v5265, %v5297
      %v5330 = vadd.f32 %v5266, %v5298
      %v5331 = vadd.f32 %v5267, %v5299
      %v5332 = vadd.f32 %v5268, %v5300
      %v5333 = vadd.f32 %v5269, %v5301
      %v5334 = vadd.f32 %v5270, %v5302
      %v5335 = vadd.f32 %v5271, %v5303
      %v5336 = vadd.f32 %v5272, %v5304
      %v5337 = vadd.f32 %v5273, %v5305
      %v5338 = vmax.f32 %v5306, 0.0
      %v5339 = vmax.f32 %v5307, 0.0
      %v5340 = vmax.f32 %v5308, 0.0
      %v5341 = vmax.f32 %v5309, 0.0
      %v5342 = vmax.f32 %v5310, 0.0
      %v5343 = vmax.f32 %v5311, 0.0
      %v5344 = vmax.f32 %v5312, 0.0
      %v5345 = vmax.f32 %v5313, 0.0
      %v5346 = vmax.f32 %v5314, 0.0
      %v5347 = vmax.f32 %v5315, 0.0
      %v5348 = vmax.f32 %v5316, 0.0
      %v5349 = vmax.f32 %v5317, 0.0
      %v5350 = vmax.f32 %v5318, 0.0
      %v5351 = vmax.f32 %v5319, 0.0
      %v5352 = vmax.f32 %v5320, 0.0
      %v5353 = vmax.f32 %v5321, 0.0
      %v5354 = vmax.f32 %v5322, 0.0
      %v5355 = vmax.f32 %v5323, 0.0
      %v5356 = vmax.f32 %v5324, 0.0
      %v5357 = vmax.f32 %v5325, 0.0
      %v5358 = vmax.f32 %v5326, 0.0
      %v5359 = vmax.f32 %v5327, 0.0
      %v5360 = vmax.f32 %v5328, 0.0
      %v5361 = vmax.f32 %v5329, 0.0
      %v5362 = vmax.f32 %v5330, 0.0
      %v5363 = vmax.f32 %v5331, 0.0
      %v5364 = vmax.f32 %v5332, 0.0
      %v5365 = vmax.f32 %v5333, 0.0
      %v5366 = vmax.f32 %v5334, 0.0
      %v5367 = vmax.f32 %v5335, 0.0
      %v5368 = vmax.f32 %v5336, 0.0
      %v5369 = vmax.f32 %v5337, 0.0
      %5370 = vst [vmem:[%s359] sm:$0xff] %v5338
      %5371 = vst [vmem:[%s359 + $0x8] sm:$0xff] %v5339
      %5372 = vst [vmem:[%s359 + $0x10] sm:$0xff] %v5340
      %5373 = vst [vmem:[%s359 + $0x18] sm:$0xff] %v5341
      %5374 = vst [vmem:[%s359 + $0x20] sm:$0xff] %v5342
      %5375 = vst [vmem:[%s359 + $0x28] sm:$0xff] %v5343
      %5376 = vst [vmem:[%s359 + $0x30] sm:$0xff] %v5344
      %5377 = vst [vmem:[%s359 + $0x38] sm:$0xff] %v5345
      %5378 = vst [vmem:[%s359 + $0x40] sm:$0xff] %v5346
      %5379 = vst [vmem:[%s359 + $0x48] sm:$0xff] %v5347
      %5380 = vst [vmem:[%s359 + $0x50] sm:$0xff] %v5348
      %5381 = vst [vmem:[%s359 + $0x58] sm:$0xff] %v5349
      %5382 = vst [vmem:[%s359 + $0x60] sm:$0xff] %v5350
      %5383 = vst [vmem:[%s359 + $0x68] sm:$0xff] %v5351
      %5384 = vst [vmem:[%s359 + $0x70] sm:$0xff] %v5352
      %5385 = vst [vmem:[%s359 + $0x78] sm:$0xff] %v5353
      %5386 = vst [vmem:[%s359 + $0x80] sm:$0xff] %v5354
      %5387 = vst [vmem:[%s359 + $0x88] sm:$0xff] %v5355
      %5388 = vst [vmem:[%s359 + $0x90] sm:$0xff] %v5356
      %5389 = vst [vmem:[%s359 + $0x98] sm:$0xff] %v5357
      %5390 = vst [vmem:[%s359 + $0xa0] sm:$0xff] %v5358
      %5391 = vst [vmem:[%s359 + $0xa8] sm:$0xff] %v5359
      %5392 = vst [vmem:[%s359 + $0xb0] sm:$0xff] %v5360
      %5393 = vst [vmem:[%s359 + $0xb8] sm:$0xff] %v5361
      %5394 = vst [vmem:[%s359 + $0xc0] sm:$0xff] %v5362
      %5395 = vst [vmem:[%s359 + $0xc8] sm:$0xff] %v5363
      %5396 = vst [vmem:[%s359 + $0xd0] sm:$0xff] %v5364
      %5397 = vst [vmem:[%s359 + $0xd8] sm:$0xff] %v5365
      %5398 = vst [vmem:[%s359 + $0xe0] sm:$0xff] %v5366
      %5399 = vst [vmem:[%s359 + $0xe8] sm:$0xff] %v5367
      %5400 = vst [vmem:[%s359 + $0xf0] sm:$0xff] %v5368
      %5401 = vst [vmem:[%s359 + $0xf8] sm:$0xff] %v5369
      %p5402 = scmp.lt.s32.totalorder %s21, 1
      %s5403 = scalar_select %p5402, %s21, 1
      %s5404 = smul.addr %s5403, 32
      %s5405 = smul.addr %s5404, 8
      %s5406 = scalar_lea.vmem %s10, %s5405
      // Predicated region
      $region61: #{basicblock_forward.1} parent=59 // pred_check
        %p5407 = pneg %p254
      $region62: #{basicblock_forward.1} parent=59 // pred_check_branch
        %5409 = sbr.rel (%p5407) target = $region64
      $region63: #{basicblock_forward.1} parent=59 // pred_region
        _
      $region64: #{basicblock_forward.1} parent=59 // pred_fallthru
        _
    $region60: #{basicblock_forward.1} parent=5 // pred_fallthru
      _
    %p5410 = scmp.le.s32.totalorder 2, %s16
    // Predicated region
    $region65: #{basicblock_forward.1} parent=5 // pred_check
      %p5411 = pneg %p5410
    $region66: #{basicblock_forward.1} parent=5 // pred_check_branch
      %5413 = sbr.rel (%p5411) target = $region68
    $region67: #{basicblock_forward.1} parent=5 // pred_region
      %s5414 = ssub.s32 %s16, 2
      // Predicated region
      $region69: #{basicblock_forward.1} parent=67 // pred_check
        %p5415 = pneg %p260
      $region70: #{basicblock_forward.1} parent=67 // pred_check_branch
        %5417 = sbr.rel (%p5415) target = $region72
      $region71: #{basicblock_forward.1} parent=67 // pred_region
        %p5418 = scmp.lt.s32.totalorder %s22, 1
        %s5419 = scalar_select %p5418, %s22, 1
        %s5420 = smul.addr %s5419, 32
        %s5421 = smul.addr %s5420, 8
        %s5422 = scalar_lea.vmem %s10, %s5421
      $region72: #{basicblock_forward.1} parent=67 // pred_fallthru
        _
    $region68: #{basicblock_forward.1} parent=5 // pred_fallthru
      _
  $region6: #{basicblock_forward.1} parent=0 // loop_footer
    %s20 = sadd.s32 1, %s16
  $region7: #{basicblock_forward.1} parent=0 // loop_footer_branch
    %15 = sbr.rel target = $region3
  $region8: #{basicblock_forward.1} parent=0 // loop_exit
    _

</llo_original>
